<compile_context>
chip_gen: v5e
topology: v5e:2x2
jax: 0.10.0
libtpu: 0.0.40
codegen_flags: <defaults>
</compile_context>

<pallas_src>
import functools

import jax
import jax.numpy as jnp
from jax.experimental import pallas as pl
from jax.experimental.pallas import tpu as pltpu


# ----------------------------------------------------------------------------
# Kernel
# ----------------------------------------------------------------------------
def _qag_kernel(tri_ref, pts_ref, stk_ref, qry_ref, out_ref, acc_ref, cnt_ref,
                *, nsample, r2, xyz_scale, has_xyz_out, split_xyz):
    # Blocks per (batch b, P-tile t, N-chunk n):
    #   tri_ref : (nb, nb)      bf16 lower-triangular ones (resident constant)
    #   pts_ref : (1, nb, 3)    f32 point coords of this N chunk (distances)
    #   stk_ref : (1, R, nb)    gather rows [xyz_hi; xyz_lo; feats] (bf16) or
    #                           [xyz; feats] (f32) or [feats] (use_xyz=False)
    #   qry_ref : (1, 3, pb)    f32 query centers of this P tile
    #   out_ref : (1, CC, pb, nsample)  final output tile
    #   acc_ref : (R, nsample*pb) f32 gather accumulator (slot-major columns)
    #   cnt_ref : (1, pb)       f32 running in-ball count per query (carry)
    n_idx = pl.program_id(2)

    @pl.when(n_idx == 0)
    def _init():
        acc_ref[...] = jnp.zeros_like(acc_ref)
        cnt_ref[...] = jnp.zeros_like(cnt_ref)

    pts = pts_ref[0]                       # (nb, 3)  f32
    qry = qry_ref[0]                       # (3, pb)  f32
    tri = tri_ref[...]                     # (nb, nb) bf16
    stk = stk_ref[0]                       # (R, nb)  gather dtype
    nb = pts.shape[0]
    pb = qry.shape[1]
    k_slots = nsample

    # ---- squared distances (nb, pb): cancellation-free per-coordinate diffs -
    d2 = jnp.zeros((nb, pb), jnp.float32)
    for c in range(3):
        diff = pts[:, c:c + 1] - qry[c:c + 1, :]
        d2 = d2 + diff * diff
    inball = d2 < r2                       # (nb, pb) bool

    # ---- slot index via one MXU matmul against the triangular ones matrix ---
    # prefix[n, p] = # in-ball points among this chunk's points 0..n
    # (exact: 0/1 bf16 operands, f32 accumulation on the MXU).
    prefix = jnp.dot(tri, inball.astype(tri.dtype),
                     preferred_element_type=jnp.float32)          # (nb, pb)
    carry = cnt_ref[...]                                          # (1, pb)
    code = jnp.where(inball, carry + prefix - 1.0, -1.0)          # slot or -1
    cnt_ref[...] = carry + prefix[nb - 1:nb, :]

    # ---- 0/1 selection matrix, slot-major columns (m = k*pb + p) ------------
    sel = jnp.concatenate(
        [(code == float(k)).astype(stk.dtype) for k in range(k_slots)], axis=1)

    # ---- fused gather of all stacked rows: one MXU matmul, f32 accumulation -
    acc_ref[...] += jnp.dot(stk, sel, preferred_element_type=jnp.float32)

    # ---- finalize on the last N chunk ----------------------------------------
    @pl.when(n_idx == pl.num_programs(2) - 1)
    def _finalize():
        acc = acc_ref[...]                                        # (R, m) f32
        if has_xyz_out:
            if split_xyz:            # recombine bf16 hi/lo rows -> ~f32 exact
                gx = acc[0:3, :] + acc[3:6, :]
                n_head = 6
            else:
                gx = acc[0:3, :]
                n_head = 3
            ctr = jnp.concatenate([qry] * k_slots, axis=1)        # (3, m)
            gx = gx - ctr                   # empty slots become -center
            if xyz_scale != 1.0:            # normalize_xyz
                gx = gx * jnp.float32(xyz_scale)
            if acc.shape[0] > n_head:
                full = jnp.concatenate([gx, acc[n_head:, :]], axis=0)
            else:
                full = gx
        else:                               # use_xyz=False: features only
            full = acc
        cc = full.shape[0]
        # slot-major columns (k, p) -> (point, slot) output tile, in-kernel
        tile = jnp.transpose(full.reshape(cc, k_slots, pb), (0, 2, 1))
        out_ref[0] = tile.astype(out_ref.dtype)


# ----------------------------------------------------------------------------
# Tiling / VMEM helpers (generation-aware)
# ----------------------------------------------------------------------------
def _vmem_budget():
    phys = 128 * 2 ** 20
    try:
        phys = int(pltpu.get_tpu_info().vmem_capacity_bytes)
    except Exception:
        pass
    if phys <= 64 * 2 ** 20:     # v7x-class TensorCore: 64 MiB physical VMEM
        return phys, 6 * 2 ** 20, 44 * 2 ** 20
    return phys, 12 * 2 ** 20, 80 * 2 ** 20


def _tile_vmem_bytes(pb, nb, r_rows, cc, k, gd_bytes):
    m = pb * k
    k_pad = -(-k // 128) * 128
    return int(
        2 * nb * nb * 2                 # triangular scan matrix (bf16)
        + 2 * nb * 128 * 4              # xyz chunk (lane-padded), 2 buffers
        + 2 * r_rows * nb * gd_bytes    # stacked gather chunk, 2 buffers
        + 2 * 8 * pb * 4                # query-center block, 2 buffers
        + 2 * cc * pb * k_pad * 4       # output tile (lane-padded), 2 buffers
        + r_rows * m * 4 + pb * 4       # accumulator + carry scratch
        + nb * m * gd_bytes             # per-chunk selection matrix
        + 6 * nb * pb * 4)              # d2 / mask / prefix / code temporaries


def _pick_n_block(n, target=512):
    if n <= target:
        return n
    best = None
    d = 128
    while d <= target:
        if n % d == 0:
            best = d
        d += 128
    return best if best is not None else n


def _pick_p_block(p, nb, r_rows, cc, k, gd_bytes, budget):
    cands = sorted({p} | {d for d in range(128, p, 128) if p % d == 0})
    fit = [pb for pb in cands
           if _tile_vmem_bytes(pb, nb, r_rows, cc, k, gd_bytes) <= budget]
    # Review fix: when nothing fits, fall back to the SMALLEST legal tile.
    return fit[-1] if fit else cands[0]


# ----------------------------------------------------------------------------
# Wrapper
# ----------------------------------------------------------------------------
def query_and_group(xyz, new_xyz, features=None, *, radius, nsample,
                    use_xyz=True, normalize_xyz=False,
                    gather_dtype=jnp.bfloat16, p_block=None, n_block=None):
    """Pallas TPU implementation of QueryAndGroup.forward."""
    B, N, _ = xyz.shape
    P = new_xyz.shape[1]
    K = int(nsample)
    if features is None:
        assert use_xyz, "Cannot have no features and not use xyz as a feature!"
    has_xyz_out = use_xyz or features is None
    gd = jnp.dtype(gather_dtype)
    split_xyz = bool(has_xyz_out and gd != jnp.dtype(jnp.float32))

    xyz32 = xyz.astype(jnp.float32)                                  # (B, N, 3)
    qry_t = jnp.transpose(new_xyz.astype(jnp.float32), (0, 2, 1))    # (B, 3, P)

    rows = []
    if has_xyz_out:
        xyz_t = jnp.transpose(xyz32, (0, 2, 1))                      # (B, 3, N)
        if split_xyz:            # bf16 hi/lo split -> near-exact xyz gather
            hi = xyz_t.astype(gd)
            rows += [hi, (xyz_t - hi.astype(jnp.float32)).astype(gd)]
        else:
            rows.append(xyz_t.astype(gd))
    n_feat = 0
    if features is not None:
        n_feat = int(features.shape[1])
        rows.append(features.astype(gd))
    stk = rows[0] if len(rows) == 1 else jnp.concatenate(rows, axis=1)
    R = int(stk.shape[1])
    CC = (3 if has_xyz_out else 0) + n_feat

    # --- tiling (generation-aware) --------------------------------------------
    Nb = int(n_block) if n_block is not None else _pick_n_block(N)
    if N % Nb or (Nb != N and Nb % 128):
        Nb = N
    phys, tile_budget, limit_cap = _vmem_budget()
    gd_bytes = gd.itemsize
    Pb = (int(p_block) if p_block is not None
          else _pick_p_block(P, Nb, R, CC, K, gd_bytes, tile_budget))
    if P % Pb or (Pb != P and Pb % 128):
        Pb = P
    T, NT = P // Pb, N // Nb
    M = Pb * K

    est = _tile_vmem_bytes(Pb, Nb, R, CC, K, gd_bytes)
    vmem_limit = int(min(limit_cap, phys, max(16 * 2 ** 20, 2 * est)))

    tri = jnp.tril(jnp.ones((Nb, Nb), dtype=jnp.bfloat16))

    kernel = functools.partial(
        _qag_kernel, nsample=K, r2=float(radius) ** 2,
        xyz_scale=(1.0 / float(radius)) if normalize_xyz else 1.0,
        has_xyz_out=has_xyz_out, split_xyz=split_xyz)

    cost = pl.CostEstimate(
        flops=int(2 * B * R * N * P * K + 2 * B * N * Nb * P + 8 * B * N * P),
        transcendentals=0,
        bytes_accessed=int(4 * xyz32.size + gd_bytes * stk.size
                           + 4 * qry_t.size + 4 * B * CC * P * K
                           + 2 * tri.size))

    out = pl.pallas_call(
        kernel,
        out_shape=jax.ShapeDtypeStruct((B, CC, P, K), jnp.float32),
        grid_spec=pltpu.PrefetchScalarGridSpec(
            num_scalar_prefetch=0,
            grid=(B, T, NT),
            in_specs=[
                pl.BlockSpec((Nb, Nb), lambda b, t, n: (0, 0)),       # tri
                pl.BlockSpec((1, Nb, 3), lambda b, t, n: (b, n, 0)),  # xyz f32
                pl.BlockSpec((1, R, Nb), lambda b, t, n: (b, 0, n)),  # gather rows
                pl.BlockSpec((1, 3, Pb), lambda b, t, n: (b, 0, t)),  # centers
            ],
            out_specs=pl.BlockSpec((1, CC, Pb, K), lambda b, t, n: (b, 0, t, 0)),
            scratch_shapes=[
                pltpu.VMEM((R, M), jnp.float32),       # gather accumulator
                pltpu.VMEM((1, Pb), jnp.float32),      # in-ball count carry
            ]),
        compiler_params=pltpu.CompilerParams(
            dimension_semantics=("parallel",
                                 "parallel" if B == 1 else "arbitrary",
                                 "arbitrary"),
            vmem_limit_bytes=vmem_limit),
        cost_estimate=cost,
    )(tri, xyz32, stk, qry_t)

    return out                                                   # (B, CC, P, K)


# ----------------------------------------------------------------------------
# Pure-JAX reference (same deterministic first-nsample semantics)
# ----------------------------------------------------------------------------
def _reference(xyz, new_xyz, features, radius, nsample, normalize=False):
    diff = new_xyz[:, :, None, :] - xyz[:, None, :, :]           # (B, P, N, 3)
    d2 = diff[..., 0] ** 2 + diff[..., 1] ** 2 + diff[..., 2] ** 2
    mask = d2 < radius * radius                                  # (B, P, N)
    slot = jnp.cumsum(mask.astype(jnp.int32), axis=-1) - 1
    sel = (mask[..., None]
           & (slot[..., None] == jnp.arange(nsample))).astype(jnp.float32)
    gxyz = (jnp.einsum('bnd,bpnk->bdpk', xyz, sel)
            - jnp.transpose(new_xyz, (0, 2, 1))[..., None])
    if normalize:
        gxyz = gxyz / radius
    if features is None:
        return gxyz
    gfeat = jnp.einsum('bcn,bpnk->bcpk', features, sel)
    return jnp.concatenate([gxyz, gfeat], axis=1)


if __name__ == "__main__":
    B, N, P, C, K = 2, 256, 128, 5, 8
    radius = 0.25

    key = jax.random.PRNGKey(0)
    k1, k2 = jax.random.split(key)
    xyz = jax.random.uniform(k1, (B, N, 3), dtype=jnp.float32)
    new_xyz = xyz[:, :P, :]                 # FPS-style centroid subset
    features = jax.random.normal(k2, (B, C, N), dtype=jnp.float32)

    ref = _reference(xyz, new_xyz, features, radius, K)

    # (1) default path: bf16 gather operands, hi/lo-split (near-exact) xyz rows.
    out1 = jax.block_until_ready(query_and_group(
        xyz, new_xyz, features, radius=radius, nsample=K))
    assert out1.shape == (B, 3 + C, P, K), out1.shape
    err_xyz = float(jnp.max(jnp.abs(out1[:, :3] - ref[:, :3])))
    err_fea = float(jnp.max(jnp.abs(out1[:, 3:] - ref[:, 3:])))
    assert err_xyz < 1e-3, err_xyz
    assert err_fea < 3e-2, err_fea

    # (2) exact path (f32 gather) with normalize_xyz.
    ref_n = _reference(xyz, new_xyz, features, radius, K, normalize=True)
    out2 = jax.block_until_ready(query_and_group(
        xyz, new_xyz, features, radius=radius, nsample=K,
        normalize_xyz=True, gather_dtype=jnp.float32))
    err2 = float(jnp.max(jnp.abs(out2 - ref_n)))
    assert err2 < 1e-4, err2

    # (3) no features: grouped_xyz only.
    out3 = jax.block_until_ready(query_and_group(
        xyz, new_xyz, None, radius=radius, nsample=K))
    assert out3.shape == (B, 3, P, K), out3.shape
    err3 = float(jnp.max(jnp.abs(out3 - ref[:, :3])))
    assert err3 < 1e-3, err3

    # (4) use_xyz=False: grouped features only (xyz excluded from the gather).
    out4 = jax.block_until_ready(query_and_group(
        xyz, new_xyz, features, radius=radius, nsample=K, use_xyz=False))
    assert out4.shape == (B, C, P, K), out4.shape
    err4 = float(jnp.max(jnp.abs(out4 - ref[:, 3:])))
    assert err4 < 3e-2, err4

    print("KERNEL_OK")
</pallas_src>

<mosaic_0001>
module attributes {stable_mosaic.version = 11 : i64} {
  func.func @_qag_kernel(%arg0: i32, %arg1: i32, %arg2: i32, %arg3: memref<256x256xbf16, #tpu.memory_space<vmem>>, %arg4: memref<1x256x3xf32, #tpu.memory_space<vmem>>, %arg5: memref<1x11x256xbf16, #tpu.memory_space<vmem>>, %arg6: memref<1x3x128xf32, #tpu.memory_space<vmem>>, %arg7: memref<1x8x128x8xf32, #tpu.memory_space<vmem>>, %arg8: memref<11x1024xf32, #tpu.memory_space<vmem>>, %arg9: memref<1x128xf32, #tpu.memory_space<vmem>>) attributes {dimension_semantics = [#tpu.dimension_semantics<parallel>, #tpu.dimension_semantics<arbitrary>, #tpu.dimension_semantics<arbitrary>], iteration_bounds = array<i64: 2, 1, 1>, scalar_prefetch = 0 : i64, scratch_operands = 2 : i64, tpu.core_type = #tpu.core_type<tc>, window_params = [{pipeline_mode = #tpu.pipeline_mode<synchronous>, transform_indices = @transform_0, window_bounds = array<i64: 256, 256>}, {transform_indices = @transform_1, window_bounds = array<i64: 1, 256, 3>}, {transform_indices = @transform_2, window_bounds = array<i64: 1, 11, 256>}, {transform_indices = @transform_3, window_bounds = array<i64: 1, 3, 128>}, {transform_indices = @transform_4, window_bounds = array<i64: 1, 8, 128, 8>}]} {
    %c0_i32 = arith.constant 0 : i32
    %0 = arith.cmpi eq, %arg2, %c0_i32 : i32
    %1 = arith.extui %0 : i1 to i32
    %c0_i32_0 = arith.constant 0 : i32
    %2 = arith.cmpi ne, %1, %c0_i32_0 : i32
    scf.if %2 {
      %cst_34 = arith.constant 0.000000e+00 : f32
      %96 = vector.broadcast %cst_34 : f32 to vector<11x1024xf32>
      %c0_35 = arith.constant 0 : index
      %c0_36 = arith.constant 0 : index
      %97 = vector.load %arg8[%c0_35, %c0_36] : memref<11x1024xf32, #tpu.memory_space<vmem>>, vector<11x1024xf32>
      tpu.vector_store %arg8[%c0_35, %c0_36], %96 {strides = array<i32>} : memref<11x1024xf32, #tpu.memory_space<vmem>>, vector<11x1024xf32>,
      %cst_37 = arith.constant 0.000000e+00 : f32
      %98 = vector.broadcast %cst_37 : f32 to vector<1x128xf32>
      %c0_38 = arith.constant 0 : index
      %c0_39 = arith.constant 0 : index
      %99 = vector.load %arg9[%c0_38, %c0_39] : memref<1x128xf32, #tpu.memory_space<vmem>>, vector<1x128xf32>
      tpu.vector_store %arg9[%c0_38, %c0_39], %98 {strides = array<i32>} : memref<1x128xf32, #tpu.memory_space<vmem>>, vector<1x128xf32>,
    } else {
    }
    %c0 = arith.constant 0 : index
    %c0_1 = arith.constant 0 : index
    %c0_2 = arith.constant 0 : index
    %3 = vector.load %arg4[%c0, %c0_1, %c0_2] : memref<1x256x3xf32, #tpu.memory_space<vmem>>, vector<1x256x3xf32>
    %4 = vector.shape_cast %3 : vector<1x256x3xf32> to vector<256x3xf32>
    %c0_3 = arith.constant 0 : index
    %c0_4 = arith.constant 0 : index
    %c0_5 = arith.constant 0 : index
    %5 = vector.load %arg6[%c0_3, %c0_4, %c0_5] : memref<1x3x128xf32, #tpu.memory_space<vmem>>, vector<1x3x128xf32>
    %6 = vector.shape_cast %5 : vector<1x3x128xf32> to vector<3x128xf32>
    %c0_6 = arith.constant 0 : index
    %c0_7 = arith.constant 0 : index
    %7 = vector.load %arg3[%c0_6, %c0_7] : memref<256x256xbf16, #tpu.memory_space<vmem>>, vector<256x256xbf16>
    %c0_8 = arith.constant 0 : index
    %c0_9 = arith.constant 0 : index
    %c0_10 = arith.constant 0 : index
    %8 = vector.load %arg5[%c0_8, %c0_9, %c0_10] : memref<1x11x256xbf16, #tpu.memory_space<vmem>>, vector<1x11x256xbf16>
    %9 = vector.shape_cast %8 : vector<1x11x256xbf16> to vector<11x256xbf16>
    %cst = arith.constant 0.000000e+00 : f32
    %10 = vector.broadcast %cst : f32 to vector<256x128xf32>
    %11 = vector.extract_strided_slice %4 {offsets = [0, 0], sizes = [256, 1], strides = [1, 1]} : vector<256x3xf32> to vector<256x1xf32>
    %12 = vector.extract_strided_slice %6 {offsets = [0, 0], sizes = [1, 128], strides = [1, 1]} : vector<3x128xf32> to vector<1x128xf32>
    %13 = vector.broadcast %11 : vector<256x1xf32> to vector<256x128xf32>
    %14 = vector.broadcast %12 : vector<1x128xf32> to vector<256x128xf32>
    %15 = arith.subf %13, %14 : vector<256x128xf32>
    %16 = arith.mulf %15, %15 : vector<256x128xf32>
    %17 = arith.addf %10, %16 : vector<256x128xf32>
    %18 = vector.extract_strided_slice %4 {offsets = [0, 1], sizes = [256, 1], strides = [1, 1]} : vector<256x3xf32> to vector<256x1xf32>
    %19 = vector.extract_strided_slice %6 {offsets = [1, 0], sizes = [1, 128], strides = [1, 1]} : vector<3x128xf32> to vector<1x128xf32>
    %20 = vector.broadcast %18 : vector<256x1xf32> to vector<256x128xf32>
    %21 = vector.broadcast %19 : vector<1x128xf32> to vector<256x128xf32>
    %22 = arith.subf %20, %21 : vector<256x128xf32>
    %23 = arith.mulf %22, %22 : vector<256x128xf32>
    %24 = arith.addf %17, %23 : vector<256x128xf32>
    %25 = vector.extract_strided_slice %4 {offsets = [0, 2], sizes = [256, 1], strides = [1, 1]} : vector<256x3xf32> to vector<256x1xf32>
    %26 = vector.extract_strided_slice %6 {offsets = [2, 0], sizes = [1, 128], strides = [1, 1]} : vector<3x128xf32> to vector<1x128xf32>
    %27 = vector.broadcast %25 : vector<256x1xf32> to vector<256x128xf32>
    %28 = vector.broadcast %26 : vector<1x128xf32> to vector<256x128xf32>
    %29 = arith.subf %27, %28 : vector<256x128xf32>
    %30 = arith.mulf %29, %29 : vector<256x128xf32>
    %31 = arith.addf %24, %30 : vector<256x128xf32>
    %cst_11 = arith.constant 6.250000e-02 : f32
    %32 = vector.broadcast %cst_11 : f32 to vector<256x128xf32>
    %33 = arith.cmpf olt, %31, %32 : vector<256x128xf32>
    %34 = arith.extui %33 : vector<256x128xi1> to vector<256x128xi32>
    %35 = arith.sitofp %34 : vector<256x128xi32> to vector<256x128xf32>
    %36 = arith.truncf %35 : vector<256x128xf32> to vector<256x128xbf16>
    %cst_12 = arith.constant dense<0.000000e+00> : vector<256x128xf32>
    %37 = tpu.matmul %7, %36, %cst_12 {dimension_numbers = #tpu.dot_dimension_numbers<[1], [0], [0], [1], [0, 0, 1, 1], [], []>} : vector<256x256xbf16>, vector<256x128xbf16>, vector<256x128xf32> -> vector<256x128xf32>
    %c0_13 = arith.constant 0 : index
    %c0_14 = arith.constant 0 : index
    %38 = vector.load %arg9[%c0_13, %c0_14] : memref<1x128xf32, #tpu.memory_space<vmem>>, vector<1x128xf32>
    %39 = vector.broadcast %38 : vector<1x128xf32> to vector<256x128xf32>
    %40 = arith.addf %39, %37 : vector<256x128xf32>
    %cst_15 = arith.constant 1.000000e+00 : f32
    %41 = vector.broadcast %cst_15 : f32 to vector<256x128xf32>
    %42 = arith.subf %40, %41 : vector<256x128xf32>
    %cst_16 = arith.constant -1.000000e+00 : f32
    %43 = vector.broadcast %cst_16 : f32 to vector<256x128xf32>
    %44 = arith.select %33, %42, %43 : vector<256x128xi1>, vector<256x128xf32>
    %45 = vector.extract_strided_slice %37 {offsets = [255, 0], sizes = [1, 128], strides = [1, 1]} : vector<256x128xf32> to vector<1x128xf32>
    %46 = arith.addf %38, %45 : vector<1x128xf32>
    %c0_17 = arith.constant 0 : index
    %c0_18 = arith.constant 0 : index
    %47 = vector.load %arg9[%c0_17, %c0_18] : memref<1x128xf32, #tpu.memory_space<vmem>>, vector<1x128xf32>
    tpu.vector_store %arg9[%c0_17, %c0_18], %46 {strides = array<i32>} : memref<1x128xf32, #tpu.memory_space<vmem>>, vector<1x128xf32>,
    %cst_19 = arith.constant 0.000000e+00 : f32
    %48 = vector.broadcast %cst_19 : f32 to vector<256x128xf32>
    %49 = arith.cmpf oeq, %44, %48 : vector<256x128xf32>
    %50 = arith.extui %49 : vector<256x128xi1> to vector<256x128xi32>
    %51 = arith.sitofp %50 : vector<256x128xi32> to vector<256x128xf32>
    %52 = arith.truncf %51 : vector<256x128xf32> to vector<256x128xbf16>
    %cst_20 = arith.constant 1.000000e+00 : f32
    %53 = vector.broadcast %cst_20 : f32 to vector<256x128xf32>
    %54 = arith.cmpf oeq, %44, %53 : vector<256x128xf32>
    %55 = arith.extui %54 : vector<256x128xi1> to vector<256x128xi32>
    %56 = arith.sitofp %55 : vector<256x128xi32> to vector<256x128xf32>
    %57 = arith.truncf %56 : vector<256x128xf32> to vector<256x128xbf16>
    %cst_21 = arith.constant 2.000000e+00 : f32
    %58 = vector.broadcast %cst_21 : f32 to vector<256x128xf32>
    %59 = arith.cmpf oeq, %44, %58 : vector<256x128xf32>
    %60 = arith.extui %59 : vector<256x128xi1> to vector<256x128xi32>
    %61 = arith.sitofp %60 : vector<256x128xi32> to vector<256x128xf32>
    %62 = arith.truncf %61 : vector<256x128xf32> to vector<256x128xbf16>
    %cst_22 = arith.constant 3.000000e+00 : f32
    %63 = vector.broadcast %cst_22 : f32 to vector<256x128xf32>
    %64 = arith.cmpf oeq, %44, %63 : vector<256x128xf32>
    %65 = arith.extui %64 : vector<256x128xi1> to vector<256x128xi32>
    %66 = arith.sitofp %65 : vector<256x128xi32> to vector<256x128xf32>
    %67 = arith.truncf %66 : vector<256x128xf32> to vector<256x128xbf16>
    %cst_23 = arith.constant 4.000000e+00 : f32
    %68 = vector.broadcast %cst_23 : f32 to vector<256x128xf32>
    %69 = arith.cmpf oeq, %44, %68 : vector<256x128xf32>
    %70 = arith.extui %69 : vector<256x128xi1> to vector<256x128xi32>
    %71 = arith.sitofp %70 : vector<256x128xi32> to vector<256x128xf32>
    %72 = arith.truncf %71 : vector<256x128xf32> to vector<256x128xbf16>
    %cst_24 = arith.constant 5.000000e+00 : f32
    %73 = vector.broadcast %cst_24 : f32 to vector<256x128xf32>
    %74 = arith.cmpf oeq, %44, %73 : vector<256x128xf32>
    %75 = arith.extui %74 : vector<256x128xi1> to vector<256x128xi32>
    %76 = arith.sitofp %75 : vector<256x128xi32> to vector<256x128xf32>
    %77 = arith.truncf %76 : vector<256x128xf32> to vector<256x128xbf16>
    %cst_25 = arith.constant 6.000000e+00 : f32
    %78 = vector.broadcast %cst_25 : f32 to vector<256x128xf32>
    %79 = arith.cmpf oeq, %44, %78 : vector<256x128xf32>
    %80 = arith.extui %79 : vector<256x128xi1> to vector<256x128xi32>
    %81 = arith.sitofp %80 : vector<256x128xi32> to vector<256x128xf32>
    %82 = arith.truncf %81 : vector<256x128xf32> to vector<256x128xbf16>
    %cst_26 = arith.constant 7.000000e+00 : f32
    %83 = vector.broadcast %cst_26 : f32 to vector<256x128xf32>
    %84 = arith.cmpf oeq, %44, %83 : vector<256x128xf32>
    %85 = arith.extui %84 : vector<256x128xi1> to vector<256x128xi32>
    %86 = arith.sitofp %85 : vector<256x128xi32> to vector<256x128xf32>
    %87 = arith.truncf %86 : vector<256x128xf32> to vector<256x128xbf16>
    %88 = tpu.concatenate %52, %57, %62, %67, %72, %77, %82, %87 in 1 : vector<256x128xbf16>, vector<256x128xbf16>, vector<256x128xbf16>, vector<256x128xbf16>, vector<256x128xbf16>, vector<256x128xbf16>, vector<256x128xbf16>, vector<256x128xbf16> -> vector<256x1024xbf16>
    %c0_27 = arith.constant 0 : index
    %c0_28 = arith.constant 0 : index
    %89 = vector.load %arg8[%c0_27, %c0_28] : memref<11x1024xf32, #tpu.memory_space<vmem>>, vector<11x1024xf32>
    %cst_29 = arith.constant dense<0.000000e+00> : vector<11x1024xf32>
    %90 = tpu.matmul %9, %88, %cst_29 {dimension_numbers = #tpu.dot_dimension_numbers<[1], [0], [0], [1], [0, 0, 1, 1], [], []>} : vector<11x256xbf16>, vector<256x1024xbf16>, vector<11x1024xf32> -> vector<11x1024xf32>
    %91 = arith.addf %89, %90 : vector<11x1024xf32>
    %c0_30 = arith.constant 0 : index
    %c0_31 = arith.constant 0 : index
    %92 = vector.load %arg8[%c0_30, %c0_31] : memref<11x1024xf32, #tpu.memory_space<vmem>>, vector<11x1024xf32>
    tpu.vector_store %arg8[%c0_30, %c0_31], %91 {strides = array<i32>} : memref<11x1024xf32, #tpu.memory_space<vmem>>, vector<11x1024xf32>,
    %c0_i32_32 = arith.constant 0 : i32
    %93 = arith.cmpi eq, %arg2, %c0_i32_32 : i32
    %94 = arith.extui %93 : i1 to i32
    %c0_i32_33 = arith.constant 0 : i32
    %95 = arith.cmpi ne, %94, %c0_i32_33 : i32
    scf.if %95 {
      %c0_34 = arith.constant 0 : index
      %c0_35 = arith.constant 0 : index
      %96 = vector.load %arg8[%c0_34, %c0_35] : memref<11x1024xf32, #tpu.memory_space<vmem>>, vector<11x1024xf32>
      %97 = vector.extract_strided_slice %96 {offsets = [0, 0], sizes = [3, 1024], strides = [1, 1]} : vector<11x1024xf32> to vector<3x1024xf32>
      %98 = vector.extract_strided_slice %96 {offsets = [3, 0], sizes = [3, 1024], strides = [1, 1]} : vector<11x1024xf32> to vector<3x1024xf32>
      %99 = arith.addf %97, %98 : vector<3x1024xf32>
      %100 = tpu.concatenate %6, %6, %6, %6, %6, %6, %6, %6 in 1 : vector<3x128xf32>, vector<3x128xf32>, vector<3x128xf32>, vector<3x128xf32>, vector<3x128xf32>, vector<3x128xf32>, vector<3x128xf32>, vector<3x128xf32> -> vector<3x1024xf32>
      %101 = arith.subf %99, %100 : vector<3x1024xf32>
      %102 = vector.extract_strided_slice %96 {offsets = [6, 0], sizes = [5, 1024], strides = [1, 1]} : vector<11x1024xf32> to vector<5x1024xf32>
      %103 = tpu.concatenate %101, %102 in 0 : vector<3x1024xf32>, vector<5x1024xf32> -> vector<8x1024xf32>
      %104 = vector.shape_cast %103 : vector<8x1024xf32> to vector<8x8x128xf32>
      %105 = tpu.transpose %104, [0, 2, 1] : vector<8x8x128xf32> -> vector<8x128x8xf32>
      %c0_36 = arith.constant 0 : index
      %c0_37 = arith.constant 0 : index
      %c0_38 = arith.constant 0 : index
      %c0_39 = arith.constant 0 : index
      %106 = vector.load %arg7[%c0_36, %c0_37, %c0_38, %c0_39] : memref<1x8x128x8xf32, #tpu.memory_space<vmem>>, vector<1x8x128x8xf32>
      %107 = vector.shape_cast %106 : vector<1x8x128x8xf32> to vector<8x128x8xf32>
      %108 = vector.shape_cast %105 : vector<8x128x8xf32> to vector<1x8x128x8xf32>
      tpu.vector_store %arg7[%c0_36, %c0_37, %c0_38, %c0_39], %108 {strides = array<i32>} : memref<1x8x128x8xf32, #tpu.memory_space<vmem>>, vector<1x8x128x8xf32>,
    } else {
    }
    return
  }
  func.func @transform_0(%arg0: i32, %arg1: i32, %arg2: i32) -> (i32, i32) {
    %c0_i32 = arith.constant 0 : i32
    %c0_i32_0 = arith.constant 0 : i32
    %c0_i32_1 = arith.constant 0 : i32
    return %c0_i32, %c0_i32_0 : i32, i32
  }
  func.func @transform_1(%arg0: i32, %arg1: i32, %arg2: i32) -> (i32, i32, i32) {
    %c0_i32 = arith.constant 0 : i32
    %c0_i32_0 = arith.constant 0 : i32
    return %arg0, %arg2, %c0_i32 : i32, i32, i32
  }
  func.func @transform_2(%arg0: i32, %arg1: i32, %arg2: i32) -> (i32, i32, i32) {
    %c0_i32 = arith.constant 0 : i32
    %c0_i32_0 = arith.constant 0 : i32
    return %arg0, %c0_i32, %arg2 : i32, i32, i32
  }
  func.func @transform_3(%arg0: i32, %arg1: i32, %arg2: i32) -> (i32, i32, i32) {
    %c0_i32 = arith.constant 0 : i32
    %c0_i32_0 = arith.constant 0 : i32
    return %arg0, %c0_i32, %arg1 : i32, i32, i32
  }
  func.func @transform_4(%arg0: i32, %arg1: i32, %arg2: i32) -> (i32, i32, i32, i32) {
    %c0_i32 = arith.constant 0 : i32
    %c0_i32_0 = arith.constant 0 : i32
    %c0_i32_1 = arith.constant 0 : i32
    return %arg0, %c0_i32, %arg1, %c0_i32_0 : i32, i32, i32, i32
  }
}

</mosaic_0001>

<llo_original>
// kernel: tpu_custom_call.1
$region0: #{tpu_custom_call.1}
  #allocation0 [shape = 'u32[]', space=smem, size = 0x4, offset = 0x4, fixed_abs, tag = 'smem constant byte address 0x4 - core index']
  #allocation1 [shape = 'u32[72,128]{1,0:T(1,128)}', space=vmem, size = 0x9000, scoped, tag = 'internal scratch']
  #allocation2 [shape = 'f32[11,1024]{1,0:T(8,128)}', space=vmem, size = 0x10000, scoped, tag = 'scratch operand']
  #allocation3 [shape = 'f32[1,128]{1,0:T(1,128)}', space=vmem, size = 0x200, scoped, tag = 'scratch operand']
  %s0 = inlined_call_operand.vmem [shape: bf16[256,256], index: 0, kind: input, shape index: {}]
  %s1 = inlined_call_operand.vmem [shape: f32[2,256,3], index: 1, kind: input, shape index: {}]
  %s2 = inlined_call_operand.vmem [shape: bf16[2,11,256], index: 2, kind: input, shape index: {}]
  %s3 = inlined_call_operand.vmem [shape: f32[2,3,128], index: 3, kind: input, shape index: {}]
  %s4 = inlined_call_operand.vmem [shape: f32[2,8,128,8], index: 4, kind: output, shape index: {}]
  %s5 = sld [smem:[#allocation0]]
  $region57: #{tpu_custom_call.1} parent=0
    _
  %s7 = ssub.s32 1, %s5
  %s8 = scalar_select 0, %s7, %s5
  loop: start=0, step=1, limit=4
  $region2: #{tpu_custom_call.1} parent=0 // loop_pre_header
    _
  $region3: #{tpu_custom_call.1} parent=0 // loop_header
    %s10 = sphi 0, %s14
    %p11 = scmp.ge.s32.totalorder %s10, 4
    %s17 = sphi 0, %s36
    %s18 = sphi 0, %s32
    %s19 = sphi 0, %s28
    %s20 = sphi 0, %s17
    %s21 = sphi 0, %s18
    %s22 = sphi 0, %s19
    %s23 = sphi 0, %s20
    %s24 = sphi 0, %s21
    %s25 = sphi 0, %s22
    %s37 = sphi 0, %s37
    %s39 = sphi 0, %s37
    %s40 = sphi 0, %s39
    %s54 = sphi 0, %s40
    %s62 = sphi 0, %s64
    %s65 = sphi 0, %s62
    %s66 = sphi 0, %s65
    %s82 = sphi 0, %s66
    %s90 = sphi 0, %s92
    %s93 = sphi 0, %s90
    %s94 = sphi 0, %s93
    %s110 = sphi 0, %s94
    %s118 = sphi 0, %s120
    %s121 = sphi 0, %s118
    %s122 = sphi 0, %s121
    %s138 = sphi 0, %s122
    %s146 = sphi 0, %s148
    %s149 = sphi 0, %s146
    %s150 = sphi 0, %s149
    %s166 = sphi 0, %s150
  $region4: #{tpu_custom_call.1} parent=0 // loop_header_branch
    %13 = sbr.rel (%p11) target = $region8
  $region5: #{tpu_custom_call.1} parent=0 // loop_body
    %s15 = ssub.s32 %s10, 1
    %s16 = ssub.s32 %s10, 2
    %s26 = sadd.s32 1, %s19
    %p27 = scmp.ge.s32.totalorder %s26, 1
    %s28 = scalar_select %p27, 0, %s26
    %s29 = sadd.s32 1, %s18
    %s30 = scalar_select %p27, %s29, %s18
    %p31 = scmp.ge.s32.totalorder %s30, 1
    %s32 = scalar_select %p31, 0, %s30
    %s33 = sadd.s32 1, %s17
    %s34 = scalar_select %p31, %s33, %s17
    %p35 = scmp.ge.s32.totalorder %s34, 2
    %s36 = scalar_select %p35, 0, %s34
    %s38 = sadd.s32 %s37, 1
    %p41 = scmp.eq.s32.totalorder %s10, 1
    %p42 = scmp.ne.s32.totalorder %s37, %s39
    %p43 = scmp.eq.s32.totalorder %s10, 0
    %p44 = por %p42, %p43
    %p45 = scmp.ne.s32.totalorder %s37, %s39
    %p46 = scmp.eq.s32.totalorder %s15, 1
    %p47 = por %p45, %p46
    %p48 = scmp.ne.s32.totalorder %s39, %s40
    %p49 = scmp.eq.s32.totalorder %s15, 0
    %p50 = por %p48, %p49
    %p51 = scmp.ne.s32.totalorder %s39, %s40
    %p52 = scmp.eq.s32.totalorder %s16, 1
    %p53 = por %p51, %p52
    %p55 = scmp.ne.s32.totalorder %s40, %s54
    %p56 = scmp.eq.s32.totalorder %s16, 0
    %p57 = por %p55, %p56
    %s58 = ssub.s32 %s17, %s36
    %s59 = ssub.s32 %s19, %s28
    %s60 = sor.u32 %s58, %s59
    %p61 = scmp.eq.s32.totalorder %s60, 0
    %s63 = sadd.s32 %s62, 1
    %s64 = scalar_select %p61, %s62, %s63
    %p67 = pneg %p61
    %p68 = scmp.eq.s32.totalorder %s10, 1
    %p69 = por %p67, %p68
    %p70 = scmp.ne.s32.totalorder %s62, %s65
    %p71 = scmp.eq.s32.totalorder %s10, 0
    %p72 = por %p70, %p71
    %p73 = scmp.ne.s32.totalorder %s62, %s65
    %p74 = scmp.eq.s32.totalorder %s15, 1
    %p75 = por %p73, %p74
    %p76 = scmp.ne.s32.totalorder %s65, %s66
    %p77 = scmp.eq.s32.totalorder %s15, 0
    %p78 = por %p76, %p77
    %p79 = scmp.ne.s32.totalorder %s65, %s66
    %p80 = scmp.eq.s32.totalorder %s16, 1
    %p81 = por %p79, %p80
    %p83 = scmp.ne.s32.totalorder %s66, %s82
    %p84 = scmp.eq.s32.totalorder %s16, 0
    %p85 = por %p83, %p84
    %s86 = ssub.s32 %s17, %s36
    %s87 = ssub.s32 %s19, %s28
    %s88 = sor.u32 %s86, %s87
    %p89 = scmp.eq.s32.totalorder %s88, 0
    %s91 = sadd.s32 %s90, 1
    %s92 = scalar_select %p89, %s90, %s91
    %p95 = pneg %p89
    %p96 = scmp.eq.s32.totalorder %s10, 1
    %p97 = por %p95, %p96
    %p98 = scmp.ne.s32.totalorder %s90, %s93
    %p99 = scmp.eq.s32.totalorder %s10, 0
    %p100 = por %p98, %p99
    %p101 = scmp.ne.s32.totalorder %s90, %s93
    %p102 = scmp.eq.s32.totalorder %s15, 1
    %p103 = por %p101, %p102
    %p104 = scmp.ne.s32.totalorder %s93, %s94
    %p105 = scmp.eq.s32.totalorder %s15, 0
    %p106 = por %p104, %p105
    %p107 = scmp.ne.s32.totalorder %s93, %s94
    %p108 = scmp.eq.s32.totalorder %s16, 1
    %p109 = por %p107, %p108
    %p111 = scmp.ne.s32.totalorder %s94, %s110
    %p112 = scmp.eq.s32.totalorder %s16, 0
    %p113 = por %p111, %p112
    %s114 = ssub.s32 %s17, %s36
    %s115 = ssub.s32 %s18, %s32
    %s116 = sor.u32 %s114, %s115
    %p117 = scmp.eq.s32.totalorder %s116, 0
    %s119 = sadd.s32 %s118, 1
    %s120 = scalar_select %p117, %s118, %s119
    %p123 = pneg %p117
    %p124 = scmp.eq.s32.totalorder %s10, 1
    %p125 = por %p123, %p124
    %p126 = scmp.ne.s32.totalorder %s118, %s121
    %p127 = scmp.eq.s32.totalorder %s10, 0
    %p128 = por %p126, %p127
    %p129 = scmp.ne.s32.totalorder %s118, %s121
    %p130 = scmp.eq.s32.totalorder %s15, 1
    %p131 = por %p129, %p130
    %p132 = scmp.ne.s32.totalorder %s121, %s122
    %p133 = scmp.eq.s32.totalorder %s15, 0
    %p134 = por %p132, %p133
    %p135 = scmp.ne.s32.totalorder %s121, %s122
    %p136 = scmp.eq.s32.totalorder %s16, 1
    %p137 = por %p135, %p136
    %p139 = scmp.ne.s32.totalorder %s122, %s138
    %p140 = scmp.eq.s32.totalorder %s16, 0
    %p141 = por %p139, %p140
    %s142 = ssub.s32 %s17, %s36
    %s143 = ssub.s32 %s18, %s32
    %s144 = sor.u32 %s142, %s143
    %p145 = scmp.eq.s32.totalorder %s144, 0
    %s147 = sadd.s32 %s146, 1
    %s148 = scalar_select %p145, %s146, %s147
    %p151 = pneg %p145
    %p152 = scmp.eq.s32.totalorder %s10, 1
    %p153 = por %p151, %p152
    %p154 = scmp.ne.s32.totalorder %s146, %s149
    %p155 = scmp.eq.s32.totalorder %s10, 0
    %p156 = por %p154, %p155
    %p157 = scmp.ne.s32.totalorder %s146, %s149
    %p158 = scmp.eq.s32.totalorder %s15, 1
    %p159 = por %p157, %p158
    %p160 = scmp.ne.s32.totalorder %s149, %s150
    %p161 = scmp.eq.s32.totalorder %s15, 0
    %p162 = por %p160, %p161
    %p163 = scmp.ne.s32.totalorder %s149, %s150
    %p164 = scmp.eq.s32.totalorder %s16, 1
    %p165 = por %p163, %p164
    %p167 = scmp.ne.s32.totalorder %s150, %s166
    %p168 = scmp.eq.s32.totalorder %s16, 0
    %p169 = por %p167, %p168
    %p170 = scmp.le.s32.totalorder 1, %s10
    %p171 = scmp.lt.s32.totalorder %s10, 3
    %p172 = pnand %p170, %p171
    %p173 = pneg %p172
    // Predicated region
    $region9: #{tpu_custom_call.1} parent=5 // pred_check
      _
    $region10: #{tpu_custom_call.1} parent=5 // pred_check_branch
      %175 = sbr.rel (%p172) target = $region12
    $region11: #{tpu_custom_call.1} parent=5 // pred_region
      %s176 = ssub.s32 %s10, 1
      // Predicated region
      $region13: #{tpu_custom_call.1} parent=11 // pred_check
        %p177 = pneg %p50
      $region14: #{tpu_custom_call.1} parent=11 // pred_check_branch
        %179 = sbr.rel (%p177) target = $region16
      $region15: #{tpu_custom_call.1} parent=11 // pred_region
        _
      $region16: #{tpu_custom_call.1} parent=11 // pred_fallthru
        _
    $region12: #{tpu_custom_call.1} parent=5 // pred_fallthru
      _
    %p180 = scmp.lt.s32.totalorder %s10, 2
    // Predicated region
    $region17: #{tpu_custom_call.1} parent=5 // pred_check
      %p181 = pneg %p180
    $region18: #{tpu_custom_call.1} parent=5 // pred_check_branch
      %183 = sbr.rel (%p181) target = $region20
    $region19: #{tpu_custom_call.1} parent=5 // pred_region
      // Predicated region
      $region21: #{tpu_custom_call.1} parent=19 // pred_check
        %p184 = pneg %p72
      $region22: #{tpu_custom_call.1} parent=19 // pred_check_branch
        %186 = sbr.rel (%p184) target = $region24
      $region23: #{tpu_custom_call.1} parent=19 // pred_region
        %s187 = smul.u32 32, %s19
        %p188 = scmp.lt.s32.totalorder %s17, 1
        %s189 = scalar_select %p188, %s17, 1
        %p190 = scmp.lt.s32.totalorder %s187, 31
        %s191 = scalar_select %p190, %s187, 31
        %s192 = smul.addr %s189, 32
        %s193 = sadd.s32 %s191, %s192
        %s194 = smul.addr %s193, 8
        %s195 = scalar_lea.vmem %s1, %s194
        %s196 = smul.u32 32, %s19
      $region24: #{tpu_custom_call.1} parent=19 // pred_fallthru
        _
      // Predicated region
      $region25: #{tpu_custom_call.1} parent=19 // pred_check
        %p197 = pneg %p100
      $region26: #{tpu_custom_call.1} parent=19 // pred_check_branch
        %199 = sbr.rel (%p197) target = $region28
      $region27: #{tpu_custom_call.1} parent=19 // pred_region
        %s200 = smul.u32 2, %s19
        %p201 = scmp.lt.s32.totalorder %s17, 1
        %s202 = scalar_select %p201, %s17, 1
        %p203 = scmp.lt.s32.totalorder %s200, 1
        %s204 = scalar_select %p203, %s200, 1
        %s205 = smul.addr %s202, 4
        %s206 = sadd.s32 %s204, %s205
        %s207 = smul.addr %s206, 4
        %s208 = scalar_lea.vmem %s2, %s207
        %s209 = smul.u32 2, %s19
      $region28: #{tpu_custom_call.1} parent=19 // pred_fallthru
        _
      // Predicated region
      $region29: #{tpu_custom_call.1} parent=19 // pred_check
        %p210 = pneg %p128
      $region30: #{tpu_custom_call.1} parent=19 // pred_check_branch
        %212 = sbr.rel (%p210) target = $region32
      $region31: #{tpu_custom_call.1} parent=19 // pred_region
        %p213 = scmp.lt.s32.totalorder %s17, 1
        %s214 = scalar_select %p213, %s17, 1
        %p215 = scmp.lt.s32.totalorder %s18, 0
        %s216 = scalar_select %p215, %s18, 0
        %s217 = sadd.s32 %s216, %s214
        %s218 = smul.addr %s217, 4
        %s219 = scalar_lea.vmem %s3, %s218
      $region32: #{tpu_custom_call.1} parent=19 // pred_fallthru
        _
    $region20: #{tpu_custom_call.1} parent=5 // pred_fallthru
      _
    %p220 = scmp.le.s32.totalorder 1, %s10
    %p221 = scmp.lt.s32.totalorder %s10, 3
    %p222 = pnand %p220, %p221
    %p223 = pneg %p222
    // Predicated region
    $region33: #{tpu_custom_call.1} parent=5 // pred_check
      _
    $region34: #{tpu_custom_call.1} parent=5 // pred_check_branch
      %225 = sbr.rel (%p222) target = $region36
    $region35: #{tpu_custom_call.1} parent=5 // pred_region
      %s226 = ssub.s32 %s10, 1
      %p227 = pneg %p50
      %p228 = pneg %p47
      %s229 = smul.u32 32, %s22
      %p230 = scmp.lt.s32.totalorder %s20, 1
      %s231 = scalar_select %p230, %s20, 1
      %p232 = scmp.lt.s32.totalorder %s229, 31
      %s233 = scalar_select %p232, %s229, 31
      %s234 = smul.addr %s231, 32
      %s235 = sadd.s32 %s233, %s234
      %s236 = smul.addr %s235, 8
      %s237 = scalar_lea.vmem %s1, %s236
      %p238 = pneg %p78
      %p239 = pneg %p75
      %s240 = smul.u32 2, %s22
      %p241 = scmp.lt.s32.totalorder %s20, 1
      %s242 = scalar_select %p241, %s20, 1
      %p243 = scmp.lt.s32.totalorder %s240, 1
      %s244 = scalar_select %p243, %s240, 1
      %s245 = smul.addr %s242, 4
      %s246 = sadd.s32 %s244, %s245
      %s247 = smul.addr %s246, 4
      %s248 = scalar_lea.vmem %s2, %s247
      %p249 = pneg %p106
      %p250 = pneg %p103
      %p251 = scmp.lt.s32.totalorder %s20, 1
      %s252 = scalar_select %p251, %s20, 1
      %p253 = scmp.lt.s32.totalorder %s21, 0
      %s254 = scalar_select %p253, %s21, 0
      %s255 = sadd.s32 %s254, %s252
      %s256 = smul.addr %s255, 4
      %s257 = scalar_lea.vmem %s3, %s256
      %p258 = pneg %p134
      %p259 = pneg %p131
      %p260 = pneg %p162
      %p261 = pneg %p159
      %s262 = smul.u32 16, %s21
      %p263 = scmp.lt.s32.totalorder %s20, 1
      %s264 = scalar_select %p263, %s20, 1
      %p265 = scmp.lt.s32.totalorder %s262, 15
      %s266 = scalar_select %p265, %s262, 15
      %s267 = smul.addr %s264, 128
      %s268 = sadd.s32 %s266, %s267
      %s269 = smul.addr %s268, 8
      %s270 = scalar_lea.vmem %s4, %s269
      %s271 = smul.u32 32, %s22
      %p272 = scmp.lt.s32.totalorder %s20, 1
      %s273 = scalar_select %p272, %s20, 1
      %p274 = scmp.lt.s32.totalorder %s271, 31
      %s275 = scalar_select %p274, %s271, 31
      %s276 = smul.addr %s273, 32
      %s277 = sadd.s32 %s275, %s276
      %s278 = smul.addr %s277, 8
      %s279 = scalar_lea.vmem %s1, %s278
      %s280 = smul.u32 32, %s22
      %s281 = smul.u32 2, %s22
      %p282 = scmp.lt.s32.totalorder %s20, 1
      %s283 = scalar_select %p282, %s20, 1
      %p284 = scmp.lt.s32.totalorder %s281, 1
      %s285 = scalar_select %p284, %s281, 1
      %s286 = smul.addr %s283, 4
      %s287 = sadd.s32 %s285, %s286
      %s288 = smul.addr %s287, 4
      %s289 = scalar_lea.vmem %s2, %s288
      %s290 = smul.u32 2, %s22
      %p291 = scmp.lt.s32.totalorder %s20, 1
      %s292 = scalar_select %p291, %s20, 1
      %p293 = scmp.lt.s32.totalorder %s21, 0
      %s294 = scalar_select %p293, %s21, 0
      %s295 = sadd.s32 %s294, %s292
      %s296 = smul.addr %s295, 4
      %s297 = scalar_lea.vmem %s3, %s296
      %s298 = smul.u32 16, %s21
      %p299 = scmp.lt.s32.totalorder %s20, 1
      %s300 = scalar_select %p299, %s20, 1
      %p301 = scmp.lt.s32.totalorder %s298, 15
      %s302 = scalar_select %p301, %s298, 15
      %s303 = smul.addr %s300, 128
      %s304 = sadd.s32 %s302, %s303
      %s305 = smul.addr %s304, 8
      %s306 = scalar_lea.vmem %s4, %s305
      %s307 = smul.u32 16, %s21
      %p308 = scmp.eq.s32.totalorder %s22, 0
      // Predicated region
      $region37: #{tpu_custom_call.1} parent=35 // pred_check
        %p309 = pneg %p308
      $region38: #{tpu_custom_call.1} parent=35 // pred_check_branch
        %311 = sbr.rel (%p309) target = $region40
      $region39: #{tpu_custom_call.1} parent=35 // pred_region
        %312 = vst [vmem:[#allocation2] sm:$0xff] 0.0
        %313 = vst [vmem:[#allocation2 + $0x8] sm:$0xff] 0.0
        %314 = vst [vmem:[#allocation2 + $0x10] sm:$0xff] 0.0
        %315 = vst [vmem:[#allocation2 + $0x18] sm:$0xff] 0.0
        %316 = vst [vmem:[#allocation2 + $0x20] sm:$0xff] 0.0
        %317 = vst [vmem:[#allocation2 + $0x28] sm:$0xff] 0.0
        %318 = vst [vmem:[#allocation2 + $0x30] sm:$0xff] 0.0
        %319 = vst [vmem:[#allocation2 + $0x38] sm:$0xff] 0.0
        %320 = vst [vmem:[#allocation2 + $0x40] sm:$0x7] 0.0
        %321 = vst [vmem:[#allocation2 + $0x48] sm:$0x7] 0.0
        %322 = vst [vmem:[#allocation2 + $0x50] sm:$0x7] 0.0
        %323 = vst [vmem:[#allocation2 + $0x58] sm:$0x7] 0.0
        %324 = vst [vmem:[#allocation2 + $0x60] sm:$0x7] 0.0
        %325 = vst [vmem:[#allocation2 + $0x68] sm:$0x7] 0.0
        %326 = vst [vmem:[#allocation2 + $0x70] sm:$0x7] 0.0
        %327 = vst [vmem:[#allocation2 + $0x78] sm:$0x7] 0.0
        %328 = vst [vmem:[#allocation3] sm:$0x1] 0.0
      $region40: #{tpu_custom_call.1} parent=35 // pred_fallthru
        _
      %v329 = vld [vmem:[%s279] sm:$0xff]
      %v330 = vld [vmem:[%s279 + $0x8] sm:$0xff]
      %v331 = vld [vmem:[%s279 + $0x10] sm:$0xff]
      %v332 = vld [vmem:[%s279 + $0x18] sm:$0xff]
      %v333 = vld [vmem:[%s279 + $0x20] sm:$0xff]
      %v334 = vld [vmem:[%s279 + $0x28] sm:$0xff]
      %v335 = vld [vmem:[%s279 + $0x30] sm:$0xff]
      %v336 = vld [vmem:[%s279 + $0x38] sm:$0xff]
      %v337 = vld [vmem:[%s279 + $0x40] sm:$0xff]
      %v338 = vld [vmem:[%s279 + $0x48] sm:$0xff]
      %v339 = vld [vmem:[%s279 + $0x50] sm:$0xff]
      %v340 = vld [vmem:[%s279 + $0x58] sm:$0xff]
      %v341 = vld [vmem:[%s279 + $0x60] sm:$0xff]
      %v342 = vld [vmem:[%s279 + $0x68] sm:$0xff]
      %v343 = vld [vmem:[%s279 + $0x70] sm:$0xff]
      %v344 = vld [vmem:[%s279 + $0x78] sm:$0xff]
      %v345 = vld [vmem:[%s279 + $0x80] sm:$0xff]
      %v346 = vld [vmem:[%s279 + $0x88] sm:$0xff]
      %v347 = vld [vmem:[%s279 + $0x90] sm:$0xff]
      %v348 = vld [vmem:[%s279 + $0x98] sm:$0xff]
      %v349 = vld [vmem:[%s279 + $0xa0] sm:$0xff]
      %v350 = vld [vmem:[%s279 + $0xa8] sm:$0xff]
      %v351 = vld [vmem:[%s279 + $0xb0] sm:$0xff]
      %v352 = vld [vmem:[%s279 + $0xb8] sm:$0xff]
      %v353 = vld [vmem:[%s279 + $0xc0] sm:$0xff]
      %v354 = vld [vmem:[%s279 + $0xc8] sm:$0xff]
      %v355 = vld [vmem:[%s279 + $0xd0] sm:$0xff]
      %v356 = vld [vmem:[%s279 + $0xd8] sm:$0xff]
      %v357 = vld [vmem:[%s279 + $0xe0] sm:$0xff]
      %v358 = vld [vmem:[%s279 + $0xe8] sm:$0xff]
      %v359 = vld [vmem:[%s279 + $0xf0] sm:$0xff]
      %v360 = vld [vmem:[%s279 + $0xf8] sm:$0xff]
      %v361 = vld [vmem:[%s297] sm:$0x7]
      %v362 = vld [vmem:[%s0] sm:$0xff]
      %v363 = vld [vmem:[%s0 + $0x8] sm:$0xff]
      %v364 = vld [vmem:[%s0 + $0x10] sm:$0xff]
      %v365 = vld [vmem:[%s0 + $0x18] sm:$0xff]
      %v366 = vld [vmem:[%s0 + $0x20] sm:$0xff]
      %v367 = vld [vmem:[%s0 + $0x28] sm:$0xff]
      %v368 = vld [vmem:[%s0 + $0x30] sm:$0xff]
      %v369 = vld [vmem:[%s0 + $0x38] sm:$0xff]
      %v370 = vld [vmem:[%s0 + $0x40] sm:$0xff]
      %v371 = vld [vmem:[%s0 + $0x48] sm:$0xff]
      %v372 = vld [vmem:[%s0 + $0x50] sm:$0xff]
      %v373 = vld [vmem:[%s0 + $0x58] sm:$0xff]
      %v374 = vld [vmem:[%s0 + $0x60] sm:$0xff]
      %v375 = vld [vmem:[%s0 + $0x68] sm:$0xff]
      %v376 = vld [vmem:[%s0 + $0x70] sm:$0xff]
      %v377 = vld [vmem:[%s0 + $0x78] sm:$0xff]
      %v378 = vld [vmem:[%s0 + $0x80] sm:$0xff]
      %v379 = vld [vmem:[%s0 + $0x88] sm:$0xff]
      %v380 = vld [vmem:[%s0 + $0x90] sm:$0xff]
      %v381 = vld [vmem:[%s0 + $0x98] sm:$0xff]
      %v382 = vld [vmem:[%s0 + $0xa0] sm:$0xff]
      %v383 = vld [vmem:[%s0 + $0xa8] sm:$0xff]
      %v384 = vld [vmem:[%s0 + $0xb0] sm:$0xff]
      %v385 = vld [vmem:[%s0 + $0xb8] sm:$0xff]
      %v386 = vld [vmem:[%s0 + $0xc0] sm:$0xff]
      %v387 = vld [vmem:[%s0 + $0xc8] sm:$0xff]
      %v388 = vld [vmem:[%s0 + $0xd0] sm:$0xff]
      %v389 = vld [vmem:[%s0 + $0xd8] sm:$0xff]
      %v390 = vld [vmem:[%s0 + $0xe0] sm:$0xff]
      %v391 = vld [vmem:[%s0 + $0xe8] sm:$0xff]
      %v392 = vld [vmem:[%s0 + $0xf0] sm:$0xff]
      %v393 = vld [vmem:[%s0 + $0xf8] sm:$0xff]
      %v394 = vld [vmem:[%s289] sm:$0xff]
      %v395 = vld [vmem:[%s289 + $0x8] sm:$0x33]
      %397 = vset.pattern.permute.xlu0 0
      %398 = vperm.xlu0 %397, %v329
      %v399 = vpop.permute.xlu0 %398
      %402 = vset.pattern.permute.xlu0 0
      %403 = vperm.xlu0 %402, %v330
      %v404 = vpop.permute.xlu0 %403
      %407 = vset.pattern.permute.xlu0 0
      %408 = vperm.xlu0 %407, %v331
      %v409 = vpop.permute.xlu0 %408
      %412 = vset.pattern.permute.xlu0 0
      %413 = vperm.xlu0 %412, %v332
      %v414 = vpop.permute.xlu0 %413
      %417 = vset.pattern.permute.xlu0 0
      %418 = vperm.xlu0 %417, %v333
      %v419 = vpop.permute.xlu0 %418
      %422 = vset.pattern.permute.xlu0 0
      %423 = vperm.xlu0 %422, %v334
      %v424 = vpop.permute.xlu0 %423
      %427 = vset.pattern.permute.xlu0 0
      %428 = vperm.xlu0 %427, %v335
      %v429 = vpop.permute.xlu0 %428
      %432 = vset.pattern.permute.xlu0 0
      %433 = vperm.xlu0 %432, %v336
      %v434 = vpop.permute.xlu0 %433
      %437 = vset.pattern.permute.xlu0 0
      %438 = vperm.xlu0 %437, %v337
      %v439 = vpop.permute.xlu0 %438
      %442 = vset.pattern.permute.xlu0 0
      %443 = vperm.xlu0 %442, %v338
      %v444 = vpop.permute.xlu0 %443
      %447 = vset.pattern.permute.xlu0 0
      %448 = vperm.xlu0 %447, %v339
      %v449 = vpop.permute.xlu0 %448
      %452 = vset.pattern.permute.xlu0 0
      %453 = vperm.xlu0 %452, %v340
      %v454 = vpop.permute.xlu0 %453
      %457 = vset.pattern.permute.xlu0 0
      %458 = vperm.xlu0 %457, %v341
      %v459 = vpop.permute.xlu0 %458
      %462 = vset.pattern.permute.xlu0 0
      %463 = vperm.xlu0 %462, %v342
      %v464 = vpop.permute.xlu0 %463
      %467 = vset.pattern.permute.xlu0 0
      %468 = vperm.xlu0 %467, %v343
      %v469 = vpop.permute.xlu0 %468
      %472 = vset.pattern.permute.xlu0 0
      %473 = vperm.xlu0 %472, %v344
      %v474 = vpop.permute.xlu0 %473
      %477 = vset.pattern.permute.xlu0 0
      %478 = vperm.xlu0 %477, %v345
      %v479 = vpop.permute.xlu0 %478
      %482 = vset.pattern.permute.xlu0 0
      %483 = vperm.xlu0 %482, %v346
      %v484 = vpop.permute.xlu0 %483
      %487 = vset.pattern.permute.xlu0 0
      %488 = vperm.xlu0 %487, %v347
      %v489 = vpop.permute.xlu0 %488
      %492 = vset.pattern.permute.xlu0 0
      %493 = vperm.xlu0 %492, %v348
      %v494 = vpop.permute.xlu0 %493
      %497 = vset.pattern.permute.xlu0 0
      %498 = vperm.xlu0 %497, %v349
      %v499 = vpop.permute.xlu0 %498
      %502 = vset.pattern.permute.xlu0 0
      %503 = vperm.xlu0 %502, %v350
      %v504 = vpop.permute.xlu0 %503
      %507 = vset.pattern.permute.xlu0 0
      %508 = vperm.xlu0 %507, %v351
      %v509 = vpop.permute.xlu0 %508
      %512 = vset.pattern.permute.xlu0 0
      %513 = vperm.xlu0 %512, %v352
      %v514 = vpop.permute.xlu0 %513
      %517 = vset.pattern.permute.xlu0 0
      %518 = vperm.xlu0 %517, %v353
      %v519 = vpop.permute.xlu0 %518
      %522 = vset.pattern.permute.xlu0 0
      %523 = vperm.xlu0 %522, %v354
      %v524 = vpop.permute.xlu0 %523
      %527 = vset.pattern.permute.xlu0 0
      %528 = vperm.xlu0 %527, %v355
      %v529 = vpop.permute.xlu0 %528
      %532 = vset.pattern.permute.xlu0 0
      %533 = vperm.xlu0 %532, %v356
      %v534 = vpop.permute.xlu0 %533
      %537 = vset.pattern.permute.xlu0 0
      %538 = vperm.xlu0 %537, %v357
      %v539 = vpop.permute.xlu0 %538
      %542 = vset.pattern.permute.xlu0 0
      %543 = vperm.xlu0 %542, %v358
      %v544 = vpop.permute.xlu0 %543
      %547 = vset.pattern.permute.xlu0 0
      %548 = vperm.xlu0 %547, %v359
      %v549 = vpop.permute.xlu0 %548
      %552 = vset.pattern.permute.xlu0 0
      %553 = vperm.xlu0 %552, %v360
      %v554 = vpop.permute.xlu0 %553
      %v556 = vperm.slane %v361, 0
      %v557 = vsub.f32 %v399, %v556
      %v558 = vsub.f32 %v404, %v556
      %v559 = vsub.f32 %v409, %v556
      %v560 = vsub.f32 %v414, %v556
      %v561 = vsub.f32 %v419, %v556
      %v562 = vsub.f32 %v424, %v556
      %v563 = vsub.f32 %v429, %v556
      %v564 = vsub.f32 %v434, %v556
      %v565 = vsub.f32 %v439, %v556
      %v566 = vsub.f32 %v444, %v556
      %v567 = vsub.f32 %v449, %v556
      %v568 = vsub.f32 %v454, %v556
      %v569 = vsub.f32 %v459, %v556
      %v570 = vsub.f32 %v464, %v556
      %v571 = vsub.f32 %v469, %v556
      %v572 = vsub.f32 %v474, %v556
      %v573 = vsub.f32 %v479, %v556
      %v574 = vsub.f32 %v484, %v556
      %v575 = vsub.f32 %v489, %v556
      %v576 = vsub.f32 %v494, %v556
      %v577 = vsub.f32 %v499, %v556
      %v578 = vsub.f32 %v504, %v556
      %v579 = vsub.f32 %v509, %v556
      %v580 = vsub.f32 %v514, %v556
      %v581 = vsub.f32 %v519, %v556
      %v582 = vsub.f32 %v524, %v556
      %v583 = vsub.f32 %v529, %v556
      %v584 = vsub.f32 %v534, %v556
      %v585 = vsub.f32 %v539, %v556
      %v586 = vsub.f32 %v544, %v556
      %v587 = vsub.f32 %v549, %v556
      %v588 = vsub.f32 %v554, %v556
      %v589 = vmul.f32 %v557, %v557
      %v590 = vmul.f32 %v558, %v558
      %v591 = vmul.f32 %v559, %v559
      %v592 = vmul.f32 %v560, %v560
      %v593 = vmul.f32 %v561, %v561
      %v594 = vmul.f32 %v562, %v562
      %v595 = vmul.f32 %v563, %v563
      %v596 = vmul.f32 %v564, %v564
      %v597 = vmul.f32 %v565, %v565
      %v598 = vmul.f32 %v566, %v566
      %v599 = vmul.f32 %v567, %v567
      %v600 = vmul.f32 %v568, %v568
      %v601 = vmul.f32 %v569, %v569
      %v602 = vmul.f32 %v570, %v570
      %v603 = vmul.f32 %v571, %v571
      %v604 = vmul.f32 %v572, %v572
      %v605 = vmul.f32 %v573, %v573
      %v606 = vmul.f32 %v574, %v574
      %v607 = vmul.f32 %v575, %v575
      %v608 = vmul.f32 %v576, %v576
      %v609 = vmul.f32 %v577, %v577
      %v610 = vmul.f32 %v578, %v578
      %v611 = vmul.f32 %v579, %v579
      %v612 = vmul.f32 %v580, %v580
      %v613 = vmul.f32 %v581, %v581
      %v614 = vmul.f32 %v582, %v582
      %v615 = vmul.f32 %v583, %v583
      %v616 = vmul.f32 %v584, %v584
      %v617 = vmul.f32 %v585, %v585
      %v618 = vmul.f32 %v586, %v586
      %v619 = vmul.f32 %v587, %v587
      %v620 = vmul.f32 %v588, %v588
      %v621 = vadd.f32 %v589, 0.0
      %v622 = vadd.f32 %v590, 0.0
      %v623 = vadd.f32 %v591, 0.0
      %v624 = vadd.f32 %v592, 0.0
      %v625 = vadd.f32 %v593, 0.0
      %v626 = vadd.f32 %v594, 0.0
      %v627 = vadd.f32 %v595, 0.0
      %v628 = vadd.f32 %v596, 0.0
      %v629 = vadd.f32 %v597, 0.0
      %v630 = vadd.f32 %v598, 0.0
      %v631 = vadd.f32 %v599, 0.0
      %v632 = vadd.f32 %v600, 0.0
      %v633 = vadd.f32 %v601, 0.0
      %v634 = vadd.f32 %v602, 0.0
      %v635 = vadd.f32 %v603, 0.0
      %v636 = vadd.f32 %v604, 0.0
      %v637 = vadd.f32 %v605, 0.0
      %v638 = vadd.f32 %v606, 0.0
      %v639 = vadd.f32 %v607, 0.0
      %v640 = vadd.f32 %v608, 0.0
      %v641 = vadd.f32 %v609, 0.0
      %v642 = vadd.f32 %v610, 0.0
      %v643 = vadd.f32 %v611, 0.0
      %v644 = vadd.f32 %v612, 0.0
      %v645 = vadd.f32 %v613, 0.0
      %v646 = vadd.f32 %v614, 0.0
      %v647 = vadd.f32 %v615, 0.0
      %v648 = vadd.f32 %v616, 0.0
      %v649 = vadd.f32 %v617, 0.0
      %v650 = vadd.f32 %v618, 0.0
      %v651 = vadd.f32 %v619, 0.0
      %v652 = vadd.f32 %v620, 0.0
      %653 = vset.pattern.permute.xlu0 1
      %654 = vperm.xlu0 %653, %v329
      %v655 = vpop.permute.xlu0 %654
      %657 = vset.pattern.permute.xlu0 1
      %658 = vperm.xlu0 %657, %v330
      %v659 = vpop.permute.xlu0 %658
      %661 = vset.pattern.permute.xlu0 1
      %662 = vperm.xlu0 %661, %v331
      %v663 = vpop.permute.xlu0 %662
      %665 = vset.pattern.permute.xlu0 1
      %666 = vperm.xlu0 %665, %v332
      %v667 = vpop.permute.xlu0 %666
      %669 = vset.pattern.permute.xlu0 1
      %670 = vperm.xlu0 %669, %v333
      %v671 = vpop.permute.xlu0 %670
      %673 = vset.pattern.permute.xlu0 1
      %674 = vperm.xlu0 %673, %v334
      %v675 = vpop.permute.xlu0 %674
      %677 = vset.pattern.permute.xlu0 1
      %678 = vperm.xlu0 %677, %v335
      %v679 = vpop.permute.xlu0 %678
      %681 = vset.pattern.permute.xlu0 1
      %682 = vperm.xlu0 %681, %v336
      %v683 = vpop.permute.xlu0 %682
      %685 = vset.pattern.permute.xlu0 1
      %686 = vperm.xlu0 %685, %v337
      %v687 = vpop.permute.xlu0 %686
      %689 = vset.pattern.permute.xlu0 1
      %690 = vperm.xlu0 %689, %v338
      %v691 = vpop.permute.xlu0 %690
      %693 = vset.pattern.permute.xlu0 1
      %694 = vperm.xlu0 %693, %v339
      %v695 = vpop.permute.xlu0 %694
      %697 = vset.pattern.permute.xlu0 1
      %698 = vperm.xlu0 %697, %v340
      %v699 = vpop.permute.xlu0 %698
      %701 = vset.pattern.permute.xlu0 1
      %702 = vperm.xlu0 %701, %v341
      %v703 = vpop.permute.xlu0 %702
      %705 = vset.pattern.permute.xlu0 1
      %706 = vperm.xlu0 %705, %v342
      %v707 = vpop.permute.xlu0 %706
      %709 = vset.pattern.permute.xlu0 1
      %710 = vperm.xlu0 %709, %v343
      %v711 = vpop.permute.xlu0 %710
      %713 = vset.pattern.permute.xlu0 1
      %714 = vperm.xlu0 %713, %v344
      %v715 = vpop.permute.xlu0 %714
      %717 = vset.pattern.permute.xlu0 1
      %718 = vperm.xlu0 %717, %v345
      %v719 = vpop.permute.xlu0 %718
      %721 = vset.pattern.permute.xlu0 1
      %722 = vperm.xlu0 %721, %v346
      %v723 = vpop.permute.xlu0 %722
      %725 = vset.pattern.permute.xlu0 1
      %726 = vperm.xlu0 %725, %v347
      %v727 = vpop.permute.xlu0 %726
      %729 = vset.pattern.permute.xlu0 1
      %730 = vperm.xlu0 %729, %v348
      %v731 = vpop.permute.xlu0 %730
      %733 = vset.pattern.permute.xlu0 1
      %734 = vperm.xlu0 %733, %v349
      %v735 = vpop.permute.xlu0 %734
      %737 = vset.pattern.permute.xlu0 1
      %738 = vperm.xlu0 %737, %v350
      %v739 = vpop.permute.xlu0 %738
      %741 = vset.pattern.permute.xlu0 1
      %742 = vperm.xlu0 %741, %v351
      %v743 = vpop.permute.xlu0 %742
      %745 = vset.pattern.permute.xlu0 1
      %746 = vperm.xlu0 %745, %v352
      %v747 = vpop.permute.xlu0 %746
      %749 = vset.pattern.permute.xlu0 1
      %750 = vperm.xlu0 %749, %v353
      %v751 = vpop.permute.xlu0 %750
      %753 = vset.pattern.permute.xlu0 1
      %754 = vperm.xlu0 %753, %v354
      %v755 = vpop.permute.xlu0 %754
      %757 = vset.pattern.permute.xlu0 1
      %758 = vperm.xlu0 %757, %v355
      %v759 = vpop.permute.xlu0 %758
      %761 = vset.pattern.permute.xlu0 1
      %762 = vperm.xlu0 %761, %v356
      %v763 = vpop.permute.xlu0 %762
      %765 = vset.pattern.permute.xlu0 1
      %766 = vperm.xlu0 %765, %v357
      %v767 = vpop.permute.xlu0 %766
      %769 = vset.pattern.permute.xlu0 1
      %770 = vperm.xlu0 %769, %v358
      %v771 = vpop.permute.xlu0 %770
      %773 = vset.pattern.permute.xlu0 1
      %774 = vperm.xlu0 %773, %v359
      %v775 = vpop.permute.xlu0 %774
      %777 = vset.pattern.permute.xlu0 1
      %778 = vperm.xlu0 %777, %v360
      %v779 = vpop.permute.xlu0 %778
      %v781 = vperm.slane %v361, 1
      %v782 = vsub.f32 %v655, %v781
      %v783 = vsub.f32 %v659, %v781
      %v784 = vsub.f32 %v663, %v781
      %v785 = vsub.f32 %v667, %v781
      %v786 = vsub.f32 %v671, %v781
      %v787 = vsub.f32 %v675, %v781
      %v788 = vsub.f32 %v679, %v781
      %v789 = vsub.f32 %v683, %v781
      %v790 = vsub.f32 %v687, %v781
      %v791 = vsub.f32 %v691, %v781
      %v792 = vsub.f32 %v695, %v781
      %v793 = vsub.f32 %v699, %v781
      %v794 = vsub.f32 %v703, %v781
      %v795 = vsub.f32 %v707, %v781
      %v796 = vsub.f32 %v711, %v781
      %v797 = vsub.f32 %v715, %v781
      %v798 = vsub.f32 %v719, %v781
      %v799 = vsub.f32 %v723, %v781
      %v800 = vsub.f32 %v727, %v781
      %v801 = vsub.f32 %v731, %v781
      %v802 = vsub.f32 %v735, %v781
      %v803 = vsub.f32 %v739, %v781
      %v804 = vsub.f32 %v743, %v781
      %v805 = vsub.f32 %v747, %v781
      %v806 = vsub.f32 %v751, %v781
      %v807 = vsub.f32 %v755, %v781
      %v808 = vsub.f32 %v759, %v781
      %v809 = vsub.f32 %v763, %v781
      %v810 = vsub.f32 %v767, %v781
      %v811 = vsub.f32 %v771, %v781
      %v812 = vsub.f32 %v775, %v781
      %v813 = vsub.f32 %v779, %v781
      %v814 = vmul.f32 %v782, %v782
      %v815 = vmul.f32 %v783, %v783
      %v816 = vmul.f32 %v784, %v784
      %v817 = vmul.f32 %v785, %v785
      %v818 = vmul.f32 %v786, %v786
      %v819 = vmul.f32 %v787, %v787
      %v820 = vmul.f32 %v788, %v788
      %v821 = vmul.f32 %v789, %v789
      %v822 = vmul.f32 %v790, %v790
      %v823 = vmul.f32 %v791, %v791
      %v824 = vmul.f32 %v792, %v792
      %v825 = vmul.f32 %v793, %v793
      %v826 = vmul.f32 %v794, %v794
      %v827 = vmul.f32 %v795, %v795
      %v828 = vmul.f32 %v796, %v796
      %v829 = vmul.f32 %v797, %v797
      %v830 = vmul.f32 %v798, %v798
      %v831 = vmul.f32 %v799, %v799
      %v832 = vmul.f32 %v800, %v800
      %v833 = vmul.f32 %v801, %v801
      %v834 = vmul.f32 %v802, %v802
      %v835 = vmul.f32 %v803, %v803
      %v836 = vmul.f32 %v804, %v804
      %v837 = vmul.f32 %v805, %v805
      %v838 = vmul.f32 %v806, %v806
      %v839 = vmul.f32 %v807, %v807
      %v840 = vmul.f32 %v808, %v808
      %v841 = vmul.f32 %v809, %v809
      %v842 = vmul.f32 %v810, %v810
      %v843 = vmul.f32 %v811, %v811
      %v844 = vmul.f32 %v812, %v812
      %v845 = vmul.f32 %v813, %v813
      %v846 = vadd.f32 %v621, %v814
      %v847 = vadd.f32 %v622, %v815
      %v848 = vadd.f32 %v623, %v816
      %v849 = vadd.f32 %v624, %v817
      %v850 = vadd.f32 %v625, %v818
      %v851 = vadd.f32 %v626, %v819
      %v852 = vadd.f32 %v627, %v820
      %v853 = vadd.f32 %v628, %v821
      %v854 = vadd.f32 %v629, %v822
      %v855 = vadd.f32 %v630, %v823
      %v856 = vadd.f32 %v631, %v824
      %v857 = vadd.f32 %v632, %v825
      %v858 = vadd.f32 %v633, %v826
      %v859 = vadd.f32 %v634, %v827
      %v860 = vadd.f32 %v635, %v828
      %v861 = vadd.f32 %v636, %v829
      %v862 = vadd.f32 %v637, %v830
      %v863 = vadd.f32 %v638, %v831
      %v864 = vadd.f32 %v639, %v832
      %v865 = vadd.f32 %v640, %v833
      %v866 = vadd.f32 %v641, %v834
      %v867 = vadd.f32 %v642, %v835
      %v868 = vadd.f32 %v643, %v836
      %v869 = vadd.f32 %v644, %v837
      %v870 = vadd.f32 %v645, %v838
      %v871 = vadd.f32 %v646, %v839
      %v872 = vadd.f32 %v647, %v840
      %v873 = vadd.f32 %v648, %v841
      %v874 = vadd.f32 %v649, %v842
      %v875 = vadd.f32 %v650, %v843
      %v876 = vadd.f32 %v651, %v844
      %v877 = vadd.f32 %v652, %v845
      %878 = vset.pattern.permute.xlu0 2
      %879 = vperm.xlu0 %878, %v329
      %v880 = vpop.permute.xlu0 %879
      %882 = vset.pattern.permute.xlu0 2
      %883 = vperm.xlu0 %882, %v330
      %v884 = vpop.permute.xlu0 %883
      %886 = vset.pattern.permute.xlu0 2
      %887 = vperm.xlu0 %886, %v331
      %v888 = vpop.permute.xlu0 %887
      %890 = vset.pattern.permute.xlu0 2
      %891 = vperm.xlu0 %890, %v332
      %v892 = vpop.permute.xlu0 %891
      %894 = vset.pattern.permute.xlu0 2
      %895 = vperm.xlu0 %894, %v333
      %v896 = vpop.permute.xlu0 %895
      %898 = vset.pattern.permute.xlu0 2
      %899 = vperm.xlu0 %898, %v334
      %v900 = vpop.permute.xlu0 %899
      %902 = vset.pattern.permute.xlu0 2
      %903 = vperm.xlu0 %902, %v335
      %v904 = vpop.permute.xlu0 %903
      %906 = vset.pattern.permute.xlu0 2
      %907 = vperm.xlu0 %906, %v336
      %v908 = vpop.permute.xlu0 %907
      %910 = vset.pattern.permute.xlu0 2
      %911 = vperm.xlu0 %910, %v337
      %v912 = vpop.permute.xlu0 %911
      %914 = vset.pattern.permute.xlu0 2
      %915 = vperm.xlu0 %914, %v338
      %v916 = vpop.permute.xlu0 %915
      %918 = vset.pattern.permute.xlu0 2
      %919 = vperm.xlu0 %918, %v339
      %v920 = vpop.permute.xlu0 %919
      %922 = vset.pattern.permute.xlu0 2
      %923 = vperm.xlu0 %922, %v340
      %v924 = vpop.permute.xlu0 %923
      %926 = vset.pattern.permute.xlu0 2
      %927 = vperm.xlu0 %926, %v341
      %v928 = vpop.permute.xlu0 %927
      %930 = vset.pattern.permute.xlu0 2
      %931 = vperm.xlu0 %930, %v342
      %v932 = vpop.permute.xlu0 %931
      %934 = vset.pattern.permute.xlu0 2
      %935 = vperm.xlu0 %934, %v343
      %v936 = vpop.permute.xlu0 %935
      %938 = vset.pattern.permute.xlu0 2
      %939 = vperm.xlu0 %938, %v344
      %v940 = vpop.permute.xlu0 %939
      %942 = vset.pattern.permute.xlu0 2
      %943 = vperm.xlu0 %942, %v345
      %v944 = vpop.permute.xlu0 %943
      %946 = vset.pattern.permute.xlu0 2
      %947 = vperm.xlu0 %946, %v346
      %v948 = vpop.permute.xlu0 %947
      %950 = vset.pattern.permute.xlu0 2
      %951 = vperm.xlu0 %950, %v347
      %v952 = vpop.permute.xlu0 %951
      %954 = vset.pattern.permute.xlu0 2
      %955 = vperm.xlu0 %954, %v348
      %v956 = vpop.permute.xlu0 %955
      %958 = vset.pattern.permute.xlu0 2
      %959 = vperm.xlu0 %958, %v349
      %v960 = vpop.permute.xlu0 %959
      %962 = vset.pattern.permute.xlu0 2
      %963 = vperm.xlu0 %962, %v350
      %v964 = vpop.permute.xlu0 %963
      %966 = vset.pattern.permute.xlu0 2
      %967 = vperm.xlu0 %966, %v351
      %v968 = vpop.permute.xlu0 %967
      %970 = vset.pattern.permute.xlu0 2
      %971 = vperm.xlu0 %970, %v352
      %v972 = vpop.permute.xlu0 %971
      %974 = vset.pattern.permute.xlu0 2
      %975 = vperm.xlu0 %974, %v353
      %v976 = vpop.permute.xlu0 %975
      %978 = vset.pattern.permute.xlu0 2
      %979 = vperm.xlu0 %978, %v354
      %v980 = vpop.permute.xlu0 %979
      %982 = vset.pattern.permute.xlu0 2
      %983 = vperm.xlu0 %982, %v355
      %v984 = vpop.permute.xlu0 %983
      %986 = vset.pattern.permute.xlu0 2
      %987 = vperm.xlu0 %986, %v356
      %v988 = vpop.permute.xlu0 %987
      %990 = vset.pattern.permute.xlu0 2
      %991 = vperm.xlu0 %990, %v357
      %v992 = vpop.permute.xlu0 %991
      %994 = vset.pattern.permute.xlu0 2
      %995 = vperm.xlu0 %994, %v358
      %v996 = vpop.permute.xlu0 %995
      %998 = vset.pattern.permute.xlu0 2
      %999 = vperm.xlu0 %998, %v359
      %v1000 = vpop.permute.xlu0 %999
      %1002 = vset.pattern.permute.xlu0 2
      %1003 = vperm.xlu0 %1002, %v360
      %v1004 = vpop.permute.xlu0 %1003
      %v1006 = vperm.slane %v361, 2
      %v1007 = vsub.f32 %v880, %v1006
      %v1008 = vsub.f32 %v884, %v1006
      %v1009 = vsub.f32 %v888, %v1006
      %v1010 = vsub.f32 %v892, %v1006
      %v1011 = vsub.f32 %v896, %v1006
      %v1012 = vsub.f32 %v900, %v1006
      %v1013 = vsub.f32 %v904, %v1006
      %v1014 = vsub.f32 %v908, %v1006
      %v1015 = vsub.f32 %v912, %v1006
      %v1016 = vsub.f32 %v916, %v1006
      %v1017 = vsub.f32 %v920, %v1006
      %v1018 = vsub.f32 %v924, %v1006
      %v1019 = vsub.f32 %v928, %v1006
      %v1020 = vsub.f32 %v932, %v1006
      %v1021 = vsub.f32 %v936, %v1006
      %v1022 = vsub.f32 %v940, %v1006
      %v1023 = vsub.f32 %v944, %v1006
      %v1024 = vsub.f32 %v948, %v1006
      %v1025 = vsub.f32 %v952, %v1006
      %v1026 = vsub.f32 %v956, %v1006
      %v1027 = vsub.f32 %v960, %v1006
      %v1028 = vsub.f32 %v964, %v1006
      %v1029 = vsub.f32 %v968, %v1006
      %v1030 = vsub.f32 %v972, %v1006
      %v1031 = vsub.f32 %v976, %v1006
      %v1032 = vsub.f32 %v980, %v1006
      %v1033 = vsub.f32 %v984, %v1006
      %v1034 = vsub.f32 %v988, %v1006
      %v1035 = vsub.f32 %v992, %v1006
      %v1036 = vsub.f32 %v996, %v1006
      %v1037 = vsub.f32 %v1000, %v1006
      %v1038 = vsub.f32 %v1004, %v1006
      %v1039 = vmul.f32 %v1007, %v1007
      %v1040 = vmul.f32 %v1008, %v1008
      %v1041 = vmul.f32 %v1009, %v1009
      %v1042 = vmul.f32 %v1010, %v1010
      %v1043 = vmul.f32 %v1011, %v1011
      %v1044 = vmul.f32 %v1012, %v1012
      %v1045 = vmul.f32 %v1013, %v1013
      %v1046 = vmul.f32 %v1014, %v1014
      %v1047 = vmul.f32 %v1015, %v1015
      %v1048 = vmul.f32 %v1016, %v1016
      %v1049 = vmul.f32 %v1017, %v1017
      %v1050 = vmul.f32 %v1018, %v1018
      %v1051 = vmul.f32 %v1019, %v1019
      %v1052 = vmul.f32 %v1020, %v1020
      %v1053 = vmul.f32 %v1021, %v1021
      %v1054 = vmul.f32 %v1022, %v1022
      %v1055 = vmul.f32 %v1023, %v1023
      %v1056 = vmul.f32 %v1024, %v1024
      %v1057 = vmul.f32 %v1025, %v1025
      %v1058 = vmul.f32 %v1026, %v1026
      %v1059 = vmul.f32 %v1027, %v1027
      %v1060 = vmul.f32 %v1028, %v1028
      %v1061 = vmul.f32 %v1029, %v1029
      %v1062 = vmul.f32 %v1030, %v1030
      %v1063 = vmul.f32 %v1031, %v1031
      %v1064 = vmul.f32 %v1032, %v1032
      %v1065 = vmul.f32 %v1033, %v1033
      %v1066 = vmul.f32 %v1034, %v1034
      %v1067 = vmul.f32 %v1035, %v1035
      %v1068 = vmul.f32 %v1036, %v1036
      %v1069 = vmul.f32 %v1037, %v1037
      %v1070 = vmul.f32 %v1038, %v1038
      %v1071 = vadd.f32 %v846, %v1039
      %v1072 = vadd.f32 %v847, %v1040
      %v1073 = vadd.f32 %v848, %v1041
      %v1074 = vadd.f32 %v849, %v1042
      %v1075 = vadd.f32 %v850, %v1043
      %v1076 = vadd.f32 %v851, %v1044
      %v1077 = vadd.f32 %v852, %v1045
      %v1078 = vadd.f32 %v853, %v1046
      %v1079 = vadd.f32 %v854, %v1047
      %v1080 = vadd.f32 %v855, %v1048
      %v1081 = vadd.f32 %v856, %v1049
      %v1082 = vadd.f32 %v857, %v1050
      %v1083 = vadd.f32 %v858, %v1051
      %v1084 = vadd.f32 %v859, %v1052
      %v1085 = vadd.f32 %v860, %v1053
      %v1086 = vadd.f32 %v861, %v1054
      %v1087 = vadd.f32 %v862, %v1055
      %v1088 = vadd.f32 %v863, %v1056
      %v1089 = vadd.f32 %v864, %v1057
      %v1090 = vadd.f32 %v865, %v1058
      %v1091 = vadd.f32 %v866, %v1059
      %v1092 = vadd.f32 %v867, %v1060
      %v1093 = vadd.f32 %v868, %v1061
      %v1094 = vadd.f32 %v869, %v1062
      %v1095 = vadd.f32 %v870, %v1063
      %v1096 = vadd.f32 %v871, %v1064
      %v1097 = vadd.f32 %v872, %v1065
      %v1098 = vadd.f32 %v873, %v1066
      %v1099 = vadd.f32 %v874, %v1067
      %v1100 = vadd.f32 %v875, %v1068
      %v1101 = vadd.f32 %v876, %v1069
      %v1102 = vadd.f32 %v877, %v1070
      %vm1103 = vcmp.lt.f32.partialorder %v1071, 0.0625
      %vm1104 = vcmp.lt.f32.partialorder %v1072, 0.0625
      %vm1105 = vcmp.lt.f32.partialorder %v1073, 0.0625
      %vm1106 = vcmp.lt.f32.partialorder %v1074, 0.0625
      %vm1107 = vcmp.lt.f32.partialorder %v1075, 0.0625
      %vm1108 = vcmp.lt.f32.partialorder %v1076, 0.0625
      %vm1109 = vcmp.lt.f32.partialorder %v1077, 0.0625
      %vm1110 = vcmp.lt.f32.partialorder %v1078, 0.0625
      %vm1111 = vcmp.lt.f32.partialorder %v1079, 0.0625
      %vm1112 = vcmp.lt.f32.partialorder %v1080, 0.0625
      %vm1113 = vcmp.lt.f32.partialorder %v1081, 0.0625
      %vm1114 = vcmp.lt.f32.partialorder %v1082, 0.0625
      %vm1115 = vcmp.lt.f32.partialorder %v1083, 0.0625
      %vm1116 = vcmp.lt.f32.partialorder %v1084, 0.0625
      %vm1117 = vcmp.lt.f32.partialorder %v1085, 0.0625
      %vm1118 = vcmp.lt.f32.partialorder %v1086, 0.0625
      %vm1119 = vcmp.lt.f32.partialorder %v1087, 0.0625
      %vm1120 = vcmp.lt.f32.partialorder %v1088, 0.0625
      %vm1121 = vcmp.lt.f32.partialorder %v1089, 0.0625
      %vm1122 = vcmp.lt.f32.partialorder %v1090, 0.0625
      %vm1123 = vcmp.lt.f32.partialorder %v1091, 0.0625
      %vm1124 = vcmp.lt.f32.partialorder %v1092, 0.0625
      %vm1125 = vcmp.lt.f32.partialorder %v1093, 0.0625
      %vm1126 = vcmp.lt.f32.partialorder %v1094, 0.0625
      %vm1127 = vcmp.lt.f32.partialorder %v1095, 0.0625
      %vm1128 = vcmp.lt.f32.partialorder %v1096, 0.0625
      %vm1129 = vcmp.lt.f32.partialorder %v1097, 0.0625
      %vm1130 = vcmp.lt.f32.partialorder %v1098, 0.0625
      %vm1131 = vcmp.lt.f32.partialorder %v1099, 0.0625
      %vm1132 = vcmp.lt.f32.partialorder %v1100, 0.0625
      %vm1133 = vcmp.lt.f32.partialorder %v1101, 0.0625
      %vm1134 = vcmp.lt.f32.partialorder %v1102, 0.0625
      %v1135 = vsel %vm1103, 1, 0
      %v1136 = vsel %vm1104, 1, 0
      %v1137 = vsel %vm1105, 1, 0
      %v1138 = vsel %vm1106, 1, 0
      %v1139 = vsel %vm1107, 1, 0
      %v1140 = vsel %vm1108, 1, 0
      %v1141 = vsel %vm1109, 1, 0
      %v1142 = vsel %vm1110, 1, 0
      %v1143 = vsel %vm1111, 1, 0
      %v1144 = vsel %vm1112, 1, 0
      %v1145 = vsel %vm1113, 1, 0
      %v1146 = vsel %vm1114, 1, 0
      %v1147 = vsel %vm1115, 1, 0
      %v1148 = vsel %vm1116, 1, 0
      %v1149 = vsel %vm1117, 1, 0
      %v1150 = vsel %vm1118, 1, 0
      %v1151 = vsel %vm1119, 1, 0
      %v1152 = vsel %vm1120, 1, 0
      %v1153 = vsel %vm1121, 1, 0
      %v1154 = vsel %vm1122, 1, 0
      %v1155 = vsel %vm1123, 1, 0
      %v1156 = vsel %vm1124, 1, 0
      %v1157 = vsel %vm1125, 1, 0
      %v1158 = vsel %vm1126, 1, 0
      %v1159 = vsel %vm1127, 1, 0
      %v1160 = vsel %vm1128, 1, 0
      %v1161 = vsel %vm1129, 1, 0
      %v1162 = vsel %vm1130, 1, 0
      %v1163 = vsel %vm1131, 1, 0
      %v1164 = vsel %vm1132, 1, 0
      %v1165 = vsel %vm1133, 1, 0
      %v1166 = vsel %vm1134, 1, 0
      %v1167 = vcvt.s32.f32 %v1135
      %v1168 = vcvt.s32.f32 %v1136
      %v1169 = vcvt.s32.f32 %v1137
      %v1170 = vcvt.s32.f32 %v1138
      %v1171 = vcvt.s32.f32 %v1139
      %v1172 = vcvt.s32.f32 %v1140
      %v1173 = vcvt.s32.f32 %v1141
      %v1174 = vcvt.s32.f32 %v1142
      %v1175 = vcvt.s32.f32 %v1143
      %v1176 = vcvt.s32.f32 %v1144
      %v1177 = vcvt.s32.f32 %v1145
      %v1178 = vcvt.s32.f32 %v1146
      %v1179 = vcvt.s32.f32 %v1147
      %v1180 = vcvt.s32.f32 %v1148
      %v1181 = vcvt.s32.f32 %v1149
      %v1182 = vcvt.s32.f32 %v1150
      %v1183 = vcvt.s32.f32 %v1151
      %v1184 = vcvt.s32.f32 %v1152
      %v1185 = vcvt.s32.f32 %v1153
      %v1186 = vcvt.s32.f32 %v1154
      %v1187 = vcvt.s32.f32 %v1155
      %v1188 = vcvt.s32.f32 %v1156
      %v1189 = vcvt.s32.f32 %v1157
      %v1190 = vcvt.s32.f32 %v1158
      %v1191 = vcvt.s32.f32 %v1159
      %v1192 = vcvt.s32.f32 %v1160
      %v1193 = vcvt.s32.f32 %v1161
      %v1194 = vcvt.s32.f32 %v1162
      %v1195 = vcvt.s32.f32 %v1163
      %v1196 = vcvt.s32.f32 %v1164
      %v1197 = vcvt.s32.f32 %v1165
      %v1198 = vcvt.s32.f32 %v1166
      %v1199 = vpack.c.bf16 %v1168, %v1167
      %v1200 = vpack.c.bf16 %v1170, %v1169
      %v1201 = vpack.c.bf16 %v1172, %v1171
      %v1202 = vpack.c.bf16 %v1174, %v1173
      %v1203 = vpack.c.bf16 %v1176, %v1175
      %v1204 = vpack.c.bf16 %v1178, %v1177
      %v1205 = vpack.c.bf16 %v1180, %v1179
      %v1206 = vpack.c.bf16 %v1182, %v1181
      %v1207 = vpack.c.bf16 %v1184, %v1183
      %v1208 = vpack.c.bf16 %v1186, %v1185
      %v1209 = vpack.c.bf16 %v1188, %v1187
      %v1210 = vpack.c.bf16 %v1190, %v1189
      %v1211 = vpack.c.bf16 %v1192, %v1191
      %v1212 = vpack.c.bf16 %v1194, %v1193
      %v1213 = vpack.c.bf16 %v1196, %v1195
      %v1214 = vpack.c.bf16 %v1198, %v1197
      %v1247 = vunpack.c.l.b16 %v362
      %v1248 = vunpack.c.h.b16 %v362
      %v1249 = vunpack.c.l.b16 %v363
      %v1250 = vunpack.c.h.b16 %v363
      %v1251 = vunpack.c.l.b16 %v364
      %v1252 = vunpack.c.h.b16 %v364
      %v1253 = vunpack.c.l.b16 %v365
      %v1254 = vunpack.c.h.b16 %v365
      %v1255 = vunpack.c.l.b16 %v366
      %v1256 = vunpack.c.h.b16 %v366
      %v1257 = vunpack.c.l.b16 %v367
      %v1258 = vunpack.c.h.b16 %v367
      %v1259 = vunpack.c.l.b16 %v368
      %v1260 = vunpack.c.h.b16 %v368
      %v1261 = vunpack.c.l.b16 %v369
      %v1262 = vunpack.c.h.b16 %v369
      %v1263 = vunpack.c.l.b16 %v370
      %v1264 = vunpack.c.h.b16 %v370
      %v1265 = vunpack.c.l.b16 %v371
      %v1266 = vunpack.c.h.b16 %v371
      %v1267 = vunpack.c.l.b16 %v372
      %v1268 = vunpack.c.h.b16 %v372
      %v1269 = vunpack.c.l.b16 %v373
      %v1270 = vunpack.c.h.b16 %v373
      %v1271 = vunpack.c.l.b16 %v374
      %v1272 = vunpack.c.h.b16 %v374
      %v1273 = vunpack.c.l.b16 %v375
      %v1274 = vunpack.c.h.b16 %v375
      %v1275 = vunpack.c.l.b16 %v376
      %v1276 = vunpack.c.h.b16 %v376
      %v1277 = vunpack.c.l.b16 %v377
      %v1278 = vunpack.c.h.b16 %v377
      %v1279 = vunpack.c.l.b16 %v378
      %v1280 = vunpack.c.h.b16 %v378
      %v1281 = vunpack.c.l.b16 %v379
      %v1282 = vunpack.c.h.b16 %v379
      %v1283 = vunpack.c.l.b16 %v380
      %v1284 = vunpack.c.h.b16 %v380
      %v1285 = vunpack.c.l.b16 %v381
      %v1286 = vunpack.c.h.b16 %v381
      %v1287 = vunpack.c.l.b16 %v382
      %v1288 = vunpack.c.h.b16 %v382
      %v1289 = vunpack.c.l.b16 %v383
      %v1290 = vunpack.c.h.b16 %v383
      %v1291 = vunpack.c.l.b16 %v384
      %v1292 = vunpack.c.h.b16 %v384
      %v1293 = vunpack.c.l.b16 %v385
      %v1294 = vunpack.c.h.b16 %v385
      %v1295 = vunpack.c.l.b16 %v386
      %v1296 = vunpack.c.h.b16 %v386
      %v1297 = vunpack.c.l.b16 %v387
      %v1298 = vunpack.c.h.b16 %v387
      %v1299 = vunpack.c.l.b16 %v388
      %v1300 = vunpack.c.h.b16 %v388
      %v1301 = vunpack.c.l.b16 %v389
      %v1302 = vunpack.c.h.b16 %v389
      %v1303 = vunpack.c.l.b16 %v390
      %v1304 = vunpack.c.h.b16 %v390
      %v1305 = vunpack.c.l.b16 %v391
      %v1306 = vunpack.c.h.b16 %v391
      %v1307 = vunpack.c.l.b16 %v392
      %v1308 = vunpack.c.h.b16 %v392
      %v1309 = vunpack.c.l.b16 %v393
      %v1310 = vunpack.c.h.b16 %v393
      %v1311 = vpack.c.b16 %v1249, %v1247
      %v1312 = vpack.c.b16 %v1250, %v1248
      %v1313 = vpack.c.b16 %v1253, %v1251
      %v1314 = vpack.c.b16 %v1254, %v1252
      %v1315 = vpack.c.b16 %v1257, %v1255
      %v1316 = vpack.c.b16 %v1258, %v1256
      %v1317 = vpack.c.b16 %v1261, %v1259
      %v1318 = vpack.c.b16 %v1262, %v1260
      %v1319 = vpack.c.b16 %v1265, %v1263
      %v1320 = vpack.c.b16 %v1266, %v1264
      %v1321 = vpack.c.b16 %v1269, %v1267
      %v1322 = vpack.c.b16 %v1270, %v1268
      %v1323 = vpack.c.b16 %v1273, %v1271
      %v1324 = vpack.c.b16 %v1274, %v1272
      %v1325 = vpack.c.b16 %v1277, %v1275
      %v1326 = vpack.c.b16 %v1278, %v1276
      %v1327 = vpack.c.b16 %v1281, %v1279
      %v1328 = vpack.c.b16 %v1282, %v1280
      %v1329 = vpack.c.b16 %v1285, %v1283
      %v1330 = vpack.c.b16 %v1286, %v1284
      %v1331 = vpack.c.b16 %v1289, %v1287
      %v1332 = vpack.c.b16 %v1290, %v1288
      %v1333 = vpack.c.b16 %v1293, %v1291
      %v1334 = vpack.c.b16 %v1294, %v1292
      %v1335 = vpack.c.b16 %v1297, %v1295
      %v1336 = vpack.c.b16 %v1298, %v1296
      %v1337 = vpack.c.b16 %v1301, %v1299
      %v1338 = vpack.c.b16 %v1302, %v1300
      %v1339 = vpack.c.b16 %v1305, %v1303
      %v1340 = vpack.c.b16 %v1306, %v1304
      %v1341 = vpack.c.b16 %v1309, %v1307
      %v1342 = vpack.c.b16 %v1310, %v1308
      %1375 = vmatpush.bf16.msra.mxu0 %v1206
      %1376 = vmatpush.bf16.msra.mxu0 %v1205
      %1377 = vmatpush.bf16.msra.mxu0 %v1204
      %1378 = vmatpush.bf16.msra.mxu0 %v1203
      %1379 = vmatpush.bf16.msra.mxu0 %v1202
      %1380 = vmatpush.bf16.msra.mxu0 %v1201
      %1381 = vmatpush.bf16.msra.mxu0 %v1200
      %1382 = vmatpush.bf16.msra.mxu0 %v1199
      %1383 = vmatmul.bf16.gmra.mxu0 %v1311
      %v1384 = vpop.f32.mrf.mxu0
      %v1385 = vadd.f32 0.0, %v1384
      %v1386 = vpop.f32.mrf.mxu0
      %v1387 = vadd.f32 0.0, %v1386
      %1388 = vmatmul.bf16.gmra.mxu0 %v1313
      %v1389 = vpop.f32.mrf.mxu0
      %v1390 = vadd.f32 0.0, %v1389
      %v1391 = vpop.f32.mrf.mxu0
      %v1392 = vadd.f32 0.0, %v1391
      %1393 = vmatmul.bf16.gmra.mxu0 %v1315
      %v1394 = vpop.f32.mrf.mxu0
      %v1395 = vadd.f32 0.0, %v1394
      %v1396 = vpop.f32.mrf.mxu0
      %v1397 = vadd.f32 0.0, %v1396
      %1398 = vmatmul.bf16.gmra.mxu0 %v1317
      %v1399 = vpop.f32.mrf.mxu0
      %v1400 = vadd.f32 0.0, %v1399
      %v1401 = vpop.f32.mrf.mxu0
      %v1402 = vadd.f32 0.0, %v1401
      %1403 = vmatmul.bf16.gmra.mxu0 %v1319
      %v1404 = vpop.f32.mrf.mxu0
      %v1405 = vadd.f32 0.0, %v1404
      %v1406 = vpop.f32.mrf.mxu0
      %v1407 = vadd.f32 0.0, %v1406
      %1408 = vmatmul.bf16.gmra.mxu0 %v1321
      %v1409 = vpop.f32.mrf.mxu0
      %v1410 = vadd.f32 0.0, %v1409
      %v1411 = vpop.f32.mrf.mxu0
      %v1412 = vadd.f32 0.0, %v1411
      %1413 = vmatmul.bf16.gmra.mxu0 %v1323
      %v1414 = vpop.f32.mrf.mxu0
      %v1415 = vadd.f32 0.0, %v1414
      %v1416 = vpop.f32.mrf.mxu0
      %v1417 = vadd.f32 0.0, %v1416
      %1418 = vmatmul.bf16.gmra.mxu0 %v1325
      %v1419 = vpop.f32.mrf.mxu0
      %v1420 = vadd.f32 0.0, %v1419
      %v1421 = vpop.f32.mrf.mxu0
      %v1422 = vadd.f32 0.0, %v1421
      %1423 = vmatmul.bf16.gmra.mxu0 %v1327
      %v1424 = vpop.f32.mrf.mxu0
      %v1425 = vadd.f32 0.0, %v1424
      %v1426 = vpop.f32.mrf.mxu0
      %v1427 = vadd.f32 0.0, %v1426
      %1428 = vmatmul.bf16.gmra.mxu0 %v1329
      %v1429 = vpop.f32.mrf.mxu0
      %v1430 = vadd.f32 0.0, %v1429
      %v1431 = vpop.f32.mrf.mxu0
      %v1432 = vadd.f32 0.0, %v1431
      %1433 = vmatmul.bf16.gmra.mxu0 %v1331
      %v1434 = vpop.f32.mrf.mxu0
      %v1435 = vadd.f32 0.0, %v1434
      %v1436 = vpop.f32.mrf.mxu0
      %v1437 = vadd.f32 0.0, %v1436
      %1438 = vmatmul.bf16.gmra.mxu0 %v1333
      %v1439 = vpop.f32.mrf.mxu0
      %v1440 = vadd.f32 0.0, %v1439
      %v1441 = vpop.f32.mrf.mxu0
      %v1442 = vadd.f32 0.0, %v1441
      %1443 = vmatmul.bf16.gmra.mxu0 %v1335
      %v1444 = vpop.f32.mrf.mxu0
      %v1445 = vadd.f32 0.0, %v1444
      %v1446 = vpop.f32.mrf.mxu0
      %v1447 = vadd.f32 0.0, %v1446
      %1448 = vmatmul.bf16.gmra.mxu0 %v1337
      %v1449 = vpop.f32.mrf.mxu0
      %v1450 = vadd.f32 0.0, %v1449
      %v1451 = vpop.f32.mrf.mxu0
      %v1452 = vadd.f32 0.0, %v1451
      %1453 = vmatmul.bf16.gmra.mxu0 %v1339
      %v1454 = vpop.f32.mrf.mxu0
      %v1455 = vadd.f32 0.0, %v1454
      %v1456 = vpop.f32.mrf.mxu0
      %v1457 = vadd.f32 0.0, %v1456
      %1458 = vmatmul.bf16.gmra.mxu0 %v1341
      %v1459 = vpop.f32.mrf.mxu0
      %v1460 = vadd.f32 0.0, %v1459
      %v1461 = vpop.f32.mrf.mxu0
      %v1462 = vadd.f32 0.0, %v1461
      %1463 = vdwg.mxu0
      %1464 = vmatpush.bf16.msra.mxu0 %v1214
      %1465 = vmatpush.bf16.msra.mxu0 %v1213
      %1466 = vmatpush.bf16.msra.mxu0 %v1212
      %1467 = vmatpush.bf16.msra.mxu0 %v1211
      %1468 = vmatpush.bf16.msra.mxu0 %v1210
      %1469 = vmatpush.bf16.msra.mxu0 %v1209
      %1470 = vmatpush.bf16.msra.mxu0 %v1208
      %1471 = vmatpush.bf16.msra.mxu0 %v1207
      %1472 = vmatmul.bf16.gmra.mxu0 %v1312
      %v1473 = vpop.f32.mrf.mxu0
      %v1474 = vadd.f32 %v1385, %v1473
      %v1475 = vpop.f32.mrf.mxu0
      %v1476 = vadd.f32 %v1387, %v1475
      %1477 = vmatmul.bf16.gmra.mxu0 %v1314
      %v1478 = vpop.f32.mrf.mxu0
      %v1479 = vadd.f32 %v1390, %v1478
      %v1480 = vpop.f32.mrf.mxu0
      %v1481 = vadd.f32 %v1392, %v1480
      %1482 = vmatmul.bf16.gmra.mxu0 %v1316
      %v1483 = vpop.f32.mrf.mxu0
      %v1484 = vadd.f32 %v1395, %v1483
      %v1485 = vpop.f32.mrf.mxu0
      %v1486 = vadd.f32 %v1397, %v1485
      %1487 = vmatmul.bf16.gmra.mxu0 %v1318
      %v1488 = vpop.f32.mrf.mxu0
      %v1489 = vadd.f32 %v1400, %v1488
      %v1490 = vpop.f32.mrf.mxu0
      %v1491 = vadd.f32 %v1402, %v1490
      %1492 = vmatmul.bf16.gmra.mxu0 %v1320
      %v1493 = vpop.f32.mrf.mxu0
      %v1494 = vadd.f32 %v1405, %v1493
      %v1495 = vpop.f32.mrf.mxu0
      %v1496 = vadd.f32 %v1407, %v1495
      %1497 = vmatmul.bf16.gmra.mxu0 %v1322
      %v1498 = vpop.f32.mrf.mxu0
      %v1499 = vadd.f32 %v1410, %v1498
      %v1500 = vpop.f32.mrf.mxu0
      %v1501 = vadd.f32 %v1412, %v1500
      %1502 = vmatmul.bf16.gmra.mxu0 %v1324
      %v1503 = vpop.f32.mrf.mxu0
      %v1504 = vadd.f32 %v1415, %v1503
      %v1505 = vpop.f32.mrf.mxu0
      %v1506 = vadd.f32 %v1417, %v1505
      %1507 = vmatmul.bf16.gmra.mxu0 %v1326
      %v1508 = vpop.f32.mrf.mxu0
      %v1509 = vadd.f32 %v1420, %v1508
      %v1510 = vpop.f32.mrf.mxu0
      %v1511 = vadd.f32 %v1422, %v1510
      %1512 = vmatmul.bf16.gmra.mxu0 %v1328
      %v1513 = vpop.f32.mrf.mxu0
      %v1514 = vadd.f32 %v1425, %v1513
      %v1515 = vpop.f32.mrf.mxu0
      %v1516 = vadd.f32 %v1427, %v1515
      %1517 = vmatmul.bf16.gmra.mxu0 %v1330
      %v1518 = vpop.f32.mrf.mxu0
      %v1519 = vadd.f32 %v1430, %v1518
      %v1520 = vpop.f32.mrf.mxu0
      %v1521 = vadd.f32 %v1432, %v1520
      %1522 = vmatmul.bf16.gmra.mxu0 %v1332
      %v1523 = vpop.f32.mrf.mxu0
      %v1524 = vadd.f32 %v1435, %v1523
      %v1525 = vpop.f32.mrf.mxu0
      %v1526 = vadd.f32 %v1437, %v1525
      %1527 = vmatmul.bf16.gmra.mxu0 %v1334
      %v1528 = vpop.f32.mrf.mxu0
      %v1529 = vadd.f32 %v1440, %v1528
      %v1530 = vpop.f32.mrf.mxu0
      %v1531 = vadd.f32 %v1442, %v1530
      %1532 = vmatmul.bf16.gmra.mxu0 %v1336
      %v1533 = vpop.f32.mrf.mxu0
      %v1534 = vadd.f32 %v1445, %v1533
      %v1535 = vpop.f32.mrf.mxu0
      %v1536 = vadd.f32 %v1447, %v1535
      %1537 = vmatmul.bf16.gmra.mxu0 %v1338
      %v1538 = vpop.f32.mrf.mxu0
      %v1539 = vadd.f32 %v1450, %v1538
      %v1540 = vpop.f32.mrf.mxu0
      %v1541 = vadd.f32 %v1452, %v1540
      %1542 = vmatmul.bf16.gmra.mxu0 %v1340
      %v1543 = vpop.f32.mrf.mxu0
      %v1544 = vadd.f32 %v1455, %v1543
      %v1545 = vpop.f32.mrf.mxu0
      %v1546 = vadd.f32 %v1457, %v1545
      %1547 = vmatmul.bf16.gmra.mxu0 %v1342
      %v1548 = vpop.f32.mrf.mxu0
      %v1549 = vadd.f32 %v1460, %v1548
      %v1550 = vpop.f32.mrf.mxu0
      %v1551 = vadd.f32 %v1462, %v1550
      %1552 = vdwg.mxu0
      %v1553 = vld [vmem:[#allocation3] sm:$0x1]
      %v1555 = vperm.slane %v1553, 0
      %v1557 = vadd.f32 %v1555, %v1474
      %v1558 = vadd.f32 %v1555, %v1476
      %v1559 = vadd.f32 %v1555, %v1479
      %v1560 = vadd.f32 %v1555, %v1481
      %v1561 = vadd.f32 %v1555, %v1484
      %v1562 = vadd.f32 %v1555, %v1486
      %v1563 = vadd.f32 %v1555, %v1489
      %v1564 = vadd.f32 %v1555, %v1491
      %v1565 = vadd.f32 %v1555, %v1494
      %v1566 = vadd.f32 %v1555, %v1496
      %v1567 = vadd.f32 %v1555, %v1499
      %v1568 = vadd.f32 %v1555, %v1501
      %v1569 = vadd.f32 %v1555, %v1504
      %v1570 = vadd.f32 %v1555, %v1506
      %v1571 = vadd.f32 %v1555, %v1509
      %v1572 = vadd.f32 %v1555, %v1511
      %v1573 = vadd.f32 %v1555, %v1514
      %v1574 = vadd.f32 %v1555, %v1516
      %v1575 = vadd.f32 %v1555, %v1519
      %v1576 = vadd.f32 %v1555, %v1521
      %v1577 = vadd.f32 %v1555, %v1524
      %v1578 = vadd.f32 %v1555, %v1526
      %v1579 = vadd.f32 %v1555, %v1529
      %v1580 = vadd.f32 %v1555, %v1531
      %v1581 = vadd.f32 %v1555, %v1534
      %v1582 = vadd.f32 %v1555, %v1536
      %v1583 = vadd.f32 %v1555, %v1539
      %v1584 = vadd.f32 %v1555, %v1541
      %v1585 = vadd.f32 %v1555, %v1544
      %v1586 = vadd.f32 %v1555, %v1546
      %v1587 = vadd.f32 %v1555, %v1549
      %v1588 = vadd.f32 %v1555, %v1551
      %v1589 = vsub.f32 %v1557, 1.0
      %v1590 = vsub.f32 %v1558, 1.0
      %v1591 = vsub.f32 %v1559, 1.0
      %v1592 = vsub.f32 %v1560, 1.0
      %v1593 = vsub.f32 %v1561, 1.0
      %v1594 = vsub.f32 %v1562, 1.0
      %v1595 = vsub.f32 %v1563, 1.0
      %v1596 = vsub.f32 %v1564, 1.0
      %v1597 = vsub.f32 %v1565, 1.0
      %v1598 = vsub.f32 %v1566, 1.0
      %v1599 = vsub.f32 %v1567, 1.0
      %v1600 = vsub.f32 %v1568, 1.0
      %v1601 = vsub.f32 %v1569, 1.0
      %v1602 = vsub.f32 %v1570, 1.0
      %v1603 = vsub.f32 %v1571, 1.0
      %v1604 = vsub.f32 %v1572, 1.0
      %v1605 = vsub.f32 %v1573, 1.0
      %v1606 = vsub.f32 %v1574, 1.0
      %v1607 = vsub.f32 %v1575, 1.0
      %v1608 = vsub.f32 %v1576, 1.0
      %v1609 = vsub.f32 %v1577, 1.0
      %v1610 = vsub.f32 %v1578, 1.0
      %v1611 = vsub.f32 %v1579, 1.0
      %v1612 = vsub.f32 %v1580, 1.0
      %v1613 = vsub.f32 %v1581, 1.0
      %v1614 = vsub.f32 %v1582, 1.0
      %v1615 = vsub.f32 %v1583, 1.0
      %v1616 = vsub.f32 %v1584, 1.0
      %v1617 = vsub.f32 %v1585, 1.0
      %v1618 = vsub.f32 %v1586, 1.0
      %v1619 = vsub.f32 %v1587, 1.0
      %v1620 = vsub.f32 %v1588, 1.0
      %v1621 = vsel %vm1103, %v1589, -1.0
      %v1622 = vsel %vm1104, %v1590, -1.0
      %v1623 = vsel %vm1105, %v1591, -1.0
      %v1624 = vsel %vm1106, %v1592, -1.0
      %v1625 = vsel %vm1107, %v1593, -1.0
      %v1626 = vsel %vm1108, %v1594, -1.0
      %v1627 = vsel %vm1109, %v1595, -1.0
      %v1628 = vsel %vm1110, %v1596, -1.0
      %v1629 = vsel %vm1111, %v1597, -1.0
      %v1630 = vsel %vm1112, %v1598, -1.0
      %v1631 = vsel %vm1113, %v1599, -1.0
      %v1632 = vsel %vm1114, %v1600, -1.0
      %v1633 = vsel %vm1115, %v1601, -1.0
      %v1634 = vsel %vm1116, %v1602, -1.0
      %v1635 = vsel %vm1117, %v1603, -1.0
      %v1636 = vsel %vm1118, %v1604, -1.0
      %v1637 = vsel %vm1119, %v1605, -1.0
      %v1638 = vsel %vm1120, %v1606, -1.0
      %v1639 = vsel %vm1121, %v1607, -1.0
      %v1640 = vsel %vm1122, %v1608, -1.0
      %v1641 = vsel %vm1123, %v1609, -1.0
      %v1642 = vsel %vm1124, %v1610, -1.0
      %v1643 = vsel %vm1125, %v1611, -1.0
      %v1644 = vsel %vm1126, %v1612, -1.0
      %v1645 = vsel %vm1127, %v1613, -1.0
      %v1646 = vsel %vm1128, %v1614, -1.0
      %v1647 = vsel %vm1129, %v1615, -1.0
      %v1648 = vsel %vm1130, %v1616, -1.0
      %v1649 = vsel %vm1131, %v1617, -1.0
      %v1650 = vsel %vm1132, %v1618, -1.0
      %v1651 = vsel %vm1133, %v1619, -1.0
      %v1652 = vsel %vm1134, %v1620, -1.0
      %1654 = vst [vmem:[#allocation1] sm:$0xff] %v1551
      %s1655 = scalar_lea.vmem [#allocation1], 7
      %v1656 = vld [vmem:[%s1655] ss:$9 sm:$0xff]
      %v1658 = vadd.f32 %v1553, %v1656
      %1659 = vst [vmem:[#allocation3] sm:$0x1] %v1658
      %vm1660 = vcmp.eq.f32.partialorder %v1621, 0.0
      %vm1661 = vcmp.eq.f32.partialorder %v1622, 0.0
      %vm1662 = vcmp.eq.f32.partialorder %v1623, 0.0
      %vm1663 = vcmp.eq.f32.partialorder %v1624, 0.0
      %vm1664 = vcmp.eq.f32.partialorder %v1625, 0.0
      %vm1665 = vcmp.eq.f32.partialorder %v1626, 0.0
      %vm1666 = vcmp.eq.f32.partialorder %v1627, 0.0
      %vm1667 = vcmp.eq.f32.partialorder %v1628, 0.0
      %vm1668 = vcmp.eq.f32.partialorder %v1629, 0.0
      %vm1669 = vcmp.eq.f32.partialorder %v1630, 0.0
      %vm1670 = vcmp.eq.f32.partialorder %v1631, 0.0
      %vm1671 = vcmp.eq.f32.partialorder %v1632, 0.0
      %vm1672 = vcmp.eq.f32.partialorder %v1633, 0.0
      %vm1673 = vcmp.eq.f32.partialorder %v1634, 0.0
      %vm1674 = vcmp.eq.f32.partialorder %v1635, 0.0
      %vm1675 = vcmp.eq.f32.partialorder %v1636, 0.0
      %vm1676 = vcmp.eq.f32.partialorder %v1637, 0.0
      %vm1677 = vcmp.eq.f32.partialorder %v1638, 0.0
      %vm1678 = vcmp.eq.f32.partialorder %v1639, 0.0
      %vm1679 = vcmp.eq.f32.partialorder %v1640, 0.0
      %vm1680 = vcmp.eq.f32.partialorder %v1641, 0.0
      %vm1681 = vcmp.eq.f32.partialorder %v1642, 0.0
      %vm1682 = vcmp.eq.f32.partialorder %v1643, 0.0
      %vm1683 = vcmp.eq.f32.partialorder %v1644, 0.0
      %vm1684 = vcmp.eq.f32.partialorder %v1645, 0.0
      %vm1685 = vcmp.eq.f32.partialorder %v1646, 0.0
      %vm1686 = vcmp.eq.f32.partialorder %v1647, 0.0
      %vm1687 = vcmp.eq.f32.partialorder %v1648, 0.0
      %vm1688 = vcmp.eq.f32.partialorder %v1649, 0.0
      %vm1689 = vcmp.eq.f32.partialorder %v1650, 0.0
      %vm1690 = vcmp.eq.f32.partialorder %v1651, 0.0
      %vm1691 = vcmp.eq.f32.partialorder %v1652, 0.0
      %v1692 = vsel %vm1660, 1, 0
      %v1693 = vsel %vm1661, 1, 0
      %v1694 = vsel %vm1662, 1, 0
      %v1695 = vsel %vm1663, 1, 0
      %v1696 = vsel %vm1664, 1, 0
      %v1697 = vsel %vm1665, 1, 0
      %v1698 = vsel %vm1666, 1, 0
      %v1699 = vsel %vm1667, 1, 0
      %v1700 = vsel %vm1668, 1, 0
      %v1701 = vsel %vm1669, 1, 0
      %v1702 = vsel %vm1670, 1, 0
      %v1703 = vsel %vm1671, 1, 0
      %v1704 = vsel %vm1672, 1, 0
      %v1705 = vsel %vm1673, 1, 0
      %v1706 = vsel %vm1674, 1, 0
      %v1707 = vsel %vm1675, 1, 0
      %v1708 = vsel %vm1676, 1, 0
      %v1709 = vsel %vm1677, 1, 0
      %v1710 = vsel %vm1678, 1, 0
      %v1711 = vsel %vm1679, 1, 0
      %v1712 = vsel %vm1680, 1, 0
      %v1713 = vsel %vm1681, 1, 0
      %v1714 = vsel %vm1682, 1, 0
      %v1715 = vsel %vm1683, 1, 0
      %v1716 = vsel %vm1684, 1, 0
      %v1717 = vsel %vm1685, 1, 0
      %v1718 = vsel %vm1686, 1, 0
      %v1719 = vsel %vm1687, 1, 0
      %v1720 = vsel %vm1688, 1, 0
      %v1721 = vsel %vm1689, 1, 0
      %v1722 = vsel %vm1690, 1, 0
      %v1723 = vsel %vm1691, 1, 0
      %v1724 = vcvt.s32.f32 %v1692
      %v1725 = vcvt.s32.f32 %v1693
      %v1726 = vcvt.s32.f32 %v1694
      %v1727 = vcvt.s32.f32 %v1695
      %v1728 = vcvt.s32.f32 %v1696
      %v1729 = vcvt.s32.f32 %v1697
      %v1730 = vcvt.s32.f32 %v1698
      %v1731 = vcvt.s32.f32 %v1699
      %v1732 = vcvt.s32.f32 %v1700
      %v1733 = vcvt.s32.f32 %v1701
      %v1734 = vcvt.s32.f32 %v1702
      %v1735 = vcvt.s32.f32 %v1703
      %v1736 = vcvt.s32.f32 %v1704
      %v1737 = vcvt.s32.f32 %v1705
      %v1738 = vcvt.s32.f32 %v1706
      %v1739 = vcvt.s32.f32 %v1707
      %v1740 = vcvt.s32.f32 %v1708
      %v1741 = vcvt.s32.f32 %v1709
      %v1742 = vcvt.s32.f32 %v1710
      %v1743 = vcvt.s32.f32 %v1711
      %v1744 = vcvt.s32.f32 %v1712
      %v1745 = vcvt.s32.f32 %v1713
      %v1746 = vcvt.s32.f32 %v1714
      %v1747 = vcvt.s32.f32 %v1715
      %v1748 = vcvt.s32.f32 %v1716
      %v1749 = vcvt.s32.f32 %v1717
      %v1750 = vcvt.s32.f32 %v1718
      %v1751 = vcvt.s32.f32 %v1719
      %v1752 = vcvt.s32.f32 %v1720
      %v1753 = vcvt.s32.f32 %v1721
      %v1754 = vcvt.s32.f32 %v1722
      %v1755 = vcvt.s32.f32 %v1723
      %v1756 = vpack.c.bf16 %v1724, %v1724
      %v1757 = vpack.c.bf16 %v1725, %v1725
      %v1758 = vpack.c.bf16 %v1726, %v1726
      %v1759 = vpack.c.bf16 %v1727, %v1727
      %v1760 = vpack.c.bf16 %v1728, %v1728
      %v1761 = vpack.c.bf16 %v1729, %v1729
      %v1762 = vpack.c.bf16 %v1730, %v1730
      %v1763 = vpack.c.bf16 %v1731, %v1731
      %v1764 = vpack.c.bf16 %v1732, %v1732
      %v1765 = vpack.c.bf16 %v1733, %v1733
      %v1766 = vpack.c.bf16 %v1734, %v1734
      %v1767 = vpack.c.bf16 %v1735, %v1735
      %v1768 = vpack.c.bf16 %v1736, %v1736
      %v1769 = vpack.c.bf16 %v1737, %v1737
      %v1770 = vpack.c.bf16 %v1738, %v1738
      %v1771 = vpack.c.bf16 %v1739, %v1739
      %v1772 = vpack.c.bf16 %v1740, %v1740
      %v1773 = vpack.c.bf16 %v1741, %v1741
      %v1774 = vpack.c.bf16 %v1742, %v1742
      %v1775 = vpack.c.bf16 %v1743, %v1743
      %v1776 = vpack.c.bf16 %v1744, %v1744
      %v1777 = vpack.c.bf16 %v1745, %v1745
      %v1778 = vpack.c.bf16 %v1746, %v1746
      %v1779 = vpack.c.bf16 %v1747, %v1747
      %v1780 = vpack.c.bf16 %v1748, %v1748
      %v1781 = vpack.c.bf16 %v1749, %v1749
      %v1782 = vpack.c.bf16 %v1750, %v1750
      %v1783 = vpack.c.bf16 %v1751, %v1751
      %v1784 = vpack.c.bf16 %v1752, %v1752
      %v1785 = vpack.c.bf16 %v1753, %v1753
      %v1786 = vpack.c.bf16 %v1754, %v1754
      %v1787 = vpack.c.bf16 %v1755, %v1755
      %vm1788 = vcmp.eq.f32.partialorder %v1621, 1.0
      %vm1789 = vcmp.eq.f32.partialorder %v1622, 1.0
      %vm1790 = vcmp.eq.f32.partialorder %v1623, 1.0
      %vm1791 = vcmp.eq.f32.partialorder %v1624, 1.0
      %vm1792 = vcmp.eq.f32.partialorder %v1625, 1.0
      %vm1793 = vcmp.eq.f32.partialorder %v1626, 1.0
      %vm1794 = vcmp.eq.f32.partialorder %v1627, 1.0
      %vm1795 = vcmp.eq.f32.partialorder %v1628, 1.0
      %vm1796 = vcmp.eq.f32.partialorder %v1629, 1.0
      %vm1797 = vcmp.eq.f32.partialorder %v1630, 1.0
      %vm1798 = vcmp.eq.f32.partialorder %v1631, 1.0
      %vm1799 = vcmp.eq.f32.partialorder %v1632, 1.0
      %vm1800 = vcmp.eq.f32.partialorder %v1633, 1.0
      %vm1801 = vcmp.eq.f32.partialorder %v1634, 1.0
      %vm1802 = vcmp.eq.f32.partialorder %v1635, 1.0
      %vm1803 = vcmp.eq.f32.partialorder %v1636, 1.0
      %vm1804 = vcmp.eq.f32.partialorder %v1637, 1.0
      %vm1805 = vcmp.eq.f32.partialorder %v1638, 1.0
      %vm1806 = vcmp.eq.f32.partialorder %v1639, 1.0
      %vm1807 = vcmp.eq.f32.partialorder %v1640, 1.0
      %vm1808 = vcmp.eq.f32.partialorder %v1641, 1.0
      %vm1809 = vcmp.eq.f32.partialorder %v1642, 1.0
      %vm1810 = vcmp.eq.f32.partialorder %v1643, 1.0
      %vm1811 = vcmp.eq.f32.partialorder %v1644, 1.0
      %vm1812 = vcmp.eq.f32.partialorder %v1645, 1.0
      %vm1813 = vcmp.eq.f32.partialorder %v1646, 1.0
      %vm1814 = vcmp.eq.f32.partialorder %v1647, 1.0
      %vm1815 = vcmp.eq.f32.partialorder %v1648, 1.0
      %vm1816 = vcmp.eq.f32.partialorder %v1649, 1.0
      %vm1817 = vcmp.eq.f32.partialorder %v1650, 1.0
      %vm1818 = vcmp.eq.f32.partialorder %v1651, 1.0
      %vm1819 = vcmp.eq.f32.partialorder %v1652, 1.0
      %v1820 = vsel %vm1788, 1, 0
      %v1821 = vsel %vm1789, 1, 0
      %v1822 = vsel %vm1790, 1, 0
      %v1823 = vsel %vm1791, 1, 0
      %v1824 = vsel %vm1792, 1, 0
      %v1825 = vsel %vm1793, 1, 0
      %v1826 = vsel %vm1794, 1, 0
      %v1827 = vsel %vm1795, 1, 0
      %v1828 = vsel %vm1796, 1, 0
      %v1829 = vsel %vm1797, 1, 0
      %v1830 = vsel %vm1798, 1, 0
      %v1831 = vsel %vm1799, 1, 0
      %v1832 = vsel %vm1800, 1, 0
      %v1833 = vsel %vm1801, 1, 0
      %v1834 = vsel %vm1802, 1, 0
      %v1835 = vsel %vm1803, 1, 0
      %v1836 = vsel %vm1804, 1, 0
      %v1837 = vsel %vm1805, 1, 0
      %v1838 = vsel %vm1806, 1, 0
      %v1839 = vsel %vm1807, 1, 0
      %v1840 = vsel %vm1808, 1, 0
      %v1841 = vsel %vm1809, 1, 0
      %v1842 = vsel %vm1810, 1, 0
      %v1843 = vsel %vm1811, 1, 0
      %v1844 = vsel %vm1812, 1, 0
      %v1845 = vsel %vm1813, 1, 0
      %v1846 = vsel %vm1814, 1, 0
      %v1847 = vsel %vm1815, 1, 0
      %v1848 = vsel %vm1816, 1, 0
      %v1849 = vsel %vm1817, 1, 0
      %v1850 = vsel %vm1818, 1, 0
      %v1851 = vsel %vm1819, 1, 0
      %v1852 = vcvt.s32.f32 %v1820
      %v1853 = vcvt.s32.f32 %v1821
      %v1854 = vcvt.s32.f32 %v1822
      %v1855 = vcvt.s32.f32 %v1823
      %v1856 = vcvt.s32.f32 %v1824
      %v1857 = vcvt.s32.f32 %v1825
      %v1858 = vcvt.s32.f32 %v1826
      %v1859 = vcvt.s32.f32 %v1827
      %v1860 = vcvt.s32.f32 %v1828
      %v1861 = vcvt.s32.f32 %v1829
      %v1862 = vcvt.s32.f32 %v1830
      %v1863 = vcvt.s32.f32 %v1831
      %v1864 = vcvt.s32.f32 %v1832
      %v1865 = vcvt.s32.f32 %v1833
      %v1866 = vcvt.s32.f32 %v1834
      %v1867 = vcvt.s32.f32 %v1835
      %v1868 = vcvt.s32.f32 %v1836
      %v1869 = vcvt.s32.f32 %v1837
      %v1870 = vcvt.s32.f32 %v1838
      %v1871 = vcvt.s32.f32 %v1839
      %v1872 = vcvt.s32.f32 %v1840
      %v1873 = vcvt.s32.f32 %v1841
      %v1874 = vcvt.s32.f32 %v1842
      %v1875 = vcvt.s32.f32 %v1843
      %v1876 = vcvt.s32.f32 %v1844
      %v1877 = vcvt.s32.f32 %v1845
      %v1878 = vcvt.s32.f32 %v1846
      %v1879 = vcvt.s32.f32 %v1847
      %v1880 = vcvt.s32.f32 %v1848
      %v1881 = vcvt.s32.f32 %v1849
      %v1882 = vcvt.s32.f32 %v1850
      %v1883 = vcvt.s32.f32 %v1851
      %v1884 = vpack.c.bf16 %v1852, %v1852
      %v1885 = vpack.c.bf16 %v1853, %v1853
      %v1886 = vpack.c.bf16 %v1854, %v1854
      %v1887 = vpack.c.bf16 %v1855, %v1855
      %v1888 = vpack.c.bf16 %v1856, %v1856
      %v1889 = vpack.c.bf16 %v1857, %v1857
      %v1890 = vpack.c.bf16 %v1858, %v1858
      %v1891 = vpack.c.bf16 %v1859, %v1859
      %v1892 = vpack.c.bf16 %v1860, %v1860
      %v1893 = vpack.c.bf16 %v1861, %v1861
      %v1894 = vpack.c.bf16 %v1862, %v1862
      %v1895 = vpack.c.bf16 %v1863, %v1863
      %v1896 = vpack.c.bf16 %v1864, %v1864
      %v1897 = vpack.c.bf16 %v1865, %v1865
      %v1898 = vpack.c.bf16 %v1866, %v1866
      %v1899 = vpack.c.bf16 %v1867, %v1867
      %v1900 = vpack.c.bf16 %v1868, %v1868
      %v1901 = vpack.c.bf16 %v1869, %v1869
      %v1902 = vpack.c.bf16 %v1870, %v1870
      %v1903 = vpack.c.bf16 %v1871, %v1871
      %v1904 = vpack.c.bf16 %v1872, %v1872
      %v1905 = vpack.c.bf16 %v1873, %v1873
      %v1906 = vpack.c.bf16 %v1874, %v1874
      %v1907 = vpack.c.bf16 %v1875, %v1875
      %v1908 = vpack.c.bf16 %v1876, %v1876
      %v1909 = vpack.c.bf16 %v1877, %v1877
      %v1910 = vpack.c.bf16 %v1878, %v1878
      %v1911 = vpack.c.bf16 %v1879, %v1879
      %v1912 = vpack.c.bf16 %v1880, %v1880
      %v1913 = vpack.c.bf16 %v1881, %v1881
      %v1914 = vpack.c.bf16 %v1882, %v1882
      %v1915 = vpack.c.bf16 %v1883, %v1883
      %vm1916 = vcmp.eq.f32.partialorder %v1621, 2.0
      %vm1917 = vcmp.eq.f32.partialorder %v1622, 2.0
      %vm1918 = vcmp.eq.f32.partialorder %v1623, 2.0
      %vm1919 = vcmp.eq.f32.partialorder %v1624, 2.0
      %vm1920 = vcmp.eq.f32.partialorder %v1625, 2.0
      %vm1921 = vcmp.eq.f32.partialorder %v1626, 2.0
      %vm1922 = vcmp.eq.f32.partialorder %v1627, 2.0
      %vm1923 = vcmp.eq.f32.partialorder %v1628, 2.0
      %vm1924 = vcmp.eq.f32.partialorder %v1629, 2.0
      %vm1925 = vcmp.eq.f32.partialorder %v1630, 2.0
      %vm1926 = vcmp.eq.f32.partialorder %v1631, 2.0
      %vm1927 = vcmp.eq.f32.partialorder %v1632, 2.0
      %vm1928 = vcmp.eq.f32.partialorder %v1633, 2.0
      %vm1929 = vcmp.eq.f32.partialorder %v1634, 2.0
      %vm1930 = vcmp.eq.f32.partialorder %v1635, 2.0
      %vm1931 = vcmp.eq.f32.partialorder %v1636, 2.0
      %vm1932 = vcmp.eq.f32.partialorder %v1637, 2.0
      %vm1933 = vcmp.eq.f32.partialorder %v1638, 2.0
      %vm1934 = vcmp.eq.f32.partialorder %v1639, 2.0
      %vm1935 = vcmp.eq.f32.partialorder %v1640, 2.0
      %vm1936 = vcmp.eq.f32.partialorder %v1641, 2.0
      %vm1937 = vcmp.eq.f32.partialorder %v1642, 2.0
      %vm1938 = vcmp.eq.f32.partialorder %v1643, 2.0
      %vm1939 = vcmp.eq.f32.partialorder %v1644, 2.0
      %vm1940 = vcmp.eq.f32.partialorder %v1645, 2.0
      %vm1941 = vcmp.eq.f32.partialorder %v1646, 2.0
      %vm1942 = vcmp.eq.f32.partialorder %v1647, 2.0
      %vm1943 = vcmp.eq.f32.partialorder %v1648, 2.0
      %vm1944 = vcmp.eq.f32.partialorder %v1649, 2.0
      %vm1945 = vcmp.eq.f32.partialorder %v1650, 2.0
      %vm1946 = vcmp.eq.f32.partialorder %v1651, 2.0
      %vm1947 = vcmp.eq.f32.partialorder %v1652, 2.0
      %v1948 = vsel %vm1916, 1, 0
      %v1949 = vsel %vm1917, 1, 0
      %v1950 = vsel %vm1918, 1, 0
      %v1951 = vsel %vm1919, 1, 0
      %v1952 = vsel %vm1920, 1, 0
      %v1953 = vsel %vm1921, 1, 0
      %v1954 = vsel %vm1922, 1, 0
      %v1955 = vsel %vm1923, 1, 0
      %v1956 = vsel %vm1924, 1, 0
      %v1957 = vsel %vm1925, 1, 0
      %v1958 = vsel %vm1926, 1, 0
      %v1959 = vsel %vm1927, 1, 0
      %v1960 = vsel %vm1928, 1, 0
      %v1961 = vsel %vm1929, 1, 0
      %v1962 = vsel %vm1930, 1, 0
      %v1963 = vsel %vm1931, 1, 0
      %v1964 = vsel %vm1932, 1, 0
      %v1965 = vsel %vm1933, 1, 0
      %v1966 = vsel %vm1934, 1, 0
      %v1967 = vsel %vm1935, 1, 0
      %v1968 = vsel %vm1936, 1, 0
      %v1969 = vsel %vm1937, 1, 0
      %v1970 = vsel %vm1938, 1, 0
      %v1971 = vsel %vm1939, 1, 0
      %v1972 = vsel %vm1940, 1, 0
      %v1973 = vsel %vm1941, 1, 0
      %v1974 = vsel %vm1942, 1, 0
      %v1975 = vsel %vm1943, 1, 0
      %v1976 = vsel %vm1944, 1, 0
      %v1977 = vsel %vm1945, 1, 0
      %v1978 = vsel %vm1946, 1, 0
      %v1979 = vsel %vm1947, 1, 0
      %v1980 = vcvt.s32.f32 %v1948
      %v1981 = vcvt.s32.f32 %v1949
      %v1982 = vcvt.s32.f32 %v1950
      %v1983 = vcvt.s32.f32 %v1951
      %v1984 = vcvt.s32.f32 %v1952
      %v1985 = vcvt.s32.f32 %v1953
      %v1986 = vcvt.s32.f32 %v1954
      %v1987 = vcvt.s32.f32 %v1955
      %v1988 = vcvt.s32.f32 %v1956
      %v1989 = vcvt.s32.f32 %v1957
      %v1990 = vcvt.s32.f32 %v1958
      %v1991 = vcvt.s32.f32 %v1959
      %v1992 = vcvt.s32.f32 %v1960
      %v1993 = vcvt.s32.f32 %v1961
      %v1994 = vcvt.s32.f32 %v1962
      %v1995 = vcvt.s32.f32 %v1963
      %v1996 = vcvt.s32.f32 %v1964
      %v1997 = vcvt.s32.f32 %v1965
      %v1998 = vcvt.s32.f32 %v1966
      %v1999 = vcvt.s32.f32 %v1967
      %v2000 = vcvt.s32.f32 %v1968
      %v2001 = vcvt.s32.f32 %v1969
      %v2002 = vcvt.s32.f32 %v1970
      %v2003 = vcvt.s32.f32 %v1971
      %v2004 = vcvt.s32.f32 %v1972
      %v2005 = vcvt.s32.f32 %v1973
      %v2006 = vcvt.s32.f32 %v1974
      %v2007 = vcvt.s32.f32 %v1975
      %v2008 = vcvt.s32.f32 %v1976
      %v2009 = vcvt.s32.f32 %v1977
      %v2010 = vcvt.s32.f32 %v1978
      %v2011 = vcvt.s32.f32 %v1979
      %v2012 = vpack.c.bf16 %v1980, %v1980
      %v2013 = vpack.c.bf16 %v1981, %v1981
      %v2014 = vpack.c.bf16 %v1982, %v1982
      %v2015 = vpack.c.bf16 %v1983, %v1983
      %v2016 = vpack.c.bf16 %v1984, %v1984
      %v2017 = vpack.c.bf16 %v1985, %v1985
      %v2018 = vpack.c.bf16 %v1986, %v1986
      %v2019 = vpack.c.bf16 %v1987, %v1987
      %v2020 = vpack.c.bf16 %v1988, %v1988
      %v2021 = vpack.c.bf16 %v1989, %v1989
      %v2022 = vpack.c.bf16 %v1990, %v1990
      %v2023 = vpack.c.bf16 %v1991, %v1991
      %v2024 = vpack.c.bf16 %v1992, %v1992
      %v2025 = vpack.c.bf16 %v1993, %v1993
      %v2026 = vpack.c.bf16 %v1994, %v1994
      %v2027 = vpack.c.bf16 %v1995, %v1995
      %v2028 = vpack.c.bf16 %v1996, %v1996
      %v2029 = vpack.c.bf16 %v1997, %v1997
      %v2030 = vpack.c.bf16 %v1998, %v1998
      %v2031 = vpack.c.bf16 %v1999, %v1999
      %v2032 = vpack.c.bf16 %v2000, %v2000
      %v2033 = vpack.c.bf16 %v2001, %v2001
      %v2034 = vpack.c.bf16 %v2002, %v2002
      %v2035 = vpack.c.bf16 %v2003, %v2003
      %v2036 = vpack.c.bf16 %v2004, %v2004
      %v2037 = vpack.c.bf16 %v2005, %v2005
      %v2038 = vpack.c.bf16 %v2006, %v2006
      %v2039 = vpack.c.bf16 %v2007, %v2007
      %v2040 = vpack.c.bf16 %v2008, %v2008
      %v2041 = vpack.c.bf16 %v2009, %v2009
      %v2042 = vpack.c.bf16 %v2010, %v2010
      %v2043 = vpack.c.bf16 %v2011, %v2011
      %vm2044 = vcmp.eq.f32.partialorder %v1621, 3.0
      %vm2045 = vcmp.eq.f32.partialorder %v1622, 3.0
      %vm2046 = vcmp.eq.f32.partialorder %v1623, 3.0
      %vm2047 = vcmp.eq.f32.partialorder %v1624, 3.0
      %vm2048 = vcmp.eq.f32.partialorder %v1625, 3.0
      %vm2049 = vcmp.eq.f32.partialorder %v1626, 3.0
      %vm2050 = vcmp.eq.f32.partialorder %v1627, 3.0
      %vm2051 = vcmp.eq.f32.partialorder %v1628, 3.0
      %vm2052 = vcmp.eq.f32.partialorder %v1629, 3.0
      %vm2053 = vcmp.eq.f32.partialorder %v1630, 3.0
      %vm2054 = vcmp.eq.f32.partialorder %v1631, 3.0
      %vm2055 = vcmp.eq.f32.partialorder %v1632, 3.0
      %vm2056 = vcmp.eq.f32.partialorder %v1633, 3.0
      %vm2057 = vcmp.eq.f32.partialorder %v1634, 3.0
      %vm2058 = vcmp.eq.f32.partialorder %v1635, 3.0
      %vm2059 = vcmp.eq.f32.partialorder %v1636, 3.0
      %vm2060 = vcmp.eq.f32.partialorder %v1637, 3.0
      %vm2061 = vcmp.eq.f32.partialorder %v1638, 3.0
      %vm2062 = vcmp.eq.f32.partialorder %v1639, 3.0
      %vm2063 = vcmp.eq.f32.partialorder %v1640, 3.0
      %vm2064 = vcmp.eq.f32.partialorder %v1641, 3.0
      %vm2065 = vcmp.eq.f32.partialorder %v1642, 3.0
      %vm2066 = vcmp.eq.f32.partialorder %v1643, 3.0
      %vm2067 = vcmp.eq.f32.partialorder %v1644, 3.0
      %vm2068 = vcmp.eq.f32.partialorder %v1645, 3.0
      %vm2069 = vcmp.eq.f32.partialorder %v1646, 3.0
      %vm2070 = vcmp.eq.f32.partialorder %v1647, 3.0
      %vm2071 = vcmp.eq.f32.partialorder %v1648, 3.0
      %vm2072 = vcmp.eq.f32.partialorder %v1649, 3.0
      %vm2073 = vcmp.eq.f32.partialorder %v1650, 3.0
      %vm2074 = vcmp.eq.f32.partialorder %v1651, 3.0
      %vm2075 = vcmp.eq.f32.partialorder %v1652, 3.0
      %v2076 = vsel %vm2044, 1, 0
      %v2077 = vsel %vm2045, 1, 0
      %v2078 = vsel %vm2046, 1, 0
      %v2079 = vsel %vm2047, 1, 0
      %v2080 = vsel %vm2048, 1, 0
      %v2081 = vsel %vm2049, 1, 0
      %v2082 = vsel %vm2050, 1, 0
      %v2083 = vsel %vm2051, 1, 0
      %v2084 = vsel %vm2052, 1, 0
      %v2085 = vsel %vm2053, 1, 0
      %v2086 = vsel %vm2054, 1, 0
      %v2087 = vsel %vm2055, 1, 0
      %v2088 = vsel %vm2056, 1, 0
      %v2089 = vsel %vm2057, 1, 0
      %v2090 = vsel %vm2058, 1, 0
      %v2091 = vsel %vm2059, 1, 0
      %v2092 = vsel %vm2060, 1, 0
      %v2093 = vsel %vm2061, 1, 0
      %v2094 = vsel %vm2062, 1, 0
      %v2095 = vsel %vm2063, 1, 0
      %v2096 = vsel %vm2064, 1, 0
      %v2097 = vsel %vm2065, 1, 0
      %v2098 = vsel %vm2066, 1, 0
      %v2099 = vsel %vm2067, 1, 0
      %v2100 = vsel %vm2068, 1, 0
      %v2101 = vsel %vm2069, 1, 0
      %v2102 = vsel %vm2070, 1, 0
      %v2103 = vsel %vm2071, 1, 0
      %v2104 = vsel %vm2072, 1, 0
      %v2105 = vsel %vm2073, 1, 0
      %v2106 = vsel %vm2074, 1, 0
      %v2107 = vsel %vm2075, 1, 0
      %v2108 = vcvt.s32.f32 %v2076
      %v2109 = vcvt.s32.f32 %v2077
      %v2110 = vcvt.s32.f32 %v2078
      %v2111 = vcvt.s32.f32 %v2079
      %v2112 = vcvt.s32.f32 %v2080
      %v2113 = vcvt.s32.f32 %v2081
      %v2114 = vcvt.s32.f32 %v2082
      %v2115 = vcvt.s32.f32 %v2083
      %v2116 = vcvt.s32.f32 %v2084
      %v2117 = vcvt.s32.f32 %v2085
      %v2118 = vcvt.s32.f32 %v2086
      %v2119 = vcvt.s32.f32 %v2087
      %v2120 = vcvt.s32.f32 %v2088
      %v2121 = vcvt.s32.f32 %v2089
      %v2122 = vcvt.s32.f32 %v2090
      %v2123 = vcvt.s32.f32 %v2091
      %v2124 = vcvt.s32.f32 %v2092
      %v2125 = vcvt.s32.f32 %v2093
      %v2126 = vcvt.s32.f32 %v2094
      %v2127 = vcvt.s32.f32 %v2095
      %v2128 = vcvt.s32.f32 %v2096
      %v2129 = vcvt.s32.f32 %v2097
      %v2130 = vcvt.s32.f32 %v2098
      %v2131 = vcvt.s32.f32 %v2099
      %v2132 = vcvt.s32.f32 %v2100
      %v2133 = vcvt.s32.f32 %v2101
      %v2134 = vcvt.s32.f32 %v2102
      %v2135 = vcvt.s32.f32 %v2103
      %v2136 = vcvt.s32.f32 %v2104
      %v2137 = vcvt.s32.f32 %v2105
      %v2138 = vcvt.s32.f32 %v2106
      %v2139 = vcvt.s32.f32 %v2107
      %v2140 = vpack.c.bf16 %v2108, %v2108
      %v2141 = vpack.c.bf16 %v2109, %v2109
      %v2142 = vpack.c.bf16 %v2110, %v2110
      %v2143 = vpack.c.bf16 %v2111, %v2111
      %v2144 = vpack.c.bf16 %v2112, %v2112
      %v2145 = vpack.c.bf16 %v2113, %v2113
      %v2146 = vpack.c.bf16 %v2114, %v2114
      %v2147 = vpack.c.bf16 %v2115, %v2115
      %v2148 = vpack.c.bf16 %v2116, %v2116
      %v2149 = vpack.c.bf16 %v2117, %v2117
      %v2150 = vpack.c.bf16 %v2118, %v2118
      %v2151 = vpack.c.bf16 %v2119, %v2119
      %v2152 = vpack.c.bf16 %v2120, %v2120
      %v2153 = vpack.c.bf16 %v2121, %v2121
      %v2154 = vpack.c.bf16 %v2122, %v2122
      %v2155 = vpack.c.bf16 %v2123, %v2123
      %v2156 = vpack.c.bf16 %v2124, %v2124
      %v2157 = vpack.c.bf16 %v2125, %v2125
      %v2158 = vpack.c.bf16 %v2126, %v2126
      %v2159 = vpack.c.bf16 %v2127, %v2127
      %v2160 = vpack.c.bf16 %v2128, %v2128
      %v2161 = vpack.c.bf16 %v2129, %v2129
      %v2162 = vpack.c.bf16 %v2130, %v2130
      %v2163 = vpack.c.bf16 %v2131, %v2131
      %v2164 = vpack.c.bf16 %v2132, %v2132
      %v2165 = vpack.c.bf16 %v2133, %v2133
      %v2166 = vpack.c.bf16 %v2134, %v2134
      %v2167 = vpack.c.bf16 %v2135, %v2135
      %v2168 = vpack.c.bf16 %v2136, %v2136
      %v2169 = vpack.c.bf16 %v2137, %v2137
      %v2170 = vpack.c.bf16 %v2138, %v2138
      %v2171 = vpack.c.bf16 %v2139, %v2139
      %vm2172 = vcmp.eq.f32.partialorder %v1621, 4.0
      %vm2173 = vcmp.eq.f32.partialorder %v1622, 4.0
      %vm2174 = vcmp.eq.f32.partialorder %v1623, 4.0
      %vm2175 = vcmp.eq.f32.partialorder %v1624, 4.0
      %vm2176 = vcmp.eq.f32.partialorder %v1625, 4.0
      %vm2177 = vcmp.eq.f32.partialorder %v1626, 4.0
      %vm2178 = vcmp.eq.f32.partialorder %v1627, 4.0
      %vm2179 = vcmp.eq.f32.partialorder %v1628, 4.0
      %vm2180 = vcmp.eq.f32.partialorder %v1629, 4.0
      %vm2181 = vcmp.eq.f32.partialorder %v1630, 4.0
      %vm2182 = vcmp.eq.f32.partialorder %v1631, 4.0
      %vm2183 = vcmp.eq.f32.partialorder %v1632, 4.0
      %vm2184 = vcmp.eq.f32.partialorder %v1633, 4.0
      %vm2185 = vcmp.eq.f32.partialorder %v1634, 4.0
      %vm2186 = vcmp.eq.f32.partialorder %v1635, 4.0
      %vm2187 = vcmp.eq.f32.partialorder %v1636, 4.0
      %vm2188 = vcmp.eq.f32.partialorder %v1637, 4.0
      %vm2189 = vcmp.eq.f32.partialorder %v1638, 4.0
      %vm2190 = vcmp.eq.f32.partialorder %v1639, 4.0
      %vm2191 = vcmp.eq.f32.partialorder %v1640, 4.0
      %vm2192 = vcmp.eq.f32.partialorder %v1641, 4.0
      %vm2193 = vcmp.eq.f32.partialorder %v1642, 4.0
      %vm2194 = vcmp.eq.f32.partialorder %v1643, 4.0
      %vm2195 = vcmp.eq.f32.partialorder %v1644, 4.0
      %vm2196 = vcmp.eq.f32.partialorder %v1645, 4.0
      %vm2197 = vcmp.eq.f32.partialorder %v1646, 4.0
      %vm2198 = vcmp.eq.f32.partialorder %v1647, 4.0
      %vm2199 = vcmp.eq.f32.partialorder %v1648, 4.0
      %vm2200 = vcmp.eq.f32.partialorder %v1649, 4.0
      %vm2201 = vcmp.eq.f32.partialorder %v1650, 4.0
      %vm2202 = vcmp.eq.f32.partialorder %v1651, 4.0
      %vm2203 = vcmp.eq.f32.partialorder %v1652, 4.0
      %v2204 = vsel %vm2172, 1, 0
      %v2205 = vsel %vm2173, 1, 0
      %v2206 = vsel %vm2174, 1, 0
      %v2207 = vsel %vm2175, 1, 0
      %v2208 = vsel %vm2176, 1, 0
      %v2209 = vsel %vm2177, 1, 0
      %v2210 = vsel %vm2178, 1, 0
      %v2211 = vsel %vm2179, 1, 0
      %v2212 = vsel %vm2180, 1, 0
      %v2213 = vsel %vm2181, 1, 0
      %v2214 = vsel %vm2182, 1, 0
      %v2215 = vsel %vm2183, 1, 0
      %v2216 = vsel %vm2184, 1, 0
      %v2217 = vsel %vm2185, 1, 0
      %v2218 = vsel %vm2186, 1, 0
      %v2219 = vsel %vm2187, 1, 0
      %v2220 = vsel %vm2188, 1, 0
      %v2221 = vsel %vm2189, 1, 0
      %v2222 = vsel %vm2190, 1, 0
      %v2223 = vsel %vm2191, 1, 0
      %v2224 = vsel %vm2192, 1, 0
      %v2225 = vsel %vm2193, 1, 0
      %v2226 = vsel %vm2194, 1, 0
      %v2227 = vsel %vm2195, 1, 0
      %v2228 = vsel %vm2196, 1, 0
      %v2229 = vsel %vm2197, 1, 0
      %v2230 = vsel %vm2198, 1, 0
      %v2231 = vsel %vm2199, 1, 0
      %v2232 = vsel %vm2200, 1, 0
      %v2233 = vsel %vm2201, 1, 0
      %v2234 = vsel %vm2202, 1, 0
      %v2235 = vsel %vm2203, 1, 0
      %v2236 = vcvt.s32.f32 %v2204
      %v2237 = vcvt.s32.f32 %v2205
      %v2238 = vcvt.s32.f32 %v2206
      %v2239 = vcvt.s32.f32 %v2207
      %v2240 = vcvt.s32.f32 %v2208
      %v2241 = vcvt.s32.f32 %v2209
      %v2242 = vcvt.s32.f32 %v2210
      %v2243 = vcvt.s32.f32 %v2211
      %v2244 = vcvt.s32.f32 %v2212
      %v2245 = vcvt.s32.f32 %v2213
      %v2246 = vcvt.s32.f32 %v2214
      %v2247 = vcvt.s32.f32 %v2215
      %v2248 = vcvt.s32.f32 %v2216
      %v2249 = vcvt.s32.f32 %v2217
      %v2250 = vcvt.s32.f32 %v2218
      %v2251 = vcvt.s32.f32 %v2219
      %v2252 = vcvt.s32.f32 %v2220
      %v2253 = vcvt.s32.f32 %v2221
      %v2254 = vcvt.s32.f32 %v2222
      %v2255 = vcvt.s32.f32 %v2223
      %v2256 = vcvt.s32.f32 %v2224
      %v2257 = vcvt.s32.f32 %v2225
      %v2258 = vcvt.s32.f32 %v2226
      %v2259 = vcvt.s32.f32 %v2227
      %v2260 = vcvt.s32.f32 %v2228
      %v2261 = vcvt.s32.f32 %v2229
      %v2262 = vcvt.s32.f32 %v2230
      %v2263 = vcvt.s32.f32 %v2231
      %v2264 = vcvt.s32.f32 %v2232
      %v2265 = vcvt.s32.f32 %v2233
      %v2266 = vcvt.s32.f32 %v2234
      %v2267 = vcvt.s32.f32 %v2235
      %v2268 = vpack.c.bf16 %v2236, %v2236
      %v2269 = vpack.c.bf16 %v2237, %v2237
      %v2270 = vpack.c.bf16 %v2238, %v2238
      %v2271 = vpack.c.bf16 %v2239, %v2239
      %v2272 = vpack.c.bf16 %v2240, %v2240
      %v2273 = vpack.c.bf16 %v2241, %v2241
      %v2274 = vpack.c.bf16 %v2242, %v2242
      %v2275 = vpack.c.bf16 %v2243, %v2243
      %v2276 = vpack.c.bf16 %v2244, %v2244
      %v2277 = vpack.c.bf16 %v2245, %v2245
      %v2278 = vpack.c.bf16 %v2246, %v2246
      %v2279 = vpack.c.bf16 %v2247, %v2247
      %v2280 = vpack.c.bf16 %v2248, %v2248
      %v2281 = vpack.c.bf16 %v2249, %v2249
      %v2282 = vpack.c.bf16 %v2250, %v2250
      %v2283 = vpack.c.bf16 %v2251, %v2251
      %v2284 = vpack.c.bf16 %v2252, %v2252
      %v2285 = vpack.c.bf16 %v2253, %v2253
      %v2286 = vpack.c.bf16 %v2254, %v2254
      %v2287 = vpack.c.bf16 %v2255, %v2255
      %v2288 = vpack.c.bf16 %v2256, %v2256
      %v2289 = vpack.c.bf16 %v2257, %v2257
      %v2290 = vpack.c.bf16 %v2258, %v2258
      %v2291 = vpack.c.bf16 %v2259, %v2259
      %v2292 = vpack.c.bf16 %v2260, %v2260
      %v2293 = vpack.c.bf16 %v2261, %v2261
      %v2294 = vpack.c.bf16 %v2262, %v2262
      %v2295 = vpack.c.bf16 %v2263, %v2263
      %v2296 = vpack.c.bf16 %v2264, %v2264
      %v2297 = vpack.c.bf16 %v2265, %v2265
      %v2298 = vpack.c.bf16 %v2266, %v2266
      %v2299 = vpack.c.bf16 %v2267, %v2267
      %vm2300 = vcmp.eq.f32.partialorder %v1621, 5.0
      %vm2301 = vcmp.eq.f32.partialorder %v1622, 5.0
      %vm2302 = vcmp.eq.f32.partialorder %v1623, 5.0
      %vm2303 = vcmp.eq.f32.partialorder %v1624, 5.0
      %vm2304 = vcmp.eq.f32.partialorder %v1625, 5.0
      %vm2305 = vcmp.eq.f32.partialorder %v1626, 5.0
      %vm2306 = vcmp.eq.f32.partialorder %v1627, 5.0
      %vm2307 = vcmp.eq.f32.partialorder %v1628, 5.0
      %vm2308 = vcmp.eq.f32.partialorder %v1629, 5.0
      %vm2309 = vcmp.eq.f32.partialorder %v1630, 5.0
      %vm2310 = vcmp.eq.f32.partialorder %v1631, 5.0
      %vm2311 = vcmp.eq.f32.partialorder %v1632, 5.0
      %vm2312 = vcmp.eq.f32.partialorder %v1633, 5.0
      %vm2313 = vcmp.eq.f32.partialorder %v1634, 5.0
      %vm2314 = vcmp.eq.f32.partialorder %v1635, 5.0
      %vm2315 = vcmp.eq.f32.partialorder %v1636, 5.0
      %vm2316 = vcmp.eq.f32.partialorder %v1637, 5.0
      %vm2317 = vcmp.eq.f32.partialorder %v1638, 5.0
      %vm2318 = vcmp.eq.f32.partialorder %v1639, 5.0
      %vm2319 = vcmp.eq.f32.partialorder %v1640, 5.0
      %vm2320 = vcmp.eq.f32.partialorder %v1641, 5.0
      %vm2321 = vcmp.eq.f32.partialorder %v1642, 5.0
      %vm2322 = vcmp.eq.f32.partialorder %v1643, 5.0
      %vm2323 = vcmp.eq.f32.partialorder %v1644, 5.0
      %vm2324 = vcmp.eq.f32.partialorder %v1645, 5.0
      %vm2325 = vcmp.eq.f32.partialorder %v1646, 5.0
      %vm2326 = vcmp.eq.f32.partialorder %v1647, 5.0
      %vm2327 = vcmp.eq.f32.partialorder %v1648, 5.0
      %vm2328 = vcmp.eq.f32.partialorder %v1649, 5.0
      %vm2329 = vcmp.eq.f32.partialorder %v1650, 5.0
      %vm2330 = vcmp.eq.f32.partialorder %v1651, 5.0
      %vm2331 = vcmp.eq.f32.partialorder %v1652, 5.0
      %v2332 = vsel %vm2300, 1, 0
      %v2333 = vsel %vm2301, 1, 0
      %v2334 = vsel %vm2302, 1, 0
      %v2335 = vsel %vm2303, 1, 0
      %v2336 = vsel %vm2304, 1, 0
      %v2337 = vsel %vm2305, 1, 0
      %v2338 = vsel %vm2306, 1, 0
      %v2339 = vsel %vm2307, 1, 0
      %v2340 = vsel %vm2308, 1, 0
      %v2341 = vsel %vm2309, 1, 0
      %v2342 = vsel %vm2310, 1, 0
      %v2343 = vsel %vm2311, 1, 0
      %v2344 = vsel %vm2312, 1, 0
      %v2345 = vsel %vm2313, 1, 0
      %v2346 = vsel %vm2314, 1, 0
      %v2347 = vsel %vm2315, 1, 0
      %v2348 = vsel %vm2316, 1, 0
      %v2349 = vsel %vm2317, 1, 0
      %v2350 = vsel %vm2318, 1, 0
      %v2351 = vsel %vm2319, 1, 0
      %v2352 = vsel %vm2320, 1, 0
      %v2353 = vsel %vm2321, 1, 0
      %v2354 = vsel %vm2322, 1, 0
      %v2355 = vsel %vm2323, 1, 0
      %v2356 = vsel %vm2324, 1, 0
      %v2357 = vsel %vm2325, 1, 0
      %v2358 = vsel %vm2326, 1, 0
      %v2359 = vsel %vm2327, 1, 0
      %v2360 = vsel %vm2328, 1, 0
      %v2361 = vsel %vm2329, 1, 0
      %v2362 = vsel %vm2330, 1, 0
      %v2363 = vsel %vm2331, 1, 0
      %v2364 = vcvt.s32.f32 %v2332
      %v2365 = vcvt.s32.f32 %v2333
      %v2366 = vcvt.s32.f32 %v2334
      %v2367 = vcvt.s32.f32 %v2335
      %v2368 = vcvt.s32.f32 %v2336
      %v2369 = vcvt.s32.f32 %v2337
      %v2370 = vcvt.s32.f32 %v2338
      %v2371 = vcvt.s32.f32 %v2339
      %v2372 = vcvt.s32.f32 %v2340
      %v2373 = vcvt.s32.f32 %v2341
      %v2374 = vcvt.s32.f32 %v2342
      %v2375 = vcvt.s32.f32 %v2343
      %v2376 = vcvt.s32.f32 %v2344
      %v2377 = vcvt.s32.f32 %v2345
      %v2378 = vcvt.s32.f32 %v2346
      %v2379 = vcvt.s32.f32 %v2347
      %v2380 = vcvt.s32.f32 %v2348
      %v2381 = vcvt.s32.f32 %v2349
      %v2382 = vcvt.s32.f32 %v2350
      %v2383 = vcvt.s32.f32 %v2351
      %v2384 = vcvt.s32.f32 %v2352
      %v2385 = vcvt.s32.f32 %v2353
      %v2386 = vcvt.s32.f32 %v2354
      %v2387 = vcvt.s32.f32 %v2355
      %v2388 = vcvt.s32.f32 %v2356
      %v2389 = vcvt.s32.f32 %v2357
      %v2390 = vcvt.s32.f32 %v2358
      %v2391 = vcvt.s32.f32 %v2359
      %v2392 = vcvt.s32.f32 %v2360
      %v2393 = vcvt.s32.f32 %v2361
      %v2394 = vcvt.s32.f32 %v2362
      %v2395 = vcvt.s32.f32 %v2363
      %v2396 = vpack.c.bf16 %v2364, %v2364
      %v2397 = vpack.c.bf16 %v2365, %v2365
      %v2398 = vpack.c.bf16 %v2366, %v2366
      %v2399 = vpack.c.bf16 %v2367, %v2367
      %v2400 = vpack.c.bf16 %v2368, %v2368
      %v2401 = vpack.c.bf16 %v2369, %v2369
      %v2402 = vpack.c.bf16 %v2370, %v2370
      %v2403 = vpack.c.bf16 %v2371, %v2371
      %v2404 = vpack.c.bf16 %v2372, %v2372
      %v2405 = vpack.c.bf16 %v2373, %v2373
      %v2406 = vpack.c.bf16 %v2374, %v2374
      %v2407 = vpack.c.bf16 %v2375, %v2375
      %v2408 = vpack.c.bf16 %v2376, %v2376
      %v2409 = vpack.c.bf16 %v2377, %v2377
      %v2410 = vpack.c.bf16 %v2378, %v2378
      %v2411 = vpack.c.bf16 %v2379, %v2379
      %v2412 = vpack.c.bf16 %v2380, %v2380
      %v2413 = vpack.c.bf16 %v2381, %v2381
      %v2414 = vpack.c.bf16 %v2382, %v2382
      %v2415 = vpack.c.bf16 %v2383, %v2383
      %v2416 = vpack.c.bf16 %v2384, %v2384
      %v2417 = vpack.c.bf16 %v2385, %v2385
      %v2418 = vpack.c.bf16 %v2386, %v2386
      %v2419 = vpack.c.bf16 %v2387, %v2387
      %v2420 = vpack.c.bf16 %v2388, %v2388
      %v2421 = vpack.c.bf16 %v2389, %v2389
      %v2422 = vpack.c.bf16 %v2390, %v2390
      %v2423 = vpack.c.bf16 %v2391, %v2391
      %v2424 = vpack.c.bf16 %v2392, %v2392
      %v2425 = vpack.c.bf16 %v2393, %v2393
      %v2426 = vpack.c.bf16 %v2394, %v2394
      %v2427 = vpack.c.bf16 %v2395, %v2395
      %vm2428 = vcmp.eq.f32.partialorder %v1621, 6.0
      %vm2429 = vcmp.eq.f32.partialorder %v1622, 6.0
      %vm2430 = vcmp.eq.f32.partialorder %v1623, 6.0
      %vm2431 = vcmp.eq.f32.partialorder %v1624, 6.0
      %vm2432 = vcmp.eq.f32.partialorder %v1625, 6.0
      %vm2433 = vcmp.eq.f32.partialorder %v1626, 6.0
      %vm2434 = vcmp.eq.f32.partialorder %v1627, 6.0
      %vm2435 = vcmp.eq.f32.partialorder %v1628, 6.0
      %vm2436 = vcmp.eq.f32.partialorder %v1629, 6.0
      %vm2437 = vcmp.eq.f32.partialorder %v1630, 6.0
      %vm2438 = vcmp.eq.f32.partialorder %v1631, 6.0
      %vm2439 = vcmp.eq.f32.partialorder %v1632, 6.0
      %vm2440 = vcmp.eq.f32.partialorder %v1633, 6.0
      %vm2441 = vcmp.eq.f32.partialorder %v1634, 6.0
      %vm2442 = vcmp.eq.f32.partialorder %v1635, 6.0
      %vm2443 = vcmp.eq.f32.partialorder %v1636, 6.0
      %vm2444 = vcmp.eq.f32.partialorder %v1637, 6.0
      %vm2445 = vcmp.eq.f32.partialorder %v1638, 6.0
      %vm2446 = vcmp.eq.f32.partialorder %v1639, 6.0
      %vm2447 = vcmp.eq.f32.partialorder %v1640, 6.0
      %vm2448 = vcmp.eq.f32.partialorder %v1641, 6.0
      %vm2449 = vcmp.eq.f32.partialorder %v1642, 6.0
      %vm2450 = vcmp.eq.f32.partialorder %v1643, 6.0
      %vm2451 = vcmp.eq.f32.partialorder %v1644, 6.0
      %vm2452 = vcmp.eq.f32.partialorder %v1645, 6.0
      %vm2453 = vcmp.eq.f32.partialorder %v1646, 6.0
      %vm2454 = vcmp.eq.f32.partialorder %v1647, 6.0
      %vm2455 = vcmp.eq.f32.partialorder %v1648, 6.0
      %vm2456 = vcmp.eq.f32.partialorder %v1649, 6.0
      %vm2457 = vcmp.eq.f32.partialorder %v1650, 6.0
      %vm2458 = vcmp.eq.f32.partialorder %v1651, 6.0
      %vm2459 = vcmp.eq.f32.partialorder %v1652, 6.0
      %v2460 = vsel %vm2428, 1, 0
      %v2461 = vsel %vm2429, 1, 0
      %v2462 = vsel %vm2430, 1, 0
      %v2463 = vsel %vm2431, 1, 0
      %v2464 = vsel %vm2432, 1, 0
      %v2465 = vsel %vm2433, 1, 0
      %v2466 = vsel %vm2434, 1, 0
      %v2467 = vsel %vm2435, 1, 0
      %v2468 = vsel %vm2436, 1, 0
      %v2469 = vsel %vm2437, 1, 0
      %v2470 = vsel %vm2438, 1, 0
      %v2471 = vsel %vm2439, 1, 0
      %v2472 = vsel %vm2440, 1, 0
      %v2473 = vsel %vm2441, 1, 0
      %v2474 = vsel %vm2442, 1, 0
      %v2475 = vsel %vm2443, 1, 0
      %v2476 = vsel %vm2444, 1, 0
      %v2477 = vsel %vm2445, 1, 0
      %v2478 = vsel %vm2446, 1, 0
      %v2479 = vsel %vm2447, 1, 0
      %v2480 = vsel %vm2448, 1, 0
      %v2481 = vsel %vm2449, 1, 0
      %v2482 = vsel %vm2450, 1, 0
      %v2483 = vsel %vm2451, 1, 0
      %v2484 = vsel %vm2452, 1, 0
      %v2485 = vsel %vm2453, 1, 0
      %v2486 = vsel %vm2454, 1, 0
      %v2487 = vsel %vm2455, 1, 0
      %v2488 = vsel %vm2456, 1, 0
      %v2489 = vsel %vm2457, 1, 0
      %v2490 = vsel %vm2458, 1, 0
      %v2491 = vsel %vm2459, 1, 0
      %v2492 = vcvt.s32.f32 %v2460
      %v2493 = vcvt.s32.f32 %v2461
      %v2494 = vcvt.s32.f32 %v2462
      %v2495 = vcvt.s32.f32 %v2463
      %v2496 = vcvt.s32.f32 %v2464
      %v2497 = vcvt.s32.f32 %v2465
      %v2498 = vcvt.s32.f32 %v2466
      %v2499 = vcvt.s32.f32 %v2467
      %v2500 = vcvt.s32.f32 %v2468
      %v2501 = vcvt.s32.f32 %v2469
      %v2502 = vcvt.s32.f32 %v2470
      %v2503 = vcvt.s32.f32 %v2471
      %v2504 = vcvt.s32.f32 %v2472
      %v2505 = vcvt.s32.f32 %v2473
      %v2506 = vcvt.s32.f32 %v2474
      %v2507 = vcvt.s32.f32 %v2475
      %v2508 = vcvt.s32.f32 %v2476
      %v2509 = vcvt.s32.f32 %v2477
      %v2510 = vcvt.s32.f32 %v2478
      %v2511 = vcvt.s32.f32 %v2479
      %v2512 = vcvt.s32.f32 %v2480
      %v2513 = vcvt.s32.f32 %v2481
      %v2514 = vcvt.s32.f32 %v2482
      %v2515 = vcvt.s32.f32 %v2483
      %v2516 = vcvt.s32.f32 %v2484
      %v2517 = vcvt.s32.f32 %v2485
      %v2518 = vcvt.s32.f32 %v2486
      %v2519 = vcvt.s32.f32 %v2487
      %v2520 = vcvt.s32.f32 %v2488
      %v2521 = vcvt.s32.f32 %v2489
      %v2522 = vcvt.s32.f32 %v2490
      %v2523 = vcvt.s32.f32 %v2491
      %v2524 = vpack.c.bf16 %v2492, %v2492
      %v2525 = vpack.c.bf16 %v2493, %v2493
      %v2526 = vpack.c.bf16 %v2494, %v2494
      %v2527 = vpack.c.bf16 %v2495, %v2495
      %v2528 = vpack.c.bf16 %v2496, %v2496
      %v2529 = vpack.c.bf16 %v2497, %v2497
      %v2530 = vpack.c.bf16 %v2498, %v2498
      %v2531 = vpack.c.bf16 %v2499, %v2499
      %v2532 = vpack.c.bf16 %v2500, %v2500
      %v2533 = vpack.c.bf16 %v2501, %v2501
      %v2534 = vpack.c.bf16 %v2502, %v2502
      %v2535 = vpack.c.bf16 %v2503, %v2503
      %v2536 = vpack.c.bf16 %v2504, %v2504
      %v2537 = vpack.c.bf16 %v2505, %v2505
      %v2538 = vpack.c.bf16 %v2506, %v2506
      %v2539 = vpack.c.bf16 %v2507, %v2507
      %v2540 = vpack.c.bf16 %v2508, %v2508
      %v2541 = vpack.c.bf16 %v2509, %v2509
      %v2542 = vpack.c.bf16 %v2510, %v2510
      %v2543 = vpack.c.bf16 %v2511, %v2511
      %v2544 = vpack.c.bf16 %v2512, %v2512
      %v2545 = vpack.c.bf16 %v2513, %v2513
      %v2546 = vpack.c.bf16 %v2514, %v2514
      %v2547 = vpack.c.bf16 %v2515, %v2515
      %v2548 = vpack.c.bf16 %v2516, %v2516
      %v2549 = vpack.c.bf16 %v2517, %v2517
      %v2550 = vpack.c.bf16 %v2518, %v2518
      %v2551 = vpack.c.bf16 %v2519, %v2519
      %v2552 = vpack.c.bf16 %v2520, %v2520
      %v2553 = vpack.c.bf16 %v2521, %v2521
      %v2554 = vpack.c.bf16 %v2522, %v2522
      %v2555 = vpack.c.bf16 %v2523, %v2523
      %vm2556 = vcmp.eq.f32.partialorder %v1621, 7.0
      %vm2557 = vcmp.eq.f32.partialorder %v1622, 7.0
      %vm2558 = vcmp.eq.f32.partialorder %v1623, 7.0
      %vm2559 = vcmp.eq.f32.partialorder %v1624, 7.0
      %vm2560 = vcmp.eq.f32.partialorder %v1625, 7.0
      %vm2561 = vcmp.eq.f32.partialorder %v1626, 7.0
      %vm2562 = vcmp.eq.f32.partialorder %v1627, 7.0
      %vm2563 = vcmp.eq.f32.partialorder %v1628, 7.0
      %vm2564 = vcmp.eq.f32.partialorder %v1629, 7.0
      %vm2565 = vcmp.eq.f32.partialorder %v1630, 7.0
      %vm2566 = vcmp.eq.f32.partialorder %v1631, 7.0
      %vm2567 = vcmp.eq.f32.partialorder %v1632, 7.0
      %vm2568 = vcmp.eq.f32.partialorder %v1633, 7.0
      %vm2569 = vcmp.eq.f32.partialorder %v1634, 7.0
      %vm2570 = vcmp.eq.f32.partialorder %v1635, 7.0
      %vm2571 = vcmp.eq.f32.partialorder %v1636, 7.0
      %vm2572 = vcmp.eq.f32.partialorder %v1637, 7.0
      %vm2573 = vcmp.eq.f32.partialorder %v1638, 7.0
      %vm2574 = vcmp.eq.f32.partialorder %v1639, 7.0
      %vm2575 = vcmp.eq.f32.partialorder %v1640, 7.0
      %vm2576 = vcmp.eq.f32.partialorder %v1641, 7.0
      %vm2577 = vcmp.eq.f32.partialorder %v1642, 7.0
      %vm2578 = vcmp.eq.f32.partialorder %v1643, 7.0
      %vm2579 = vcmp.eq.f32.partialorder %v1644, 7.0
      %vm2580 = vcmp.eq.f32.partialorder %v1645, 7.0
      %vm2581 = vcmp.eq.f32.partialorder %v1646, 7.0
      %vm2582 = vcmp.eq.f32.partialorder %v1647, 7.0
      %vm2583 = vcmp.eq.f32.partialorder %v1648, 7.0
      %vm2584 = vcmp.eq.f32.partialorder %v1649, 7.0
      %vm2585 = vcmp.eq.f32.partialorder %v1650, 7.0
      %vm2586 = vcmp.eq.f32.partialorder %v1651, 7.0
      %vm2587 = vcmp.eq.f32.partialorder %v1652, 7.0
      %v2588 = vsel %vm2556, 1, 0
      %v2589 = vsel %vm2557, 1, 0
      %v2590 = vsel %vm2558, 1, 0
      %v2591 = vsel %vm2559, 1, 0
      %v2592 = vsel %vm2560, 1, 0
      %v2593 = vsel %vm2561, 1, 0
      %v2594 = vsel %vm2562, 1, 0
      %v2595 = vsel %vm2563, 1, 0
      %v2596 = vsel %vm2564, 1, 0
      %v2597 = vsel %vm2565, 1, 0
      %v2598 = vsel %vm2566, 1, 0
      %v2599 = vsel %vm2567, 1, 0
      %v2600 = vsel %vm2568, 1, 0
      %v2601 = vsel %vm2569, 1, 0
      %v2602 = vsel %vm2570, 1, 0
      %v2603 = vsel %vm2571, 1, 0
      %v2604 = vsel %vm2572, 1, 0
      %v2605 = vsel %vm2573, 1, 0
      %v2606 = vsel %vm2574, 1, 0
      %v2607 = vsel %vm2575, 1, 0
      %v2608 = vsel %vm2576, 1, 0
      %v2609 = vsel %vm2577, 1, 0
      %v2610 = vsel %vm2578, 1, 0
      %v2611 = vsel %vm2579, 1, 0
      %v2612 = vsel %vm2580, 1, 0
      %v2613 = vsel %vm2581, 1, 0
      %v2614 = vsel %vm2582, 1, 0
      %v2615 = vsel %vm2583, 1, 0
      %v2616 = vsel %vm2584, 1, 0
      %v2617 = vsel %vm2585, 1, 0
      %v2618 = vsel %vm2586, 1, 0
      %v2619 = vsel %vm2587, 1, 0
      %v2620 = vcvt.s32.f32 %v2588
      %v2621 = vcvt.s32.f32 %v2589
      %v2622 = vcvt.s32.f32 %v2590
      %v2623 = vcvt.s32.f32 %v2591
      %v2624 = vcvt.s32.f32 %v2592
      %v2625 = vcvt.s32.f32 %v2593
      %v2626 = vcvt.s32.f32 %v2594
      %v2627 = vcvt.s32.f32 %v2595
      %v2628 = vcvt.s32.f32 %v2596
      %v2629 = vcvt.s32.f32 %v2597
      %v2630 = vcvt.s32.f32 %v2598
      %v2631 = vcvt.s32.f32 %v2599
      %v2632 = vcvt.s32.f32 %v2600
      %v2633 = vcvt.s32.f32 %v2601
      %v2634 = vcvt.s32.f32 %v2602
      %v2635 = vcvt.s32.f32 %v2603
      %v2636 = vcvt.s32.f32 %v2604
      %v2637 = vcvt.s32.f32 %v2605
      %v2638 = vcvt.s32.f32 %v2606
      %v2639 = vcvt.s32.f32 %v2607
      %v2640 = vcvt.s32.f32 %v2608
      %v2641 = vcvt.s32.f32 %v2609
      %v2642 = vcvt.s32.f32 %v2610
      %v2643 = vcvt.s32.f32 %v2611
      %v2644 = vcvt.s32.f32 %v2612
      %v2645 = vcvt.s32.f32 %v2613
      %v2646 = vcvt.s32.f32 %v2614
      %v2647 = vcvt.s32.f32 %v2615
      %v2648 = vcvt.s32.f32 %v2616
      %v2649 = vcvt.s32.f32 %v2617
      %v2650 = vcvt.s32.f32 %v2618
      %v2651 = vcvt.s32.f32 %v2619
      %v2652 = vpack.c.bf16 %v2620, %v2620
      %v2653 = vpack.c.bf16 %v2621, %v2621
      %v2654 = vpack.c.bf16 %v2622, %v2622
      %v2655 = vpack.c.bf16 %v2623, %v2623
      %v2656 = vpack.c.bf16 %v2624, %v2624
      %v2657 = vpack.c.bf16 %v2625, %v2625
      %v2658 = vpack.c.bf16 %v2626, %v2626
      %v2659 = vpack.c.bf16 %v2627, %v2627
      %v2660 = vpack.c.bf16 %v2628, %v2628
      %v2661 = vpack.c.bf16 %v2629, %v2629
      %v2662 = vpack.c.bf16 %v2630, %v2630
      %v2663 = vpack.c.bf16 %v2631, %v2631
      %v2664 = vpack.c.bf16 %v2632, %v2632
      %v2665 = vpack.c.bf16 %v2633, %v2633
      %v2666 = vpack.c.bf16 %v2634, %v2634
      %v2667 = vpack.c.bf16 %v2635, %v2635
      %v2668 = vpack.c.bf16 %v2636, %v2636
      %v2669 = vpack.c.bf16 %v2637, %v2637
      %v2670 = vpack.c.bf16 %v2638, %v2638
      %v2671 = vpack.c.bf16 %v2639, %v2639
      %v2672 = vpack.c.bf16 %v2640, %v2640
      %v2673 = vpack.c.bf16 %v2641, %v2641
      %v2674 = vpack.c.bf16 %v2642, %v2642
      %v2675 = vpack.c.bf16 %v2643, %v2643
      %v2676 = vpack.c.bf16 %v2644, %v2644
      %v2677 = vpack.c.bf16 %v2645, %v2645
      %v2678 = vpack.c.bf16 %v2646, %v2646
      %v2679 = vpack.c.bf16 %v2647, %v2647
      %v2680 = vpack.c.bf16 %v2648, %v2648
      %v2681 = vpack.c.bf16 %v2649, %v2649
      %v2682 = vpack.c.bf16 %v2650, %v2650
      %v2683 = vpack.c.bf16 %v2651, %v2651
      %v2716 = vunpack.c.l.b16 %v1756
      %v2717 = vunpack.c.l.b16 %v1757
      %v2718 = vunpack.c.l.b16 %v1758
      %v2719 = vunpack.c.l.b16 %v1759
      %v2720 = vunpack.c.l.b16 %v1760
      %v2721 = vunpack.c.l.b16 %v1761
      %v2722 = vunpack.c.l.b16 %v1762
      %v2723 = vunpack.c.l.b16 %v1763
      %v2724 = vunpack.c.l.b16 %v1764
      %v2725 = vunpack.c.l.b16 %v1765
      %v2726 = vunpack.c.l.b16 %v1766
      %v2727 = vunpack.c.l.b16 %v1767
      %v2728 = vunpack.c.l.b16 %v1768
      %v2729 = vunpack.c.l.b16 %v1769
      %v2730 = vunpack.c.l.b16 %v1770
      %v2731 = vunpack.c.l.b16 %v1771
      %v2732 = vunpack.c.l.b16 %v1772
      %v2733 = vunpack.c.l.b16 %v1773
      %v2734 = vunpack.c.l.b16 %v1774
      %v2735 = vunpack.c.l.b16 %v1775
      %v2736 = vunpack.c.l.b16 %v1776
      %v2737 = vunpack.c.l.b16 %v1777
      %v2738 = vunpack.c.l.b16 %v1778
      %v2739 = vunpack.c.l.b16 %v1779
      %v2740 = vunpack.c.l.b16 %v1780
      %v2741 = vunpack.c.l.b16 %v1781
      %v2742 = vunpack.c.l.b16 %v1782
      %v2743 = vunpack.c.l.b16 %v1783
      %v2744 = vunpack.c.l.b16 %v1784
      %v2745 = vunpack.c.l.b16 %v1785
      %v2746 = vunpack.c.l.b16 %v1786
      %v2747 = vunpack.c.l.b16 %v1787
      %v2748 = vpack.c.b16 %v2717, %v2716
      %v2749 = vpack.c.b16 %v2719, %v2718
      %v2750 = vpack.c.b16 %v2721, %v2720
      %v2751 = vpack.c.b16 %v2723, %v2722
      %v2752 = vpack.c.b16 %v2725, %v2724
      %v2753 = vpack.c.b16 %v2727, %v2726
      %v2754 = vpack.c.b16 %v2729, %v2728
      %v2755 = vpack.c.b16 %v2731, %v2730
      %v2756 = vpack.c.b16 %v2733, %v2732
      %v2757 = vpack.c.b16 %v2735, %v2734
      %v2758 = vpack.c.b16 %v2737, %v2736
      %v2759 = vpack.c.b16 %v2739, %v2738
      %v2760 = vpack.c.b16 %v2741, %v2740
      %v2761 = vpack.c.b16 %v2743, %v2742
      %v2762 = vpack.c.b16 %v2745, %v2744
      %v2763 = vpack.c.b16 %v2747, %v2746
      %v2812 = vunpack.c.l.b16 %v1884
      %v2813 = vunpack.c.l.b16 %v1885
      %v2814 = vunpack.c.l.b16 %v1886
      %v2815 = vunpack.c.l.b16 %v1887
      %v2816 = vunpack.c.l.b16 %v1888
      %v2817 = vunpack.c.l.b16 %v1889
      %v2818 = vunpack.c.l.b16 %v1890
      %v2819 = vunpack.c.l.b16 %v1891
      %v2820 = vunpack.c.l.b16 %v1892
      %v2821 = vunpack.c.l.b16 %v1893
      %v2822 = vunpack.c.l.b16 %v1894
      %v2823 = vunpack.c.l.b16 %v1895
      %v2824 = vunpack.c.l.b16 %v1896
      %v2825 = vunpack.c.l.b16 %v1897
      %v2826 = vunpack.c.l.b16 %v1898
      %v2827 = vunpack.c.l.b16 %v1899
      %v2828 = vunpack.c.l.b16 %v1900
      %v2829 = vunpack.c.l.b16 %v1901
      %v2830 = vunpack.c.l.b16 %v1902
      %v2831 = vunpack.c.l.b16 %v1903
      %v2832 = vunpack.c.l.b16 %v1904
      %v2833 = vunpack.c.l.b16 %v1905
      %v2834 = vunpack.c.l.b16 %v1906
      %v2835 = vunpack.c.l.b16 %v1907
      %v2836 = vunpack.c.l.b16 %v1908
      %v2837 = vunpack.c.l.b16 %v1909
      %v2838 = vunpack.c.l.b16 %v1910
      %v2839 = vunpack.c.l.b16 %v1911
      %v2840 = vunpack.c.l.b16 %v1912
      %v2841 = vunpack.c.l.b16 %v1913
      %v2842 = vunpack.c.l.b16 %v1914
      %v2843 = vunpack.c.l.b16 %v1915
      %v2844 = vpack.c.b16 %v2813, %v2812
      %v2845 = vpack.c.b16 %v2815, %v2814
      %v2846 = vpack.c.b16 %v2817, %v2816
      %v2847 = vpack.c.b16 %v2819, %v2818
      %v2848 = vpack.c.b16 %v2821, %v2820
      %v2849 = vpack.c.b16 %v2823, %v2822
      %v2850 = vpack.c.b16 %v2825, %v2824
      %v2851 = vpack.c.b16 %v2827, %v2826
      %v2852 = vpack.c.b16 %v2829, %v2828
      %v2853 = vpack.c.b16 %v2831, %v2830
      %v2854 = vpack.c.b16 %v2833, %v2832
      %v2855 = vpack.c.b16 %v2835, %v2834
      %v2856 = vpack.c.b16 %v2837, %v2836
      %v2857 = vpack.c.b16 %v2839, %v2838
      %v2858 = vpack.c.b16 %v2841, %v2840
      %v2859 = vpack.c.b16 %v2843, %v2842
      %v2908 = vunpack.c.l.b16 %v2012
      %v2909 = vunpack.c.l.b16 %v2013
      %v2910 = vunpack.c.l.b16 %v2014
      %v2911 = vunpack.c.l.b16 %v2015
      %v2912 = vunpack.c.l.b16 %v2016
      %v2913 = vunpack.c.l.b16 %v2017
      %v2914 = vunpack.c.l.b16 %v2018
      %v2915 = vunpack.c.l.b16 %v2019
      %v2916 = vunpack.c.l.b16 %v2020
      %v2917 = vunpack.c.l.b16 %v2021
      %v2918 = vunpack.c.l.b16 %v2022
      %v2919 = vunpack.c.l.b16 %v2023
      %v2920 = vunpack.c.l.b16 %v2024
      %v2921 = vunpack.c.l.b16 %v2025
      %v2922 = vunpack.c.l.b16 %v2026
      %v2923 = vunpack.c.l.b16 %v2027
      %v2924 = vunpack.c.l.b16 %v2028
      %v2925 = vunpack.c.l.b16 %v2029
      %v2926 = vunpack.c.l.b16 %v2030
      %v2927 = vunpack.c.l.b16 %v2031
      %v2928 = vunpack.c.l.b16 %v2032
      %v2929 = vunpack.c.l.b16 %v2033
      %v2930 = vunpack.c.l.b16 %v2034
      %v2931 = vunpack.c.l.b16 %v2035
      %v2932 = vunpack.c.l.b16 %v2036
      %v2933 = vunpack.c.l.b16 %v2037
      %v2934 = vunpack.c.l.b16 %v2038
      %v2935 = vunpack.c.l.b16 %v2039
      %v2936 = vunpack.c.l.b16 %v2040
      %v2937 = vunpack.c.l.b16 %v2041
      %v2938 = vunpack.c.l.b16 %v2042
      %v2939 = vunpack.c.l.b16 %v2043
      %v2940 = vpack.c.b16 %v2909, %v2908
      %v2941 = vpack.c.b16 %v2911, %v2910
      %v2942 = vpack.c.b16 %v2913, %v2912
      %v2943 = vpack.c.b16 %v2915, %v2914
      %v2944 = vpack.c.b16 %v2917, %v2916
      %v2945 = vpack.c.b16 %v2919, %v2918
      %v2946 = vpack.c.b16 %v2921, %v2920
      %v2947 = vpack.c.b16 %v2923, %v2922
      %v2948 = vpack.c.b16 %v2925, %v2924
      %v2949 = vpack.c.b16 %v2927, %v2926
      %v2950 = vpack.c.b16 %v2929, %v2928
      %v2951 = vpack.c.b16 %v2931, %v2930
      %v2952 = vpack.c.b16 %v2933, %v2932
      %v2953 = vpack.c.b16 %v2935, %v2934
      %v2954 = vpack.c.b16 %v2937, %v2936
      %v2955 = vpack.c.b16 %v2939, %v2938
      %v3004 = vunpack.c.l.b16 %v2140
      %v3005 = vunpack.c.l.b16 %v2141
      %v3006 = vunpack.c.l.b16 %v2142
      %v3007 = vunpack.c.l.b16 %v2143
      %v3008 = vunpack.c.l.b16 %v2144
      %v3009 = vunpack.c.l.b16 %v2145
      %v3010 = vunpack.c.l.b16 %v2146
      %v3011 = vunpack.c.l.b16 %v2147
      %v3012 = vunpack.c.l.b16 %v2148
      %v3013 = vunpack.c.l.b16 %v2149
      %v3014 = vunpack.c.l.b16 %v2150
      %v3015 = vunpack.c.l.b16 %v2151
      %v3016 = vunpack.c.l.b16 %v2152
      %v3017 = vunpack.c.l.b16 %v2153
      %v3018 = vunpack.c.l.b16 %v2154
      %v3019 = vunpack.c.l.b16 %v2155
      %v3020 = vunpack.c.l.b16 %v2156
      %v3021 = vunpack.c.l.b16 %v2157
      %v3022 = vunpack.c.l.b16 %v2158
      %v3023 = vunpack.c.l.b16 %v2159
      %v3024 = vunpack.c.l.b16 %v2160
      %v3025 = vunpack.c.l.b16 %v2161
      %v3026 = vunpack.c.l.b16 %v2162
      %v3027 = vunpack.c.l.b16 %v2163
      %v3028 = vunpack.c.l.b16 %v2164
      %v3029 = vunpack.c.l.b16 %v2165
      %v3030 = vunpack.c.l.b16 %v2166
      %v3031 = vunpack.c.l.b16 %v2167
      %v3032 = vunpack.c.l.b16 %v2168
      %v3033 = vunpack.c.l.b16 %v2169
      %v3034 = vunpack.c.l.b16 %v2170
      %v3035 = vunpack.c.l.b16 %v2171
      %v3036 = vpack.c.b16 %v3005, %v3004
      %v3037 = vpack.c.b16 %v3007, %v3006
      %v3038 = vpack.c.b16 %v3009, %v3008
      %v3039 = vpack.c.b16 %v3011, %v3010
      %v3040 = vpack.c.b16 %v3013, %v3012
      %v3041 = vpack.c.b16 %v3015, %v3014
      %v3042 = vpack.c.b16 %v3017, %v3016
      %v3043 = vpack.c.b16 %v3019, %v3018
      %v3044 = vpack.c.b16 %v3021, %v3020
      %v3045 = vpack.c.b16 %v3023, %v3022
      %v3046 = vpack.c.b16 %v3025, %v3024
      %v3047 = vpack.c.b16 %v3027, %v3026
      %v3048 = vpack.c.b16 %v3029, %v3028
      %v3049 = vpack.c.b16 %v3031, %v3030
      %v3050 = vpack.c.b16 %v3033, %v3032
      %v3051 = vpack.c.b16 %v3035, %v3034
      %v3100 = vunpack.c.l.b16 %v2268
      %v3101 = vunpack.c.l.b16 %v2269
      %v3102 = vunpack.c.l.b16 %v2270
      %v3103 = vunpack.c.l.b16 %v2271
      %v3104 = vunpack.c.l.b16 %v2272
      %v3105 = vunpack.c.l.b16 %v2273
      %v3106 = vunpack.c.l.b16 %v2274
      %v3107 = vunpack.c.l.b16 %v2275
      %v3108 = vunpack.c.l.b16 %v2276
      %v3109 = vunpack.c.l.b16 %v2277
      %v3110 = vunpack.c.l.b16 %v2278
      %v3111 = vunpack.c.l.b16 %v2279
      %v3112 = vunpack.c.l.b16 %v2280
      %v3113 = vunpack.c.l.b16 %v2281
      %v3114 = vunpack.c.l.b16 %v2282
      %v3115 = vunpack.c.l.b16 %v2283
      %v3116 = vunpack.c.l.b16 %v2284
      %v3117 = vunpack.c.l.b16 %v2285
      %v3118 = vunpack.c.l.b16 %v2286
      %v3119 = vunpack.c.l.b16 %v2287
      %v3120 = vunpack.c.l.b16 %v2288
      %v3121 = vunpack.c.l.b16 %v2289
      %v3122 = vunpack.c.l.b16 %v2290
      %v3123 = vunpack.c.l.b16 %v2291
      %v3124 = vunpack.c.l.b16 %v2292
      %v3125 = vunpack.c.l.b16 %v2293
      %v3126 = vunpack.c.l.b16 %v2294
      %v3127 = vunpack.c.l.b16 %v2295
      %v3128 = vunpack.c.l.b16 %v2296
      %v3129 = vunpack.c.l.b16 %v2297
      %v3130 = vunpack.c.l.b16 %v2298
      %v3131 = vunpack.c.l.b16 %v2299
      %v3132 = vpack.c.b16 %v3101, %v3100
      %v3133 = vpack.c.b16 %v3103, %v3102
      %v3134 = vpack.c.b16 %v3105, %v3104
      %v3135 = vpack.c.b16 %v3107, %v3106
      %v3136 = vpack.c.b16 %v3109, %v3108
      %v3137 = vpack.c.b16 %v3111, %v3110
      %v3138 = vpack.c.b16 %v3113, %v3112
      %v3139 = vpack.c.b16 %v3115, %v3114
      %v3140 = vpack.c.b16 %v3117, %v3116
      %v3141 = vpack.c.b16 %v3119, %v3118
      %v3142 = vpack.c.b16 %v3121, %v3120
      %v3143 = vpack.c.b16 %v3123, %v3122
      %v3144 = vpack.c.b16 %v3125, %v3124
      %v3145 = vpack.c.b16 %v3127, %v3126
      %v3146 = vpack.c.b16 %v3129, %v3128
      %v3147 = vpack.c.b16 %v3131, %v3130
      %v3196 = vunpack.c.l.b16 %v2396
      %v3197 = vunpack.c.l.b16 %v2397
      %v3198 = vunpack.c.l.b16 %v2398
      %v3199 = vunpack.c.l.b16 %v2399
      %v3200 = vunpack.c.l.b16 %v2400
      %v3201 = vunpack.c.l.b16 %v2401
      %v3202 = vunpack.c.l.b16 %v2402
      %v3203 = vunpack.c.l.b16 %v2403
      %v3204 = vunpack.c.l.b16 %v2404
      %v3205 = vunpack.c.l.b16 %v2405
      %v3206 = vunpack.c.l.b16 %v2406
      %v3207 = vunpack.c.l.b16 %v2407
      %v3208 = vunpack.c.l.b16 %v2408
      %v3209 = vunpack.c.l.b16 %v2409
      %v3210 = vunpack.c.l.b16 %v2410
      %v3211 = vunpack.c.l.b16 %v2411
      %v3212 = vunpack.c.l.b16 %v2412
      %v3213 = vunpack.c.l.b16 %v2413
      %v3214 = vunpack.c.l.b16 %v2414
      %v3215 = vunpack.c.l.b16 %v2415
      %v3216 = vunpack.c.l.b16 %v2416
      %v3217 = vunpack.c.l.b16 %v2417
      %v3218 = vunpack.c.l.b16 %v2418
      %v3219 = vunpack.c.l.b16 %v2419
      %v3220 = vunpack.c.l.b16 %v2420
      %v3221 = vunpack.c.l.b16 %v2421
      %v3222 = vunpack.c.l.b16 %v2422
      %v3223 = vunpack.c.l.b16 %v2423
      %v3224 = vunpack.c.l.b16 %v2424
      %v3225 = vunpack.c.l.b16 %v2425
      %v3226 = vunpack.c.l.b16 %v2426
      %v3227 = vunpack.c.l.b16 %v2427
      %v3228 = vpack.c.b16 %v3197, %v3196
      %v3229 = vpack.c.b16 %v3199, %v3198
      %v3230 = vpack.c.b16 %v3201, %v3200
      %v3231 = vpack.c.b16 %v3203, %v3202
      %v3232 = vpack.c.b16 %v3205, %v3204
      %v3233 = vpack.c.b16 %v3207, %v3206
      %v3234 = vpack.c.b16 %v3209, %v3208
      %v3235 = vpack.c.b16 %v3211, %v3210
      %v3236 = vpack.c.b16 %v3213, %v3212
      %v3237 = vpack.c.b16 %v3215, %v3214
      %v3238 = vpack.c.b16 %v3217, %v3216
      %v3239 = vpack.c.b16 %v3219, %v3218
      %v3240 = vpack.c.b16 %v3221, %v3220
      %v3241 = vpack.c.b16 %v3223, %v3222
      %v3242 = vpack.c.b16 %v3225, %v3224
      %v3243 = vpack.c.b16 %v3227, %v3226
      %v3292 = vunpack.c.l.b16 %v2524
      %v3293 = vunpack.c.l.b16 %v2525
      %v3294 = vunpack.c.l.b16 %v2526
      %v3295 = vunpack.c.l.b16 %v2527
      %v3296 = vunpack.c.l.b16 %v2528
      %v3297 = vunpack.c.l.b16 %v2529
      %v3298 = vunpack.c.l.b16 %v2530
      %v3299 = vunpack.c.l.b16 %v2531
      %v3300 = vunpack.c.l.b16 %v2532
      %v3301 = vunpack.c.l.b16 %v2533
      %v3302 = vunpack.c.l.b16 %v2534
      %v3303 = vunpack.c.l.b16 %v2535
      %v3304 = vunpack.c.l.b16 %v2536
      %v3305 = vunpack.c.l.b16 %v2537
      %v3306 = vunpack.c.l.b16 %v2538
      %v3307 = vunpack.c.l.b16 %v2539
      %v3308 = vunpack.c.l.b16 %v2540
      %v3309 = vunpack.c.l.b16 %v2541
      %v3310 = vunpack.c.l.b16 %v2542
      %v3311 = vunpack.c.l.b16 %v2543
      %v3312 = vunpack.c.l.b16 %v2544
      %v3313 = vunpack.c.l.b16 %v2545
      %v3314 = vunpack.c.l.b16 %v2546
      %v3315 = vunpack.c.l.b16 %v2547
      %v3316 = vunpack.c.l.b16 %v2548
      %v3317 = vunpack.c.l.b16 %v2549
      %v3318 = vunpack.c.l.b16 %v2550
      %v3319 = vunpack.c.l.b16 %v2551
      %v3320 = vunpack.c.l.b16 %v2552
      %v3321 = vunpack.c.l.b16 %v2553
      %v3322 = vunpack.c.l.b16 %v2554
      %v3323 = vunpack.c.l.b16 %v2555
      %v3324 = vpack.c.b16 %v3293, %v3292
      %v3325 = vpack.c.b16 %v3295, %v3294
      %v3326 = vpack.c.b16 %v3297, %v3296
      %v3327 = vpack.c.b16 %v3299, %v3298
      %v3328 = vpack.c.b16 %v3301, %v3300
      %v3329 = vpack.c.b16 %v3303, %v3302
      %v3330 = vpack.c.b16 %v3305, %v3304
      %v3331 = vpack.c.b16 %v3307, %v3306
      %v3332 = vpack.c.b16 %v3309, %v3308
      %v3333 = vpack.c.b16 %v3311, %v3310
      %v3334 = vpack.c.b16 %v3313, %v3312
      %v3335 = vpack.c.b16 %v3315, %v3314
      %v3336 = vpack.c.b16 %v3317, %v3316
      %v3337 = vpack.c.b16 %v3319, %v3318
      %v3338 = vpack.c.b16 %v3321, %v3320
      %v3339 = vpack.c.b16 %v3323, %v3322
      %v3388 = vunpack.c.l.b16 %v2652
      %v3389 = vunpack.c.l.b16 %v2653
      %v3390 = vunpack.c.l.b16 %v2654
      %v3391 = vunpack.c.l.b16 %v2655
      %v3392 = vunpack.c.l.b16 %v2656
      %v3393 = vunpack.c.l.b16 %v2657
      %v3394 = vunpack.c.l.b16 %v2658
      %v3395 = vunpack.c.l.b16 %v2659
      %v3396 = vunpack.c.l.b16 %v2660
      %v3397 = vunpack.c.l.b16 %v2661
      %v3398 = vunpack.c.l.b16 %v2662
      %v3399 = vunpack.c.l.b16 %v2663
      %v3400 = vunpack.c.l.b16 %v2664
      %v3401 = vunpack.c.l.b16 %v2665
      %v3402 = vunpack.c.l.b16 %v2666
      %v3403 = vunpack.c.l.b16 %v2667
      %v3404 = vunpack.c.l.b16 %v2668
      %v3405 = vunpack.c.l.b16 %v2669
      %v3406 = vunpack.c.l.b16 %v2670
      %v3407 = vunpack.c.l.b16 %v2671
      %v3408 = vunpack.c.l.b16 %v2672
      %v3409 = vunpack.c.l.b16 %v2673
      %v3410 = vunpack.c.l.b16 %v2674
      %v3411 = vunpack.c.l.b16 %v2675
      %v3412 = vunpack.c.l.b16 %v2676
      %v3413 = vunpack.c.l.b16 %v2677
      %v3414 = vunpack.c.l.b16 %v2678
      %v3415 = vunpack.c.l.b16 %v2679
      %v3416 = vunpack.c.l.b16 %v2680
      %v3417 = vunpack.c.l.b16 %v2681
      %v3418 = vunpack.c.l.b16 %v2682
      %v3419 = vunpack.c.l.b16 %v2683
      %v3420 = vpack.c.b16 %v3389, %v3388
      %v3421 = vpack.c.b16 %v3391, %v3390
      %v3422 = vpack.c.b16 %v3393, %v3392
      %v3423 = vpack.c.b16 %v3395, %v3394
      %v3424 = vpack.c.b16 %v3397, %v3396
      %v3425 = vpack.c.b16 %v3399, %v3398
      %v3426 = vpack.c.b16 %v3401, %v3400
      %v3427 = vpack.c.b16 %v3403, %v3402
      %v3428 = vpack.c.b16 %v3405, %v3404
      %v3429 = vpack.c.b16 %v3407, %v3406
      %v3430 = vpack.c.b16 %v3409, %v3408
      %v3431 = vpack.c.b16 %v3411, %v3410
      %v3432 = vpack.c.b16 %v3413, %v3412
      %v3433 = vpack.c.b16 %v3415, %v3414
      %v3434 = vpack.c.b16 %v3417, %v3416
      %v3435 = vpack.c.b16 %v3419, %v3418
      %v3452 = vld [vmem:[#allocation2] sm:$0xff]
      %v3453 = vld [vmem:[#allocation2 + $0x8] sm:$0xff]
      %v3454 = vld [vmem:[#allocation2 + $0x10] sm:$0xff]
      %v3455 = vld [vmem:[#allocation2 + $0x18] sm:$0xff]
      %v3456 = vld [vmem:[#allocation2 + $0x20] sm:$0xff]
      %v3457 = vld [vmem:[#allocation2 + $0x28] sm:$0xff]
      %v3458 = vld [vmem:[#allocation2 + $0x30] sm:$0xff]
      %v3459 = vld [vmem:[#allocation2 + $0x38] sm:$0xff]
      %v3460 = vld [vmem:[#allocation2 + $0x40] sm:$0x7]
      %v3461 = vld [vmem:[#allocation2 + $0x48] sm:$0x7]
      %v3462 = vld [vmem:[#allocation2 + $0x50] sm:$0x7]
      %v3463 = vld [vmem:[#allocation2 + $0x58] sm:$0x7]
      %v3464 = vld [vmem:[#allocation2 + $0x60] sm:$0x7]
      %v3465 = vld [vmem:[#allocation2 + $0x68] sm:$0x7]
      %v3466 = vld [vmem:[#allocation2 + $0x70] sm:$0x7]
      %v3467 = vld [vmem:[#allocation2 + $0x78] sm:$0x7]
      %v3470 = vunpack.c.l.b16 %v394
      %v3471 = vunpack.c.h.b16 %v394
      %v3472 = vunpack.c.l.b16 %v395
      %v3473 = vunpack.c.h.b16 %v395
      %v3474 = vpack.c.b16 %v3472, %v3470
      %v3475 = vpack.c.b16 %v3473, %v3471
      %3478 = vmatpush.bf16.msra.mxu0 %v2755
      %3479 = vmatpush.bf16.msra.mxu0 %v2754
      %3480 = vmatpush.bf16.msra.mxu0 %v2753
      %3481 = vmatpush.bf16.msra.mxu0 %v2752
      %3482 = vmatpush.bf16.msra.mxu0 %v2751
      %3483 = vmatpush.bf16.msra.mxu0 %v2750
      %3484 = vmatpush.bf16.msra.mxu0 %v2749
      %3485 = vmatpush.bf16.msra.mxu0 %v2748
      %3486 = vmatmul.bf16.gmra.mxu0 %v3474
      %v3487 = vpop.f32.mrf.mxu0
      %v3488 = vadd.f32 0.0, %v3487
      %v3489 = vpop.f32.mrf.mxu0
      %v3490 = vadd.f32 0.0, %v3489
      %3491 = vdwg.mxu0
      %3492 = vmatpush.bf16.msra.mxu0 %v2763
      %3493 = vmatpush.bf16.msra.mxu0 %v2762
      %3494 = vmatpush.bf16.msra.mxu0 %v2761
      %3495 = vmatpush.bf16.msra.mxu0 %v2760
      %3496 = vmatpush.bf16.msra.mxu0 %v2759
      %3497 = vmatpush.bf16.msra.mxu0 %v2758
      %3498 = vmatpush.bf16.msra.mxu0 %v2757
      %3499 = vmatpush.bf16.msra.mxu0 %v2756
      %3500 = vmatmul.bf16.gmra.mxu0 %v3475
      %v3501 = vpop.f32.mrf.mxu0
      %v3502 = vadd.f32 %v3488, %v3501
      %v3503 = vpop.f32.mrf.mxu0
      %v3504 = vadd.f32 %v3490, %v3503
      %3505 = vdwg.mxu0
      %3506 = vmatpush.bf16.msra.mxu0 %v2851
      %3507 = vmatpush.bf16.msra.mxu0 %v2850
      %3508 = vmatpush.bf16.msra.mxu0 %v2849
      %3509 = vmatpush.bf16.msra.mxu0 %v2848
      %3510 = vmatpush.bf16.msra.mxu0 %v2847
      %3511 = vmatpush.bf16.msra.mxu0 %v2846
      %3512 = vmatpush.bf16.msra.mxu0 %v2845
      %3513 = vmatpush.bf16.msra.mxu0 %v2844
      %3514 = vmatmul.bf16.gmra.mxu0 %v3474
      %v3515 = vpop.f32.mrf.mxu0
      %v3516 = vadd.f32 0.0, %v3515
      %v3517 = vpop.f32.mrf.mxu0
      %v3518 = vadd.f32 0.0, %v3517
      %3519 = vdwg.mxu0
      %3520 = vmatpush.bf16.msra.mxu0 %v2859
      %3521 = vmatpush.bf16.msra.mxu0 %v2858
      %3522 = vmatpush.bf16.msra.mxu0 %v2857
      %3523 = vmatpush.bf16.msra.mxu0 %v2856
      %3524 = vmatpush.bf16.msra.mxu0 %v2855
      %3525 = vmatpush.bf16.msra.mxu0 %v2854
      %3526 = vmatpush.bf16.msra.mxu0 %v2853
      %3527 = vmatpush.bf16.msra.mxu0 %v2852
      %3528 = vmatmul.bf16.gmra.mxu0 %v3475
      %v3529 = vpop.f32.mrf.mxu0
      %v3530 = vadd.f32 %v3516, %v3529
      %v3531 = vpop.f32.mrf.mxu0
      %v3532 = vadd.f32 %v3518, %v3531
      %3533 = vdwg.mxu0
      %3534 = vmatpush.bf16.msra.mxu0 %v2947
      %3535 = vmatpush.bf16.msra.mxu0 %v2946
      %3536 = vmatpush.bf16.msra.mxu0 %v2945
      %3537 = vmatpush.bf16.msra.mxu0 %v2944
      %3538 = vmatpush.bf16.msra.mxu0 %v2943
      %3539 = vmatpush.bf16.msra.mxu0 %v2942
      %3540 = vmatpush.bf16.msra.mxu0 %v2941
      %3541 = vmatpush.bf16.msra.mxu0 %v2940
      %3542 = vmatmul.bf16.gmra.mxu0 %v3474
      %v3543 = vpop.f32.mrf.mxu0
      %v3544 = vadd.f32 0.0, %v3543
      %v3545 = vpop.f32.mrf.mxu0
      %v3546 = vadd.f32 0.0, %v3545
      %3547 = vdwg.mxu0
      %3548 = vmatpush.bf16.msra.mxu0 %v2955
      %3549 = vmatpush.bf16.msra.mxu0 %v2954
      %3550 = vmatpush.bf16.msra.mxu0 %v2953
      %3551 = vmatpush.bf16.msra.mxu0 %v2952
      %3552 = vmatpush.bf16.msra.mxu0 %v2951
      %3553 = vmatpush.bf16.msra.mxu0 %v2950
      %3554 = vmatpush.bf16.msra.mxu0 %v2949
      %3555 = vmatpush.bf16.msra.mxu0 %v2948
      %3556 = vmatmul.bf16.gmra.mxu0 %v3475
      %v3557 = vpop.f32.mrf.mxu0
      %v3558 = vadd.f32 %v3544, %v3557
      %v3559 = vpop.f32.mrf.mxu0
      %v3560 = vadd.f32 %v3546, %v3559
      %3561 = vdwg.mxu0
      %3562 = vmatpush.bf16.msra.mxu0 %v3043
      %3563 = vmatpush.bf16.msra.mxu0 %v3042
      %3564 = vmatpush.bf16.msra.mxu0 %v3041
      %3565 = vmatpush.bf16.msra.mxu0 %v3040
      %3566 = vmatpush.bf16.msra.mxu0 %v3039
      %3567 = vmatpush.bf16.msra.mxu0 %v3038
      %3568 = vmatpush.bf16.msra.mxu0 %v3037
      %3569 = vmatpush.bf16.msra.mxu0 %v3036
      %3570 = vmatmul.bf16.gmra.mxu0 %v3474
      %v3571 = vpop.f32.mrf.mxu0
      %v3572 = vadd.f32 0.0, %v3571
      %v3573 = vpop.f32.mrf.mxu0
      %v3574 = vadd.f32 0.0, %v3573
      %3575 = vdwg.mxu0
      %3576 = vmatpush.bf16.msra.mxu0 %v3051
      %3577 = vmatpush.bf16.msra.mxu0 %v3050
      %3578 = vmatpush.bf16.msra.mxu0 %v3049
      %3579 = vmatpush.bf16.msra.mxu0 %v3048
      %3580 = vmatpush.bf16.msra.mxu0 %v3047
      %3581 = vmatpush.bf16.msra.mxu0 %v3046
      %3582 = vmatpush.bf16.msra.mxu0 %v3045
      %3583 = vmatpush.bf16.msra.mxu0 %v3044
      %3584 = vmatmul.bf16.gmra.mxu0 %v3475
      %v3585 = vpop.f32.mrf.mxu0
      %v3586 = vadd.f32 %v3572, %v3585
      %v3587 = vpop.f32.mrf.mxu0
      %v3588 = vadd.f32 %v3574, %v3587
      %3589 = vdwg.mxu0
      %3590 = vmatpush.bf16.msra.mxu0 %v3139
      %3591 = vmatpush.bf16.msra.mxu0 %v3138
      %3592 = vmatpush.bf16.msra.mxu0 %v3137
      %3593 = vmatpush.bf16.msra.mxu0 %v3136
      %3594 = vmatpush.bf16.msra.mxu0 %v3135
      %3595 = vmatpush.bf16.msra.mxu0 %v3134
      %3596 = vmatpush.bf16.msra.mxu0 %v3133
      %3597 = vmatpush.bf16.msra.mxu0 %v3132
      %3598 = vmatmul.bf16.gmra.mxu0 %v3474
      %v3599 = vpop.f32.mrf.mxu0
      %v3600 = vadd.f32 0.0, %v3599
      %v3601 = vpop.f32.mrf.mxu0
      %v3602 = vadd.f32 0.0, %v3601
      %3603 = vdwg.mxu0
      %3604 = vmatpush.bf16.msra.mxu0 %v3147
      %3605 = vmatpush.bf16.msra.mxu0 %v3146
      %3606 = vmatpush.bf16.msra.mxu0 %v3145
      %3607 = vmatpush.bf16.msra.mxu0 %v3144
      %3608 = vmatpush.bf16.msra.mxu0 %v3143
      %3609 = vmatpush.bf16.msra.mxu0 %v3142
      %3610 = vmatpush.bf16.msra.mxu0 %v3141
      %3611 = vmatpush.bf16.msra.mxu0 %v3140
      %3612 = vmatmul.bf16.gmra.mxu0 %v3475
      %v3613 = vpop.f32.mrf.mxu0
      %v3614 = vadd.f32 %v3600, %v3613
      %v3615 = vpop.f32.mrf.mxu0
      %v3616 = vadd.f32 %v3602, %v3615
      %3617 = vdwg.mxu0
      %3618 = vmatpush.bf16.msra.mxu0 %v3235
      %3619 = vmatpush.bf16.msra.mxu0 %v3234
      %3620 = vmatpush.bf16.msra.mxu0 %v3233
      %3621 = vmatpush.bf16.msra.mxu0 %v3232
      %3622 = vmatpush.bf16.msra.mxu0 %v3231
      %3623 = vmatpush.bf16.msra.mxu0 %v3230
      %3624 = vmatpush.bf16.msra.mxu0 %v3229
      %3625 = vmatpush.bf16.msra.mxu0 %v3228
      %3626 = vmatmul.bf16.gmra.mxu0 %v3474
      %v3627 = vpop.f32.mrf.mxu0
      %v3628 = vadd.f32 0.0, %v3627
      %v3629 = vpop.f32.mrf.mxu0
      %v3630 = vadd.f32 0.0, %v3629
      %3631 = vdwg.mxu0
      %3632 = vmatpush.bf16.msra.mxu0 %v3243
      %3633 = vmatpush.bf16.msra.mxu0 %v3242
      %3634 = vmatpush.bf16.msra.mxu0 %v3241
      %3635 = vmatpush.bf16.msra.mxu0 %v3240
      %3636 = vmatpush.bf16.msra.mxu0 %v3239
      %3637 = vmatpush.bf16.msra.mxu0 %v3238
      %3638 = vmatpush.bf16.msra.mxu0 %v3237
      %3639 = vmatpush.bf16.msra.mxu0 %v3236
      %3640 = vmatmul.bf16.gmra.mxu0 %v3475
      %v3641 = vpop.f32.mrf.mxu0
      %v3642 = vadd.f32 %v3628, %v3641
      %v3643 = vpop.f32.mrf.mxu0
      %v3644 = vadd.f32 %v3630, %v3643
      %3645 = vdwg.mxu0
      %3646 = vmatpush.bf16.msra.mxu0 %v3331
      %3647 = vmatpush.bf16.msra.mxu0 %v3330
      %3648 = vmatpush.bf16.msra.mxu0 %v3329
      %3649 = vmatpush.bf16.msra.mxu0 %v3328
      %3650 = vmatpush.bf16.msra.mxu0 %v3327
      %3651 = vmatpush.bf16.msra.mxu0 %v3326
      %3652 = vmatpush.bf16.msra.mxu0 %v3325
      %3653 = vmatpush.bf16.msra.mxu0 %v3324
      %3654 = vmatmul.bf16.gmra.mxu0 %v3474
      %v3655 = vpop.f32.mrf.mxu0
      %v3656 = vadd.f32 0.0, %v3655
      %v3657 = vpop.f32.mrf.mxu0
      %v3658 = vadd.f32 0.0, %v3657
      %3659 = vdwg.mxu0
      %3660 = vmatpush.bf16.msra.mxu0 %v3339
      %3661 = vmatpush.bf16.msra.mxu0 %v3338
      %3662 = vmatpush.bf16.msra.mxu0 %v3337
      %3663 = vmatpush.bf16.msra.mxu0 %v3336
      %3664 = vmatpush.bf16.msra.mxu0 %v3335
      %3665 = vmatpush.bf16.msra.mxu0 %v3334
      %3666 = vmatpush.bf16.msra.mxu0 %v3333
      %3667 = vmatpush.bf16.msra.mxu0 %v3332
      %3668 = vmatmul.bf16.gmra.mxu0 %v3475
      %v3669 = vpop.f32.mrf.mxu0
      %v3670 = vadd.f32 %v3656, %v3669
      %v3671 = vpop.f32.mrf.mxu0
      %v3672 = vadd.f32 %v3658, %v3671
      %3673 = vdwg.mxu0
      %3674 = vmatpush.bf16.msra.mxu0 %v3427
      %3675 = vmatpush.bf16.msra.mxu0 %v3426
      %3676 = vmatpush.bf16.msra.mxu0 %v3425
      %3677 = vmatpush.bf16.msra.mxu0 %v3424
      %3678 = vmatpush.bf16.msra.mxu0 %v3423
      %3679 = vmatpush.bf16.msra.mxu0 %v3422
      %3680 = vmatpush.bf16.msra.mxu0 %v3421
      %3681 = vmatpush.bf16.msra.mxu0 %v3420
      %3682 = vmatmul.bf16.gmra.mxu0 %v3474
      %v3683 = vpop.f32.mrf.mxu0
      %v3684 = vadd.f32 0.0, %v3683
      %v3685 = vpop.f32.mrf.mxu0
      %v3686 = vadd.f32 0.0, %v3685
      %3687 = vdwg.mxu0
      %3688 = vmatpush.bf16.msra.mxu0 %v3435
      %3689 = vmatpush.bf16.msra.mxu0 %v3434
      %3690 = vmatpush.bf16.msra.mxu0 %v3433
      %3691 = vmatpush.bf16.msra.mxu0 %v3432
      %3692 = vmatpush.bf16.msra.mxu0 %v3431
      %3693 = vmatpush.bf16.msra.mxu0 %v3430
      %3694 = vmatpush.bf16.msra.mxu0 %v3429
      %3695 = vmatpush.bf16.msra.mxu0 %v3428
      %3696 = vmatmul.bf16.gmra.mxu0 %v3475
      %v3697 = vpop.f32.mrf.mxu0
      %v3698 = vadd.f32 %v3684, %v3697
      %v3699 = vpop.f32.mrf.mxu0
      %v3700 = vadd.f32 %v3686, %v3699
      %3701 = vdwg.mxu0
      %v3702 = vadd.f32 %v3452, %v3502
      %v3703 = vadd.f32 %v3453, %v3530
      %v3704 = vadd.f32 %v3454, %v3558
      %v3705 = vadd.f32 %v3455, %v3586
      %v3706 = vadd.f32 %v3456, %v3614
      %v3707 = vadd.f32 %v3457, %v3642
      %v3708 = vadd.f32 %v3458, %v3670
      %v3709 = vadd.f32 %v3459, %v3698
      %v3710 = vadd.f32 %v3460, %v3504
      %v3711 = vadd.f32 %v3461, %v3532
      %v3712 = vadd.f32 %v3462, %v3560
      %v3713 = vadd.f32 %v3463, %v3588
      %v3714 = vadd.f32 %v3464, %v3616
      %v3715 = vadd.f32 %v3465, %v3644
      %v3716 = vadd.f32 %v3466, %v3672
      %v3717 = vadd.f32 %v3467, %v3700
      %3718 = vst [vmem:[#allocation2] sm:$0xff] %v3702
      %3719 = vst [vmem:[#allocation2 + $0x8] sm:$0xff] %v3703
      %3720 = vst [vmem:[#allocation2 + $0x10] sm:$0xff] %v3704
      %3721 = vst [vmem:[#allocation2 + $0x18] sm:$0xff] %v3705
      %3722 = vst [vmem:[#allocation2 + $0x20] sm:$0xff] %v3706
      %3723 = vst [vmem:[#allocation2 + $0x28] sm:$0xff] %v3707
      %3724 = vst [vmem:[#allocation2 + $0x30] sm:$0xff] %v3708
      %3725 = vst [vmem:[#allocation2 + $0x38] sm:$0xff] %v3709
      %3726 = vst [vmem:[#allocation2 + $0x40] sm:$0x7] %v3710
      %3727 = vst [vmem:[#allocation2 + $0x48] sm:$0x7] %v3711
      %3728 = vst [vmem:[#allocation2 + $0x50] sm:$0x7] %v3712
      %3729 = vst [vmem:[#allocation2 + $0x58] sm:$0x7] %v3713
      %3730 = vst [vmem:[#allocation2 + $0x60] sm:$0x7] %v3714
      %3731 = vst [vmem:[#allocation2 + $0x68] sm:$0x7] %v3715
      %3732 = vst [vmem:[#allocation2 + $0x70] sm:$0x7] %v3716
      %3733 = vst [vmem:[#allocation2 + $0x78] sm:$0x7] %v3717
      // Predicated region
      $region41: #{tpu_custom_call.1} parent=35 // pred_check
        %p3734 = pneg %p308
      $region42: #{tpu_custom_call.1} parent=35 // pred_check_branch
        %3736 = sbr.rel (%p3734) target = $region44
      $region43: #{tpu_custom_call.1} parent=35 // pred_region
        %v3737 = vld [vmem:[#allocation2] sm:$0xff]
        %v3738 = vld [vmem:[#allocation2 + $0x8] sm:$0xff]
        %v3739 = vld [vmem:[#allocation2 + $0x10] sm:$0xff]
        %v3740 = vld [vmem:[#allocation2 + $0x18] sm:$0xff]
        %v3741 = vld [vmem:[#allocation2 + $0x20] sm:$0xff]
        %v3742 = vld [vmem:[#allocation2 + $0x28] sm:$0xff]
        %v3743 = vld [vmem:[#allocation2 + $0x30] sm:$0xff]
        %v3744 = vld [vmem:[#allocation2 + $0x38] sm:$0xff]
        %v3745 = vld [vmem:[#allocation2 + $0x40] sm:$0x7]
        %v3746 = vld [vmem:[#allocation2 + $0x48] sm:$0x7]
        %v3747 = vld [vmem:[#allocation2 + $0x50] sm:$0x7]
        %v3748 = vld [vmem:[#allocation2 + $0x58] sm:$0x7]
        %v3749 = vld [vmem:[#allocation2 + $0x60] sm:$0x7]
        %v3750 = vld [vmem:[#allocation2 + $0x68] sm:$0x7]
        %v3751 = vld [vmem:[#allocation2 + $0x70] sm:$0x7]
        %v3752 = vld [vmem:[#allocation2 + $0x78] sm:$0x7]
        %v3761 = vrot.slane %v3737, 3
        %v3762 = vrot.slane %v3738, 3
        %v3763 = vrot.slane %v3739, 3
        %v3764 = vrot.slane %v3740, 3
        %v3765 = vrot.slane %v3741, 3
        %v3766 = vrot.slane %v3742, 3
        %v3767 = vrot.slane %v3743, 3
        %v3768 = vrot.slane %v3744, 3
        %v3777 = vadd.f32 %v3737, %v3761
        %v3778 = vadd.f32 %v3738, %v3762
        %v3779 = vadd.f32 %v3739, %v3763
        %v3780 = vadd.f32 %v3740, %v3764
        %v3781 = vadd.f32 %v3741, %v3765
        %v3782 = vadd.f32 %v3742, %v3766
        %v3783 = vadd.f32 %v3743, %v3767
        %v3784 = vadd.f32 %v3744, %v3768
        %v3785 = vsub.f32 %v3777, %v361
        %v3786 = vsub.f32 %v3778, %v361
        %v3787 = vsub.f32 %v3779, %v361
        %v3788 = vsub.f32 %v3780, %v361
        %v3789 = vsub.f32 %v3781, %v361
        %v3790 = vsub.f32 %v3782, %v361
        %v3791 = vsub.f32 %v3783, %v361
        %v3792 = vsub.f32 %v3784, %v361
        %vm3801 = vcmask 1044480
        %v3802 = vrot.slane %v3745, 3
        %v3803 = vsel %vm3801, %v3761, %v3802
        %v3804 = vrot.slane %v3746, 3
        %v3805 = vsel %vm3801, %v3762, %v3804
        %v3806 = vrot.slane %v3747, 3
        %v3807 = vsel %vm3801, %v3763, %v3806
        %v3808 = vrot.slane %v3748, 3
        %v3809 = vsel %vm3801, %v3764, %v3808
        %v3810 = vrot.slane %v3749, 3
        %v3811 = vsel %vm3801, %v3765, %v3810
        %v3812 = vrot.slane %v3750, 3
        %v3813 = vsel %vm3801, %v3766, %v3812
        %v3814 = vrot.slane %v3751, 3
        %v3815 = vsel %vm3801, %v3767, %v3814
        %v3816 = vrot.slane %v3752, 3
        %v3817 = vsel %vm3801, %v3768, %v3816
        %vm3826 = vcmask 1042432
        %v3827 = vsel %vm3826, %v3785, %v3803
        %v3828 = vsel %vm3826, %v3786, %v3805
        %v3829 = vsel %vm3826, %v3787, %v3807
        %v3830 = vsel %vm3826, %v3788, %v3809
        %v3831 = vsel %vm3826, %v3789, %v3811
        %v3832 = vsel %vm3826, %v3790, %v3813
        %v3833 = vsel %vm3826, %v3791, %v3815
        %v3834 = vsel %vm3826, %v3792, %v3817
        %v3835 = vrot.slane %v3829, 4
        %vm3836 = vcmask 1047556
        %v3837 = vsel %vm3836, %v3835, %v3827
        %v3838 = vrot.slane %v3827, 4
        %v3839 = vsel %vm3836, %v3829, %v3838
        %v3841 = vunpack.c.l.s4 1983009808
        %v3842 = vunpack.c.0.s8 %v3841
        %v3843 = vperm.slane %v3837, %v3842
        %v3845 = vunpack.c.l.s4 1983009808
        %v3846 = vunpack.c.0.s8 %v3845
        %v3847 = vperm.slane %v3839, %v3846
        %v3848 = vrot.slane %v3830, 4
        %v3849 = vsel %vm3836, %v3848, %v3828
        %v3850 = vrot.slane %v3828, 4
        %v3851 = vsel %vm3836, %v3830, %v3850
        %v3853 = vunpack.c.l.s4 1983009808
        %v3854 = vunpack.c.0.s8 %v3853
        %v3855 = vperm.slane %v3849, %v3854
        %v3857 = vunpack.c.l.s4 1983009808
        %v3858 = vunpack.c.0.s8 %v3857
        %v3859 = vperm.slane %v3851, %v3858
        %v3860 = vrot.slane %v3833, 4
        %v3861 = vsel %vm3836, %v3860, %v3831
        %v3862 = vrot.slane %v3831, 4
        %v3863 = vsel %vm3836, %v3833, %v3862
        %v3865 = vunpack.c.l.s4 1983009808
        %v3866 = vunpack.c.0.s8 %v3865
        %v3867 = vperm.slane %v3861, %v3866
        %v3869 = vunpack.c.l.s4 1983009808
        %v3870 = vunpack.c.0.s8 %v3869
        %v3871 = vperm.slane %v3863, %v3870
        %v3872 = vrot.slane %v3834, 4
        %v3873 = vsel %vm3836, %v3872, %v3832
        %v3874 = vrot.slane %v3832, 4
        %v3875 = vsel %vm3836, %v3834, %v3874
        %v3877 = vunpack.c.l.s4 1983009808
        %v3878 = vunpack.c.0.s8 %v3877
        %v3879 = vperm.slane %v3873, %v3878
        %v3881 = vunpack.c.l.s4 1983009808
        %v3882 = vunpack.c.0.s8 %v3881
        %v3883 = vperm.slane %v3875, %v3882
        %v3884 = vrot.slane %v3855, 4
        %v3885 = vsel %vm3836, %v3884, %v3843
        %v3886 = vrot.slane %v3843, 4
        %v3887 = vsel %vm3836, %v3855, %v3886
        %v3889 = vunpack.c.l.s4 1934713408
        %v3890 = vunpack.c.0.s8 %v3889
        %v3891 = vperm.slane %v3885, %v3890
        %v3893 = vunpack.c.l.s4 1934713408
        %v3894 = vunpack.c.0.s8 %v3893
        %v3895 = vperm.slane %v3887, %v3894
        %v3896 = vrot.slane %v3859, 4
        %v3897 = vsel %vm3836, %v3896, %v3847
        %v3898 = vrot.slane %v3847, 4
        %v3899 = vsel %vm3836, %v3859, %v3898
        %v3901 = vunpack.c.l.s4 1934713408
        %v3902 = vunpack.c.0.s8 %v3901
        %v3903 = vperm.slane %v3897, %v3902
        %v3905 = vunpack.c.l.s4 1934713408
        %v3906 = vunpack.c.0.s8 %v3905
        %v3907 = vperm.slane %v3899, %v3906
        %v3908 = vrot.slane %v3879, 4
        %v3909 = vsel %vm3836, %v3908, %v3867
        %v3910 = vrot.slane %v3867, 4
        %v3911 = vsel %vm3836, %v3879, %v3910
        %v3913 = vunpack.c.l.s4 1934713408
        %v3914 = vunpack.c.0.s8 %v3913
        %v3915 = vperm.slane %v3909, %v3914
        %v3917 = vunpack.c.l.s4 1934713408
        %v3918 = vunpack.c.0.s8 %v3917
        %v3919 = vperm.slane %v3911, %v3918
        %v3920 = vrot.slane %v3883, 4
        %v3921 = vsel %vm3836, %v3920, %v3871
        %v3922 = vrot.slane %v3871, 4
        %v3923 = vsel %vm3836, %v3883, %v3922
        %v3925 = vunpack.c.l.s4 1934713408
        %v3926 = vunpack.c.0.s8 %v3925
        %v3927 = vperm.slane %v3921, %v3926
        %v3929 = vunpack.c.l.s4 1934713408
        %v3930 = vunpack.c.0.s8 %v3929
        %v3931 = vperm.slane %v3923, %v3930
        %v3932 = vrot.slane %v3915, 4
        %v3933 = vsel %vm3836, %v3932, %v3891
        %v3934 = vrot.slane %v3891, 4
        %v3935 = vsel %vm3836, %v3915, %v3934
        %v3936 = vrot.slane %v3919, 4
        %v3937 = vsel %vm3836, %v3936, %v3895
        %v3938 = vrot.slane %v3895, 4
        %v3939 = vsel %vm3836, %v3919, %v3938
        %v3940 = vrot.slane %v3927, 4
        %v3941 = vsel %vm3836, %v3940, %v3903
        %v3942 = vrot.slane %v3903, 4
        %v3943 = vsel %vm3836, %v3927, %v3942
        %v3944 = vrot.slane %v3931, 4
        %v3945 = vsel %vm3836, %v3944, %v3907
        %v3946 = vrot.slane %v3907, 4
        %v3947 = vsel %vm3836, %v3931, %v3946
        %3948 = vxpose.xlu0.b32.start [1/16] %v3933, 128
        %3949 = vxpose.xlu0.b32.cont [2/16] 0.0, 128
        %3950 = vxpose.xlu0.b32.cont [3/16] 0.0, 128
        %3951 = vxpose.xlu0.b32.cont [4/16] 0.0, 128
        %3952 = vxpose.xlu0.b32.cont [5/16] 0.0, 128
        %3953 = vxpose.xlu0.b32.cont [6/16] 0.0, 128
        %3954 = vxpose.xlu0.b32.cont [7/16] 0.0, 128
        %3955 = vxpose.xlu0.b32.cont [8/16] 0.0, 128
        %3956 = vxpose.xlu0.b32.cont [9/16] 0.0, 128
        %3957 = vxpose.xlu0.b32.cont [10/16] 0.0, 128
        %3958 = vxpose.xlu0.b32.cont [11/16] 0.0, 128
        %3959 = vxpose.xlu0.b32.cont [12/16] 0.0, 128
        %3960 = vxpose.xlu0.b32.cont [13/16] 0.0, 128
        %3961 = vxpose.xlu0.b32.cont [14/16] 0.0, 128
        %3962 = vxpose.xlu0.b32.cont [15/16] 0.0, 128
        %3963 = vxpose.xlu0.b32.end [16/16] 0.0, 128
        %v3964 = vpop.trf.xlu0
        %v3965 = vpop.trf.xlu0
        %v3966 = vpop.trf.xlu0
        %v3967 = vpop.trf.xlu0
        %v3968 = vpop.trf.xlu0
        %v3969 = vpop.trf.xlu0
        %v3970 = vpop.trf.xlu0
        %v3971 = vpop.trf.xlu0
        %v3972 = vpop.trf.xlu0
        %v3973 = vpop.trf.xlu0
        %v3974 = vpop.trf.xlu0
        %v3975 = vpop.trf.xlu0
        %v3976 = vpop.trf.xlu0
        %v3977 = vpop.trf.xlu0
        %v3978 = vpop.trf.xlu0
        %v3979 = vpop.trf.xlu0
        %3980 = vxpose.xlu0.b32.start [1/16] %v3935, 128
        %3981 = vxpose.xlu0.b32.cont [2/16] 0.0, 128
        %3982 = vxpose.xlu0.b32.cont [3/16] 0.0, 128
        %3983 = vxpose.xlu0.b32.cont [4/16] 0.0, 128
        %3984 = vxpose.xlu0.b32.cont [5/16] 0.0, 128
        %3985 = vxpose.xlu0.b32.cont [6/16] 0.0, 128
        %3986 = vxpose.xlu0.b32.cont [7/16] 0.0, 128
        %3987 = vxpose.xlu0.b32.cont [8/16] 0.0, 128
        %3988 = vxpose.xlu0.b32.cont [9/16] 0.0, 128
        %3989 = vxpose.xlu0.b32.cont [10/16] 0.0, 128
        %3990 = vxpose.xlu0.b32.cont [11/16] 0.0, 128
        %3991 = vxpose.xlu0.b32.cont [12/16] 0.0, 128
        %3992 = vxpose.xlu0.b32.cont [13/16] 0.0, 128
        %3993 = vxpose.xlu0.b32.cont [14/16] 0.0, 128
        %3994 = vxpose.xlu0.b32.cont [15/16] 0.0, 128
        %3995 = vxpose.xlu0.b32.end [16/16] 0.0, 128
        %v3996 = vpop.trf.xlu0
        %v3997 = vpop.trf.xlu0
        %v3998 = vpop.trf.xlu0
        %v3999 = vpop.trf.xlu0
        %v4000 = vpop.trf.xlu0
        %v4001 = vpop.trf.xlu0
        %v4002 = vpop.trf.xlu0
        %v4003 = vpop.trf.xlu0
        %v4004 = vpop.trf.xlu0
        %v4005 = vpop.trf.xlu0
        %v4006 = vpop.trf.xlu0
        %v4007 = vpop.trf.xlu0
        %v4008 = vpop.trf.xlu0
        %v4009 = vpop.trf.xlu0
        %v4010 = vpop.trf.xlu0
        %v4011 = vpop.trf.xlu0
        %4012 = vxpose.xlu0.b32.start [1/16] %v3937, 128
        %4013 = vxpose.xlu0.b32.cont [2/16] 0.0, 128
        %4014 = vxpose.xlu0.b32.cont [3/16] 0.0, 128
        %4015 = vxpose.xlu0.b32.cont [4/16] 0.0, 128
        %4016 = vxpose.xlu0.b32.cont [5/16] 0.0, 128
        %4017 = vxpose.xlu0.b32.cont [6/16] 0.0, 128
        %4018 = vxpose.xlu0.b32.cont [7/16] 0.0, 128
        %4019 = vxpose.xlu0.b32.cont [8/16] 0.0, 128
        %4020 = vxpose.xlu0.b32.cont [9/16] 0.0, 128
        %4021 = vxpose.xlu0.b32.cont [10/16] 0.0, 128
        %4022 = vxpose.xlu0.b32.cont [11/16] 0.0, 128
        %4023 = vxpose.xlu0.b32.cont [12/16] 0.0, 128
        %4024 = vxpose.xlu0.b32.cont [13/16] 0.0, 128
        %4025 = vxpose.xlu0.b32.cont [14/16] 0.0, 128
        %4026 = vxpose.xlu0.b32.cont [15/16] 0.0, 128
        %4027 = vxpose.xlu0.b32.end [16/16] 0.0, 128
        %v4028 = vpop.trf.xlu0
        %v4029 = vpop.trf.xlu0
        %v4030 = vpop.trf.xlu0
        %v4031 = vpop.trf.xlu0
        %v4032 = vpop.trf.xlu0
        %v4033 = vpop.trf.xlu0
        %v4034 = vpop.trf.xlu0
        %v4035 = vpop.trf.xlu0
        %v4036 = vpop.trf.xlu0
        %v4037 = vpop.trf.xlu0
        %v4038 = vpop.trf.xlu0
        %v4039 = vpop.trf.xlu0
        %v4040 = vpop.trf.xlu0
        %v4041 = vpop.trf.xlu0
        %v4042 = vpop.trf.xlu0
        %v4043 = vpop.trf.xlu0
        %4044 = vxpose.xlu0.b32.start [1/16] %v3939, 128
        %4045 = vxpose.xlu0.b32.cont [2/16] 0.0, 128
        %4046 = vxpose.xlu0.b32.cont [3/16] 0.0, 128
        %4047 = vxpose.xlu0.b32.cont [4/16] 0.0, 128
        %4048 = vxpose.xlu0.b32.cont [5/16] 0.0, 128
        %4049 = vxpose.xlu0.b32.cont [6/16] 0.0, 128
        %4050 = vxpose.xlu0.b32.cont [7/16] 0.0, 128
        %4051 = vxpose.xlu0.b32.cont [8/16] 0.0, 128
        %4052 = vxpose.xlu0.b32.cont [9/16] 0.0, 128
        %4053 = vxpose.xlu0.b32.cont [10/16] 0.0, 128
        %4054 = vxpose.xlu0.b32.cont [11/16] 0.0, 128
        %4055 = vxpose.xlu0.b32.cont [12/16] 0.0, 128
        %4056 = vxpose.xlu0.b32.cont [13/16] 0.0, 128
        %4057 = vxpose.xlu0.b32.cont [14/16] 0.0, 128
        %4058 = vxpose.xlu0.b32.cont [15/16] 0.0, 128
        %4059 = vxpose.xlu0.b32.end [16/16] 0.0, 128
        %v4060 = vpop.trf.xlu0
        %v4061 = vpop.trf.xlu0
        %v4062 = vpop.trf.xlu0
        %v4063 = vpop.trf.xlu0
        %v4064 = vpop.trf.xlu0
        %v4065 = vpop.trf.xlu0
        %v4066 = vpop.trf.xlu0
        %v4067 = vpop.trf.xlu0
        %v4068 = vpop.trf.xlu0
        %v4069 = vpop.trf.xlu0
        %v4070 = vpop.trf.xlu0
        %v4071 = vpop.trf.xlu0
        %v4072 = vpop.trf.xlu0
        %v4073 = vpop.trf.xlu0
        %v4074 = vpop.trf.xlu0
        %v4075 = vpop.trf.xlu0
        %4076 = vxpose.xlu0.b32.start [1/16] %v3941, 128
        %4077 = vxpose.xlu0.b32.cont [2/16] 0.0, 128
        %4078 = vxpose.xlu0.b32.cont [3/16] 0.0, 128
        %4079 = vxpose.xlu0.b32.cont [4/16] 0.0, 128
        %4080 = vxpose.xlu0.b32.cont [5/16] 0.0, 128
        %4081 = vxpose.xlu0.b32.cont [6/16] 0.0, 128
        %4082 = vxpose.xlu0.b32.cont [7/16] 0.0, 128
        %4083 = vxpose.xlu0.b32.cont [8/16] 0.0, 128
        %4084 = vxpose.xlu0.b32.cont [9/16] 0.0, 128
        %4085 = vxpose.xlu0.b32.cont [10/16] 0.0, 128
        %4086 = vxpose.xlu0.b32.cont [11/16] 0.0, 128
        %4087 = vxpose.xlu0.b32.cont [12/16] 0.0, 128
        %4088 = vxpose.xlu0.b32.cont [13/16] 0.0, 128
        %4089 = vxpose.xlu0.b32.cont [14/16] 0.0, 128
        %4090 = vxpose.xlu0.b32.cont [15/16] 0.0, 128
        %4091 = vxpose.xlu0.b32.end [16/16] 0.0, 128
        %v4092 = vpop.trf.xlu0
        %v4093 = vpop.trf.xlu0
        %v4094 = vpop.trf.xlu0
        %v4095 = vpop.trf.xlu0
        %v4096 = vpop.trf.xlu0
        %v4097 = vpop.trf.xlu0
        %v4098 = vpop.trf.xlu0
        %v4099 = vpop.trf.xlu0
        %v4100 = vpop.trf.xlu0
        %v4101 = vpop.trf.xlu0
        %v4102 = vpop.trf.xlu0
        %v4103 = vpop.trf.xlu0
        %v4104 = vpop.trf.xlu0
        %v4105 = vpop.trf.xlu0
        %v4106 = vpop.trf.xlu0
        %v4107 = vpop.trf.xlu0
        %4108 = vxpose.xlu0.b32.start [1/16] %v3943, 128
        %4109 = vxpose.xlu0.b32.cont [2/16] 0.0, 128
        %4110 = vxpose.xlu0.b32.cont [3/16] 0.0, 128
        %4111 = vxpose.xlu0.b32.cont [4/16] 0.0, 128
        %4112 = vxpose.xlu0.b32.cont [5/16] 0.0, 128
        %4113 = vxpose.xlu0.b32.cont [6/16] 0.0, 128
        %4114 = vxpose.xlu0.b32.cont [7/16] 0.0, 128
        %4115 = vxpose.xlu0.b32.cont [8/16] 0.0, 128
        %4116 = vxpose.xlu0.b32.cont [9/16] 0.0, 128
        %4117 = vxpose.xlu0.b32.cont [10/16] 0.0, 128
        %4118 = vxpose.xlu0.b32.cont [11/16] 0.0, 128
        %4119 = vxpose.xlu0.b32.cont [12/16] 0.0, 128
        %4120 = vxpose.xlu0.b32.cont [13/16] 0.0, 128
        %4121 = vxpose.xlu0.b32.cont [14/16] 0.0, 128
        %4122 = vxpose.xlu0.b32.cont [15/16] 0.0, 128
        %4123 = vxpose.xlu0.b32.end [16/16] 0.0, 128
        %v4124 = vpop.trf.xlu0
        %v4125 = vpop.trf.xlu0
        %v4126 = vpop.trf.xlu0
        %v4127 = vpop.trf.xlu0
        %v4128 = vpop.trf.xlu0
        %v4129 = vpop.trf.xlu0
        %v4130 = vpop.trf.xlu0
        %v4131 = vpop.trf.xlu0
        %v4132 = vpop.trf.xlu0
        %v4133 = vpop.trf.xlu0
        %v4134 = vpop.trf.xlu0
        %v4135 = vpop.trf.xlu0
        %v4136 = vpop.trf.xlu0
        %v4137 = vpop.trf.xlu0
        %v4138 = vpop.trf.xlu0
        %v4139 = vpop.trf.xlu0
        %4140 = vxpose.xlu0.b32.start [1/16] %v3945, 128
        %4141 = vxpose.xlu0.b32.cont [2/16] 0.0, 128
        %4142 = vxpose.xlu0.b32.cont [3/16] 0.0, 128
        %4143 = vxpose.xlu0.b32.cont [4/16] 0.0, 128
        %4144 = vxpose.xlu0.b32.cont [5/16] 0.0, 128
        %4145 = vxpose.xlu0.b32.cont [6/16] 0.0, 128
        %4146 = vxpose.xlu0.b32.cont [7/16] 0.0, 128
        %4147 = vxpose.xlu0.b32.cont [8/16] 0.0, 128
        %4148 = vxpose.xlu0.b32.cont [9/16] 0.0, 128
        %4149 = vxpose.xlu0.b32.cont [10/16] 0.0, 128
        %4150 = vxpose.xlu0.b32.cont [11/16] 0.0, 128
        %4151 = vxpose.xlu0.b32.cont [12/16] 0.0, 128
        %4152 = vxpose.xlu0.b32.cont [13/16] 0.0, 128
        %4153 = vxpose.xlu0.b32.cont [14/16] 0.0, 128
        %4154 = vxpose.xlu0.b32.cont [15/16] 0.0, 128
        %4155 = vxpose.xlu0.b32.end [16/16] 0.0, 128
        %v4156 = vpop.trf.xlu0
        %v4157 = vpop.trf.xlu0
        %v4158 = vpop.trf.xlu0
        %v4159 = vpop.trf.xlu0
        %v4160 = vpop.trf.xlu0
        %v4161 = vpop.trf.xlu0
        %v4162 = vpop.trf.xlu0
        %v4163 = vpop.trf.xlu0
        %v4164 = vpop.trf.xlu0
        %v4165 = vpop.trf.xlu0
        %v4166 = vpop.trf.xlu0
        %v4167 = vpop.trf.xlu0
        %v4168 = vpop.trf.xlu0
        %v4169 = vpop.trf.xlu0
        %v4170 = vpop.trf.xlu0
        %v4171 = vpop.trf.xlu0
        %4172 = vxpose.xlu0.b32.start [1/16] %v3947, 128
        %4173 = vxpose.xlu0.b32.cont [2/16] 0.0, 128
        %4174 = vxpose.xlu0.b32.cont [3/16] 0.0, 128
        %4175 = vxpose.xlu0.b32.cont [4/16] 0.0, 128
        %4176 = vxpose.xlu0.b32.cont [5/16] 0.0, 128
        %4177 = vxpose.xlu0.b32.cont [6/16] 0.0, 128
        %4178 = vxpose.xlu0.b32.cont [7/16] 0.0, 128
        %4179 = vxpose.xlu0.b32.cont [8/16] 0.0, 128
        %4180 = vxpose.xlu0.b32.cont [9/16] 0.0, 128
        %4181 = vxpose.xlu0.b32.cont [10/16] 0.0, 128
        %4182 = vxpose.xlu0.b32.cont [11/16] 0.0, 128
        %4183 = vxpose.xlu0.b32.cont [12/16] 0.0, 128
        %4184 = vxpose.xlu0.b32.cont [13/16] 0.0, 128
        %4185 = vxpose.xlu0.b32.cont [14/16] 0.0, 128
        %4186 = vxpose.xlu0.b32.cont [15/16] 0.0, 128
        %4187 = vxpose.xlu0.b32.end [16/16] 0.0, 128
        %v4188 = vpop.trf.xlu0
        %v4189 = vpop.trf.xlu0
        %v4190 = vpop.trf.xlu0
        %v4191 = vpop.trf.xlu0
        %v4192 = vpop.trf.xlu0
        %v4193 = vpop.trf.xlu0
        %v4194 = vpop.trf.xlu0
        %v4195 = vpop.trf.xlu0
        %v4196 = vpop.trf.xlu0
        %v4197 = vpop.trf.xlu0
        %v4198 = vpop.trf.xlu0
        %v4199 = vpop.trf.xlu0
        %v4200 = vpop.trf.xlu0
        %v4201 = vpop.trf.xlu0
        %v4202 = vpop.trf.xlu0
        %v4203 = vpop.trf.xlu0
        %vm4204 = vcmask 64512
        %4205 = vst.msk [vmem:[%s306] sm:$0xff] %vm4204, %v3964
        %4206 = vst.msk [vmem:[%s306 + $0x8] sm:$0xff] %vm4204, %v3965
        %4207 = vst.msk [vmem:[%s306 + $0x10] sm:$0xff] %vm4204, %v3966
        %4208 = vst.msk [vmem:[%s306 + $0x18] sm:$0xff] %vm4204, %v3967
        %4209 = vst.msk [vmem:[%s306 + $0x20] sm:$0xff] %vm4204, %v3968
        %4210 = vst.msk [vmem:[%s306 + $0x28] sm:$0xff] %vm4204, %v3969
        %4211 = vst.msk [vmem:[%s306 + $0x30] sm:$0xff] %vm4204, %v3970
        %4212 = vst.msk [vmem:[%s306 + $0x38] sm:$0xff] %vm4204, %v3971
        %4213 = vst.msk [vmem:[%s306 + $0x40] sm:$0xff] %vm4204, %v3972
        %4214 = vst.msk [vmem:[%s306 + $0x48] sm:$0xff] %vm4204, %v3973
        %4215 = vst.msk [vmem:[%s306 + $0x50] sm:$0xff] %vm4204, %v3974
        %4216 = vst.msk [vmem:[%s306 + $0x58] sm:$0xff] %vm4204, %v3975
        %4217 = vst.msk [vmem:[%s306 + $0x60] sm:$0xff] %vm4204, %v3976
        %4218 = vst.msk [vmem:[%s306 + $0x68] sm:$0xff] %vm4204, %v3977
        %4219 = vst.msk [vmem:[%s306 + $0x70] sm:$0xff] %vm4204, %v3978
        %4220 = vst.msk [vmem:[%s306 + $0x78] sm:$0xff] %vm4204, %v3979
        %4221 = vst.msk [vmem:[%s306 + $0x80] sm:$0xff] %vm4204, %v3996
        %4222 = vst.msk [vmem:[%s306 + $0x88] sm:$0xff] %vm4204, %v3997
        %4223 = vst.msk [vmem:[%s306 + $0x90] sm:$0xff] %vm4204, %v3998
        %4224 = vst.msk [vmem:[%s306 + $0x98] sm:$0xff] %vm4204, %v3999
        %4225 = vst.msk [vmem:[%s306 + $0xa0] sm:$0xff] %vm4204, %v4000
        %4226 = vst.msk [vmem:[%s306 + $0xa8] sm:$0xff] %vm4204, %v4001
        %4227 = vst.msk [vmem:[%s306 + $0xb0] sm:$0xff] %vm4204, %v4002
        %4228 = vst.msk [vmem:[%s306 + $0xb8] sm:$0xff] %vm4204, %v4003
        %4229 = vst.msk [vmem:[%s306 + $0xc0] sm:$0xff] %vm4204, %v4004
        %4230 = vst.msk [vmem:[%s306 + $0xc8] sm:$0xff] %vm4204, %v4005
        %4231 = vst.msk [vmem:[%s306 + $0xd0] sm:$0xff] %vm4204, %v4006
        %4232 = vst.msk [vmem:[%s306 + $0xd8] sm:$0xff] %vm4204, %v4007
        %4233 = vst.msk [vmem:[%s306 + $0xe0] sm:$0xff] %vm4204, %v4008
        %4234 = vst.msk [vmem:[%s306 + $0xe8] sm:$0xff] %vm4204, %v4009
        %4235 = vst.msk [vmem:[%s306 + $0xf0] sm:$0xff] %vm4204, %v4010
        %4236 = vst.msk [vmem:[%s306 + $0xf8] sm:$0xff] %vm4204, %v4011
        %4237 = vst.msk [vmem:[%s306 + $0x100] sm:$0xff] %vm4204, %v4028
        %4238 = vst.msk [vmem:[%s306 + $0x108] sm:$0xff] %vm4204, %v4029
        %4239 = vst.msk [vmem:[%s306 + $0x110] sm:$0xff] %vm4204, %v4030
        %4240 = vst.msk [vmem:[%s306 + $0x118] sm:$0xff] %vm4204, %v4031
        %4241 = vst.msk [vmem:[%s306 + $0x120] sm:$0xff] %vm4204, %v4032
        %4242 = vst.msk [vmem:[%s306 + $0x128] sm:$0xff] %vm4204, %v4033
        %4243 = vst.msk [vmem:[%s306 + $0x130] sm:$0xff] %vm4204, %v4034
        %4244 = vst.msk [vmem:[%s306 + $0x138] sm:$0xff] %vm4204, %v4035
        %4245 = vst.msk [vmem:[%s306 + $0x140] sm:$0xff] %vm4204, %v4036
        %4246 = vst.msk [vmem:[%s306 + $0x148] sm:$0xff] %vm4204, %v4037
        %4247 = vst.msk [vmem:[%s306 + $0x150] sm:$0xff] %vm4204, %v4038
        %4248 = vst.msk [vmem:[%s306 + $0x158] sm:$0xff] %vm4204, %v4039
        %4249 = vst.msk [vmem:[%s306 + $0x160] sm:$0xff] %vm4204, %v4040
        %4250 = vst.msk [vmem:[%s306 + $0x168] sm:$0xff] %vm4204, %v4041
        %4251 = vst.msk [vmem:[%s306 + $0x170] sm:$0xff] %vm4204, %v4042
        %4252 = vst.msk [vmem:[%s306 + $0x178] sm:$0xff] %vm4204, %v4043
        %4253 = vst.msk [vmem:[%s306 + $0x180] sm:$0xff] %vm4204, %v4060
        %4254 = vst.msk [vmem:[%s306 + $0x188] sm:$0xff] %vm4204, %v4061
        %4255 = vst.msk [vmem:[%s306 + $0x190] sm:$0xff] %vm4204, %v4062
        %4256 = vst.msk [vmem:[%s306 + $0x198] sm:$0xff] %vm4204, %v4063
        %4257 = vst.msk [vmem:[%s306 + $0x1a0] sm:$0xff] %vm4204, %v4064
        %4258 = vst.msk [vmem:[%s306 + $0x1a8] sm:$0xff] %vm4204, %v4065
        %4259 = vst.msk [vmem:[%s306 + $0x1b0] sm:$0xff] %vm4204, %v4066
        %4260 = vst.msk [vmem:[%s306 + $0x1b8] sm:$0xff] %vm4204, %v4067
        %4261 = vst.msk [vmem:[%s306 + $0x1c0] sm:$0xff] %vm4204, %v4068
        %4262 = vst.msk [vmem:[%s306 + $0x1c8] sm:$0xff] %vm4204, %v4069
        %4263 = vst.msk [vmem:[%s306 + $0x1d0] sm:$0xff] %vm4204, %v4070
        %4264 = vst.msk [vmem:[%s306 + $0x1d8] sm:$0xff] %vm4204, %v4071
        %4265 = vst.msk [vmem:[%s306 + $0x1e0] sm:$0xff] %vm4204, %v4072
        %4266 = vst.msk [vmem:[%s306 + $0x1e8] sm:$0xff] %vm4204, %v4073
        %4267 = vst.msk [vmem:[%s306 + $0x1f0] sm:$0xff] %vm4204, %v4074
        %4268 = vst.msk [vmem:[%s306 + $0x1f8] sm:$0xff] %vm4204, %v4075
        %4269 = vst.msk [vmem:[%s306 + $0x200] sm:$0xff] %vm4204, %v4092
        %4270 = vst.msk [vmem:[%s306 + $0x208] sm:$0xff] %vm4204, %v4093
        %4271 = vst.msk [vmem:[%s306 + $0x210] sm:$0xff] %vm4204, %v4094
        %4272 = vst.msk [vmem:[%s306 + $0x218] sm:$0xff] %vm4204, %v4095
        %4273 = vst.msk [vmem:[%s306 + $0x220] sm:$0xff] %vm4204, %v4096
        %4274 = vst.msk [vmem:[%s306 + $0x228] sm:$0xff] %vm4204, %v4097
        %4275 = vst.msk [vmem:[%s306 + $0x230] sm:$0xff] %vm4204, %v4098
        %4276 = vst.msk [vmem:[%s306 + $0x238] sm:$0xff] %vm4204, %v4099
        %4277 = vst.msk [vmem:[%s306 + $0x240] sm:$0xff] %vm4204, %v4100
        %4278 = vst.msk [vmem:[%s306 + $0x248] sm:$0xff] %vm4204, %v4101
        %4279 = vst.msk [vmem:[%s306 + $0x250] sm:$0xff] %vm4204, %v4102
        %4280 = vst.msk [vmem:[%s306 + $0x258] sm:$0xff] %vm4204, %v4103
        %4281 = vst.msk [vmem:[%s306 + $0x260] sm:$0xff] %vm4204, %v4104
        %4282 = vst.msk [vmem:[%s306 + $0x268] sm:$0xff] %vm4204, %v4105
        %4283 = vst.msk [vmem:[%s306 + $0x270] sm:$0xff] %vm4204, %v4106
        %4284 = vst.msk [vmem:[%s306 + $0x278] sm:$0xff] %vm4204, %v4107
        %4285 = vst.msk [vmem:[%s306 + $0x280] sm:$0xff] %vm4204, %v4124
        %4286 = vst.msk [vmem:[%s306 + $0x288] sm:$0xff] %vm4204, %v4125
        %4287 = vst.msk [vmem:[%s306 + $0x290] sm:$0xff] %vm4204, %v4126
        %4288 = vst.msk [vmem:[%s306 + $0x298] sm:$0xff] %vm4204, %v4127
        %4289 = vst.msk [vmem:[%s306 + $0x2a0] sm:$0xff] %vm4204, %v4128
        %4290 = vst.msk [vmem:[%s306 + $0x2a8] sm:$0xff] %vm4204, %v4129
        %4291 = vst.msk [vmem:[%s306 + $0x2b0] sm:$0xff] %vm4204, %v4130
        %4292 = vst.msk [vmem:[%s306 + $0x2b8] sm:$0xff] %vm4204, %v4131
        %4293 = vst.msk [vmem:[%s306 + $0x2c0] sm:$0xff] %vm4204, %v4132
        %4294 = vst.msk [vmem:[%s306 + $0x2c8] sm:$0xff] %vm4204, %v4133
        %4295 = vst.msk [vmem:[%s306 + $0x2d0] sm:$0xff] %vm4204, %v4134
        %4296 = vst.msk [vmem:[%s306 + $0x2d8] sm:$0xff] %vm4204, %v4135
        %4297 = vst.msk [vmem:[%s306 + $0x2e0] sm:$0xff] %vm4204, %v4136
        %4298 = vst.msk [vmem:[%s306 + $0x2e8] sm:$0xff] %vm4204, %v4137
        %4299 = vst.msk [vmem:[%s306 + $0x2f0] sm:$0xff] %vm4204, %v4138
        %4300 = vst.msk [vmem:[%s306 + $0x2f8] sm:$0xff] %vm4204, %v4139
        %4301 = vst.msk [vmem:[%s306 + $0x300] sm:$0xff] %vm4204, %v4156
        %4302 = vst.msk [vmem:[%s306 + $0x308] sm:$0xff] %vm4204, %v4157
        %4303 = vst.msk [vmem:[%s306 + $0x310] sm:$0xff] %vm4204, %v4158
        %4304 = vst.msk [vmem:[%s306 + $0x318] sm:$0xff] %vm4204, %v4159
        %4305 = vst.msk [vmem:[%s306 + $0x320] sm:$0xff] %vm4204, %v4160
        %4306 = vst.msk [vmem:[%s306 + $0x328] sm:$0xff] %vm4204, %v4161
        %4307 = vst.msk [vmem:[%s306 + $0x330] sm:$0xff] %vm4204, %v4162
        %4308 = vst.msk [vmem:[%s306 + $0x338] sm:$0xff] %vm4204, %v4163
        %4309 = vst.msk [vmem:[%s306 + $0x340] sm:$0xff] %vm4204, %v4164
        %4310 = vst.msk [vmem:[%s306 + $0x348] sm:$0xff] %vm4204, %v4165
        %4311 = vst.msk [vmem:[%s306 + $0x350] sm:$0xff] %vm4204, %v4166
        %4312 = vst.msk [vmem:[%s306 + $0x358] sm:$0xff] %vm4204, %v4167
        %4313 = vst.msk [vmem:[%s306 + $0x360] sm:$0xff] %vm4204, %v4168
        %4314 = vst.msk [vmem:[%s306 + $0x368] sm:$0xff] %vm4204, %v4169
        %4315 = vst.msk [vmem:[%s306 + $0x370] sm:$0xff] %vm4204, %v4170
        %4316 = vst.msk [vmem:[%s306 + $0x378] sm:$0xff] %vm4204, %v4171
        %4317 = vst.msk [vmem:[%s306 + $0x380] sm:$0xff] %vm4204, %v4188
        %4318 = vst.msk [vmem:[%s306 + $0x388] sm:$0xff] %vm4204, %v4189
        %4319 = vst.msk [vmem:[%s306 + $0x390] sm:$0xff] %vm4204, %v4190
        %4320 = vst.msk [vmem:[%s306 + $0x398] sm:$0xff] %vm4204, %v4191
        %4321 = vst.msk [vmem:[%s306 + $0x3a0] sm:$0xff] %vm4204, %v4192
        %4322 = vst.msk [vmem:[%s306 + $0x3a8] sm:$0xff] %vm4204, %v4193
        %4323 = vst.msk [vmem:[%s306 + $0x3b0] sm:$0xff] %vm4204, %v4194
        %4324 = vst.msk [vmem:[%s306 + $0x3b8] sm:$0xff] %vm4204, %v4195
        %4325 = vst.msk [vmem:[%s306 + $0x3c0] sm:$0xff] %vm4204, %v4196
        %4326 = vst.msk [vmem:[%s306 + $0x3c8] sm:$0xff] %vm4204, %v4197
        %4327 = vst.msk [vmem:[%s306 + $0x3d0] sm:$0xff] %vm4204, %v4198
        %4328 = vst.msk [vmem:[%s306 + $0x3d8] sm:$0xff] %vm4204, %v4199
        %4329 = vst.msk [vmem:[%s306 + $0x3e0] sm:$0xff] %vm4204, %v4200
        %4330 = vst.msk [vmem:[%s306 + $0x3e8] sm:$0xff] %vm4204, %v4201
        %4331 = vst.msk [vmem:[%s306 + $0x3f0] sm:$0xff] %vm4204, %v4202
        %4332 = vst.msk [vmem:[%s306 + $0x3f8] sm:$0xff] %vm4204, %v4203
      $region44: #{tpu_custom_call.1} parent=35 // pred_fallthru
        _
      %s4333 = smul.u32 16, %s21
      %p4334 = scmp.lt.s32.totalorder %s20, 1
      %s4335 = scalar_select %p4334, %s20, 1
      %p4336 = scmp.lt.s32.totalorder %s4333, 15
      %s4337 = scalar_select %p4336, %s4333, 15
      %s4338 = smul.addr %s4335, 128
      %s4339 = sadd.s32 %s4337, %s4338
      %s4340 = smul.addr %s4339, 8
      %s4341 = scalar_lea.vmem %s4, %s4340
      // Predicated region
      $region45: #{tpu_custom_call.1} parent=35 // pred_check
        %p4342 = pneg %p159
      $region46: #{tpu_custom_call.1} parent=35 // pred_check_branch
        %4344 = sbr.rel (%p4342) target = $region48
      $region47: #{tpu_custom_call.1} parent=35 // pred_region
        %s4345 = smul.u32 16, %s21
      $region48: #{tpu_custom_call.1} parent=35 // pred_fallthru
        _
    $region36: #{tpu_custom_call.1} parent=5 // pred_fallthru
      _
    %p4346 = scmp.le.s32.totalorder 2, %s10
    // Predicated region
    $region49: #{tpu_custom_call.1} parent=5 // pred_check
      %p4347 = pneg %p4346
    $region50: #{tpu_custom_call.1} parent=5 // pred_check_branch
      %4349 = sbr.rel (%p4347) target = $region52
    $region51: #{tpu_custom_call.1} parent=5 // pred_region
      %s4350 = ssub.s32 %s10, 2
      // Predicated region
      $region53: #{tpu_custom_call.1} parent=51 // pred_check
        %p4351 = pneg %p165
      $region54: #{tpu_custom_call.1} parent=51 // pred_check_branch
        %4353 = sbr.rel (%p4351) target = $region56
      $region55: #{tpu_custom_call.1} parent=51 // pred_region
        %s4354 = smul.u32 16, %s24
        %p4355 = scmp.lt.s32.totalorder %s23, 1
        %s4356 = scalar_select %p4355, %s23, 1
        %p4357 = scmp.lt.s32.totalorder %s4354, 15
        %s4358 = scalar_select %p4357, %s4354, 15
        %s4359 = smul.addr %s4356, 128
        %s4360 = sadd.s32 %s4358, %s4359
        %s4361 = smul.addr %s4360, 8
        %s4362 = scalar_lea.vmem %s4, %s4361
      $region56: #{tpu_custom_call.1} parent=51 // pred_fallthru
        _
    $region52: #{tpu_custom_call.1} parent=5 // pred_fallthru
      _
  $region6: #{tpu_custom_call.1} parent=0 // loop_footer
    %s14 = sadd.s32 1, %s10
  $region7: #{tpu_custom_call.1} parent=0 // loop_footer_branch
    %9 = sbr.rel target = $region3
  $region8: #{tpu_custom_call.1} parent=0 // loop_exit
    _

</llo_original>
